<compile_context>
chip_gen: v7x
topology: tpu7x:2x2x1
jax: 0.10.0
libtpu: 0.0.40
codegen_flags: <defaults>
</compile_context>

<pallas_src>
import functools

import numpy as np
import jax
import jax.numpy as jnp
from jax.experimental import pallas as pl
from jax.experimental.pallas import tpu as pltpu


def _muse_kernel(q_ref, k_ref, v_ref,
                 wqh_ref, bqh_ref, wkh_ref, bkh_ref,
                 wv_ref, bv_ref, wo_ref,
                 w1p_ref,
                 wd3_ref, bd3_ref, w3p_ref,
                 wd5_ref, bd5_ref, w5p_ref,
                 bcomb_ref,
                 out_ref,
                 *, h, d_k, d_v, nq, nk, b_tile):
    f32 = jnp.float32
    bf16 = jnp.bfloat16
    C = h * d_v
    M = b_tile * nq                       # rows in this batch tile (nq == nk)

    Q = q_ref[...].astype(bf16)           # (M, d_model)
    K = k_ref[...].astype(bf16)
    V = v_ref[...].astype(bf16)

    # ---- fc_v for the whole batch tile (one matmul); used by attention & convs
    v_lin = jnp.dot(V, wv_ref[...], preferred_element_type=f32) + bv_ref[...]   # (M, C)
    v_bf = v_lin.astype(bf16)

    # ---- per-head fc_q / fc_k with pre-split weights (no activation lane slices)
    # 1/sqrt(d_k) is already folded into wqh/bqh by the wrapper.
    q_heads, k_heads = [], []
    for hi in range(h):                   # h is small & static -> unrolled
        qh = jnp.dot(Q, wqh_ref[hi], preferred_element_type=f32) + bqh_ref[hi]  # (M, d_k)
        kh = jnp.dot(K, wkh_ref[hi], preferred_element_type=f32) + bkh_ref[hi]  # (M, d_k)
        q_heads.append(qh.astype(bf16))
        k_heads.append(kh.astype(bf16))

    # Lane masks selecting each head's d_v-wide block of the (., C) value tile.
    col = jax.lax.broadcasted_iota(jnp.int32, (1, C), 1)
    head_mask = [(col >= hi * d_v) & (col < (hi + 1) * d_v) for hi in range(h)]

    # ---- multi-head attention per (batch, head); P@V against the full (nk, C)
    # value tile + lane mask builds the head-concatenated output directly.
    cat_rows = []
    for b in range(b_tile):
        r0 = b * nq
        vb = v_bf[r0:r0 + nk, :]                              # aligned sublane slice
        acc_b = jnp.zeros((nq, C), f32)
        for hi in range(h):
            qh = q_heads[hi][r0:r0 + nq, :]
            kh = k_heads[hi][r0:r0 + nk, :]
            s = jnp.einsum("qd,kd->qk", qh, kh, preferred_element_type=f32)  # (nq, nk)
            s = s - jnp.max(s, axis=-1, keepdims=True)
            p = jnp.exp(s)
            inv = pl.reciprocal(jnp.sum(p, axis=-1, keepdims=True), approx=True)
            # TODO(synk): attention dropout (p=0.1) omitted (inference/eval identity).
            pv = jnp.dot(p.astype(bf16), vb, preferred_element_type=f32)     # (nq, C)
            acc_b = acc_b + jnp.where(head_mask[hi], pv * inv, 0.0)
        cat_rows.append(acc_b)
    head_cat = cat_rows[0] if b_tile == 1 else jnp.concatenate(cat_rows, axis=0)  # (M, C)

    # fc_o as a single matmul for the whole tile; its bias is folded into bcomb.
    out = jnp.dot(head_cat.astype(bf16), wo_ref[...], preferred_element_type=f32)  # (M, d_model)

    # ---- depthwise + pointwise conv branch on (M, C), channel-last ----------
    # dy_paras and all pointwise biases are folded into w*p / bcomb at prep time.
    x = v_lin                                                      # (M, C) f32
    local = jax.lax.broadcasted_iota(jnp.int32, (M, C), 0) % nk    # seq pos within batch

    def shifted(s):
        # shifted(s)[t] = x[t + s] within the same batch element, else 0 (zero pad).
        rolled = pltpu.roll(x, shift=(-s) % M, axis=0)
        valid = (local < nk - s) if s > 0 else (local >= -s)
        return jnp.where(valid, rolled, 0.0)

    xm2 = shifted(-2)
    xm1 = shifted(-1)
    xp1 = shifted(1)
    xp2 = shifted(2)                     # shifts shared by the k=3 and k=5 convs

    dw3 = (xm1 * wd3_ref[0:1, :] + x * wd3_ref[1:2, :] + xp1 * wd3_ref[2:3, :]
           + bd3_ref[...])
    dw5 = (xm2 * wd5_ref[0:1, :] + xm1 * wd5_ref[1:2, :] + x * wd5_ref[2:3, :]
           + xp1 * wd5_ref[3:4, :] + xp2 * wd5_ref[4:5, :] + bd5_ref[...])

    out = out + jnp.dot(v_bf, w1p_ref[...], preferred_element_type=f32)
    out = out + jnp.dot(dw3.astype(bf16), w3p_ref[...], preferred_element_type=f32)
    out = out + jnp.dot(dw5.astype(bf16), w5p_ref[...], preferred_element_type=f32)
    out = out + bcomb_ref[...]

    out_ref[...] = out.astype(out_ref.dtype)


def _const_spec(shape):
    nd = len(shape)
    return pl.BlockSpec(shape, lambda i, _nd=nd: (0,) * _nd)


def prepare_params(params):
    """One-time parameter prep (cache this; it is NOT on the per-call hot path):
    softmax(dy_paras), 1/sqrt(d_k) folding, per-head weight split, dyp/bias
    folding into the conv pointwise weights, bf16 casts for MXU operands."""
    f32, bf16 = jnp.float32, jnp.bfloat16
    h, d_k, d_v = params["h"], params["d_k"], params["d_v"]
    d_model = params["wqT"].shape[0]

    dyp = jax.nn.softmax(params["dy_paras"].astype(f32))
    scale = 1.0 / np.sqrt(d_k)

    wq = (params["wqT"] * scale).astype(f32)              # (d_model, h*d_k)
    bq = (params["bq"] * scale).astype(f32)               # (1, h*d_k)
    wk = params["wkT"].astype(f32)
    bk = params["bk"].astype(f32)

    # Per-head split: (d_model, h*d_k) -> (h, d_model, d_k); biases -> (h, 1, d_k).
    wqh = wq.reshape(d_model, h, d_k).transpose(1, 0, 2).astype(bf16)
    bqh = bq.reshape(1, h, d_k).transpose(1, 0, 2)
    wkh = wk.reshape(d_model, h, d_k).transpose(1, 0, 2).astype(bf16)
    bkh = bk.reshape(1, h, d_k).transpose(1, 0, 2)

    # Fold dy_paras into the pointwise-conv weights and combine all trailing
    # biases (fc_o bias + dyp-weighted pointwise biases) into one vector.
    w1p = (dyp[0] * params["w1pT"]).astype(bf16)
    w3p = (dyp[1] * params["w3pT"]).astype(bf16)
    w5p = (dyp[2] * params["w5pT"]).astype(bf16)
    b_comb = (params["bo"] + dyp[0] * params["b1p"] + dyp[1] * params["b3p"]
              + dyp[2] * params["b5p"]).astype(f32)        # (1, d_model)

    weights = (
        wqh, bqh, wkh, bkh,
        params["wvT"].astype(bf16), params["bv"].astype(f32),
        params["woT"].astype(bf16),
        w1p,
        params["wd3T"].astype(f32), params["bd3"].astype(f32), w3p,   # depthwise taps stay f32 (VPU)
        params["wd5T"].astype(f32), params["bd5"].astype(f32), w5p,
        b_comb,
    )
    dims = dict(h=h, d_k=d_k, d_v=d_v, d_model=d_model)
    return weights, dims


def muse_attention(prepped, queries, keys, values, *, b_tile=None):
    weights, dims = prepped
    h, d_k, d_v, d_model = dims["h"], dims["d_k"], dims["d_v"], dims["d_model"]
    b_s, nq, _ = queries.shape
    nk = keys.shape[1]
    assert nq == nk, "forward adds (b,nq,d_model) + (b,nk,d_model); requires nq == nk"

    if b_tile is None:   # default: biggest divisor that still leaves >= 2 grid steps
        b_tile = next((c for c in (8, 4, 2, 1) if b_s % c == 0 and b_s // c >= 2), 1)
    assert b_s % b_tile == 0

    # Flatten batch*seq (free metadata reshape) so each grid step works on a
    # lane-contiguous (b_tile*nq, d_model) row slab.
    q2 = queries.reshape(b_s * nq, d_model)
    k2 = keys.reshape(b_s * nk, d_model)
    v2 = values.reshape(b_s * nk, d_model)

    m_tile = b_tile * nq
    kernel = functools.partial(_muse_kernel, h=h, d_k=d_k, d_v=d_v,
                               nq=nq, nk=nk, b_tile=b_tile)

    act_spec = pl.BlockSpec((m_tile, d_model), lambda i: (i, 0))
    in_specs = [act_spec, act_spec, act_spec] + [_const_spec(w.shape) for w in weights]

    out = pl.pallas_call(
        kernel,
        out_shape=jax.ShapeDtypeStruct((b_s * nq, d_model), jnp.float32),
        grid=(b_s // b_tile,),
        in_specs=in_specs,
        out_specs=pl.BlockSpec((m_tile, d_model), lambda i: (i, 0)),
        compiler_params=pltpu.CompilerParams(
            dimension_semantics=("parallel",),          # batch tiles shard across TCs
            vmem_limit_bytes=32 * 1024 * 1024),
    )(q2, k2, v2, *weights)
    return out.reshape(b_s, nq, d_model)


# ---------------------------- pure-JAX reference ----------------------------
def muse_ref(params, queries, keys, values):
    h, d_k, d_v = params["h"], params["d_k"], params["d_v"]
    b_s, nq, d_model = queries.shape
    nk = keys.shape[1]
    q = (queries @ params["wqT"] + params["bq"]).reshape(b_s, nq, h, d_k).transpose(0, 2, 1, 3)
    k = (keys @ params["wkT"] + params["bk"]).reshape(b_s, nk, h, d_k).transpose(0, 2, 3, 1)
    v = (values @ params["wvT"] + params["bv"]).reshape(b_s, nk, h, d_v).transpose(0, 2, 1, 3)
    att = jnp.einsum("bhqd,bhdk->bhqk", q, k) / np.sqrt(d_k)
    att = jax.nn.softmax(att, axis=-1)
    out = jnp.einsum("bhqk,bhkd->bhqd", att, v).transpose(0, 2, 1, 3).reshape(b_s, nq, h * d_v)
    out = out @ params["woT"] + params["bo"]

    v2 = v.transpose(0, 1, 3, 2).reshape(b_s, h * d_v, nk)           # NCL
    dyp = jax.nn.softmax(params["dy_paras"])

    def dpconv(x, wdT, bd, wpT, bp, ksz):
        if ksz > 1:
            pad = ksz // 2
            xp = jnp.pad(x, ((0, 0), (0, 0), (pad, pad)))
            dw = sum(xp[:, :, j:j + x.shape[2]] * wdT[j][None, :, None]
                     for j in range(ksz)) + bd.reshape(1, -1, 1)
        else:
            dw = x
        return jnp.einsum("bcl,cd->bdl", dw, wpT) + bp.reshape(1, -1, 1)

    y1 = dpconv(v2, None, None, params["w1pT"], params["b1p"], 1)
    y3 = dpconv(v2, params["wd3T"], params["bd3"], params["w3pT"], params["b3p"], 3)
    y5 = dpconv(v2, params["wd5T"], params["bd5"], params["w5pT"], params["b5p"], 5)
    out2 = dyp[0] * y1 + dyp[1] * y3 + dyp[2] * y5                   # (b, d_model, nk)
    return out + out2.transpose(0, 2, 1)


# ------------------------------- param init ---------------------------------
def init_params(key, d_model, d_k, d_v, h):
    C = h * d_v
    ks = jax.random.split(key, 12)

    # The module inits nn.Linear with normal(std=0.001); use a larger std here
    # so every branch (attention + all three conv paths) contributes at a level
    # the bf16-vs-f32 tolerance check can meaningfully exercise.
    def lin_w(kk, out_f, in_f):
        return 0.05 * jax.random.normal(kk, (out_f, in_f), jnp.float32)

    def conv_w(kk, shape, fan_in):              # Conv1d default-ish uniform init
        bound = 1.0 / np.sqrt(fan_in)
        return jax.random.uniform(kk, shape, jnp.float32, -bound, bound)

    wq = lin_w(ks[0], h * d_k, d_model)
    wk = lin_w(ks[1], h * d_k, d_model)
    wv = lin_w(ks[2], h * d_v, d_model)
    wo = lin_w(ks[3], d_model, h * d_v)

    w1p = conv_w(ks[4], (d_model, C), C)        # pointwise conv1 (k=1 depth is Identity)
    b1p = conv_w(ks[5], (1, d_model), C)
    wd3 = conv_w(ks[6], (C, 3), 3)              # depthwise k=3
    bd3 = conv_w(ks[7], (1, C), 3)
    w3p = conv_w(ks[8], (d_model, C), C)
    b3p = 0.01 * jax.random.normal(ks[9], (1, d_model), jnp.float32)
    wd5 = conv_w(ks[10], (C, 5), 5)             # depthwise k=5
    bd5 = 0.01 * jnp.ones((1, C), jnp.float32)
    w5p = conv_w(ks[11], (d_model, C), C)
    b5p = jnp.zeros((1, d_model), jnp.float32)

    return dict(
        h=h, d_k=d_k, d_v=d_v,
        wqT=wq.T, bq=jnp.zeros((1, h * d_k), jnp.float32),
        wkT=wk.T, bk=jnp.zeros((1, h * d_k), jnp.float32),
        wvT=wv.T, bv=jnp.zeros((1, h * d_v), jnp.float32),
        woT=wo.T, bo=jnp.zeros((1, d_model), jnp.float32),
        w1pT=w1p.T, b1p=b1p,
        wd3T=wd3.T, bd3=bd3, w3pT=w3p.T, b3p=b3p,
        wd5T=wd5.T, bd5=bd5, w5pT=w5p.T, b5p=b5p,
        dy_paras=jnp.ones((3,), jnp.float32),
    )


if __name__ == "__main__":
    d_model, d_k, d_v, h = 32, 8, 8, 4
    b_s, seq = 8, 8                              # nq == nk required by the forward

    key = jax.random.PRNGKey(0)
    kp, kq, kk, kv = jax.random.split(key, 4)
    params = init_params(kp, d_model, d_k, d_v, h)
    queries = jax.random.normal(kq, (b_s, seq, d_model), jnp.float32)
    keys = jax.random.normal(kk, (b_s, seq, d_model), jnp.float32)
    values = jax.random.normal(kv, (b_s, seq, d_model), jnp.float32)

    prepped = prepare_params(params)             # one-time prep; cache in real use
    out = jax.block_until_ready(
        muse_attention(prepped, queries, keys, values, b_tile=2))  # grid of 4 steps
    ref = jax.block_until_ready(muse_ref(params, queries, keys, values))

    # Kernel uses bf16 MXU operands with f32 accumulation; reference is pure f32.
    np.testing.assert_allclose(np.asarray(out), np.asarray(ref), rtol=2e-2, atol=1e-2)

    print("KERNEL_OK")
</pallas_src>

<mosaic_0001>
module attributes {stable_mosaic.version = 11 : i64} {
  func.func @_muse_kernel(%arg0: i32, %arg1: memref<16x32xf32, #tpu.memory_space<vmem>>, %arg2: memref<16x32xf32, #tpu.memory_space<vmem>>, %arg3: memref<16x32xf32, #tpu.memory_space<vmem>>, %arg4: memref<4x32x8xbf16, #tpu.memory_space<vmem>>, %arg5: memref<4x1x8xf32, #tpu.memory_space<vmem>>, %arg6: memref<4x32x8xbf16, #tpu.memory_space<vmem>>, %arg7: memref<4x1x8xf32, #tpu.memory_space<vmem>>, %arg8: memref<32x32xbf16, #tpu.memory_space<vmem>>, %arg9: memref<1x32xf32, #tpu.memory_space<vmem>>, %arg10: memref<32x32xbf16, #tpu.memory_space<vmem>>, %arg11: memref<32x32xbf16, #tpu.memory_space<vmem>>, %arg12: memref<3x32xf32, #tpu.memory_space<vmem>>, %arg13: memref<1x32xf32, #tpu.memory_space<vmem>>, %arg14: memref<32x32xbf16, #tpu.memory_space<vmem>>, %arg15: memref<5x32xf32, #tpu.memory_space<vmem>>, %arg16: memref<1x32xf32, #tpu.memory_space<vmem>>, %arg17: memref<32x32xbf16, #tpu.memory_space<vmem>>, %arg18: memref<1x32xf32, #tpu.memory_space<vmem>>, %arg19: memref<16x32xf32, #tpu.memory_space<vmem>>) attributes {dimension_semantics = [#tpu.dimension_semantics<parallel>], iteration_bounds = array<i64: 4>, scalar_prefetch = 0 : i64, scratch_operands = 0 : i64, tpu.core_type = #tpu.core_type<tc>, window_params = [{transform_indices = @transform_0, window_bounds = array<i64: 16, 32>}, {transform_indices = @transform_1, window_bounds = array<i64: 16, 32>}, {transform_indices = @transform_2, window_bounds = array<i64: 16, 32>}, {pipeline_mode = #tpu.pipeline_mode<synchronous>, transform_indices = @transform_3, window_bounds = array<i64: 4, 32, 8>}, {pipeline_mode = #tpu.pipeline_mode<synchronous>, transform_indices = @transform_4, window_bounds = array<i64: 4, 1, 8>}, {pipeline_mode = #tpu.pipeline_mode<synchronous>, transform_indices = @transform_5, window_bounds = array<i64: 4, 32, 8>}, {pipeline_mode = #tpu.pipeline_mode<synchronous>, transform_indices = @transform_6, window_bounds = array<i64: 4, 1, 8>}, {pipeline_mode = #tpu.pipeline_mode<synchronous>, transform_indices = @transform_7, window_bounds = array<i64: 32, 32>}, {pipeline_mode = #tpu.pipeline_mode<synchronous>, transform_indices = @transform_8, window_bounds = array<i64: 1, 32>}, {pipeline_mode = #tpu.pipeline_mode<synchronous>, transform_indices = @transform_9, window_bounds = array<i64: 32, 32>}, {pipeline_mode = #tpu.pipeline_mode<synchronous>, transform_indices = @transform_10, window_bounds = array<i64: 32, 32>}, {pipeline_mode = #tpu.pipeline_mode<synchronous>, transform_indices = @transform_11, window_bounds = array<i64: 3, 32>}, {pipeline_mode = #tpu.pipeline_mode<synchronous>, transform_indices = @transform_12, window_bounds = array<i64: 1, 32>}, {pipeline_mode = #tpu.pipeline_mode<synchronous>, transform_indices = @transform_13, window_bounds = array<i64: 32, 32>}, {pipeline_mode = #tpu.pipeline_mode<synchronous>, transform_indices = @transform_14, window_bounds = array<i64: 5, 32>}, {pipeline_mode = #tpu.pipeline_mode<synchronous>, transform_indices = @transform_15, window_bounds = array<i64: 1, 32>}, {pipeline_mode = #tpu.pipeline_mode<synchronous>, transform_indices = @transform_16, window_bounds = array<i64: 32, 32>}, {pipeline_mode = #tpu.pipeline_mode<synchronous>, transform_indices = @transform_17, window_bounds = array<i64: 1, 32>}, {transform_indices = @transform_18, window_bounds = array<i64: 16, 32>}]} {
    %c0 = arith.constant 0 : index
    %c0_0 = arith.constant 0 : index
    %0 = vector.load %arg1[%c0, %c0_0] : memref<16x32xf32, #tpu.memory_space<vmem>>, vector<16x32xf32>
    %1 = arith.truncf %0 : vector<16x32xf32> to vector<16x32xbf16>
    %c0_1 = arith.constant 0 : index
    %c0_2 = arith.constant 0 : index
    %2 = vector.load %arg2[%c0_1, %c0_2] : memref<16x32xf32, #tpu.memory_space<vmem>>, vector<16x32xf32>
    %3 = arith.truncf %2 : vector<16x32xf32> to vector<16x32xbf16>
    %c0_3 = arith.constant 0 : index
    %c0_4 = arith.constant 0 : index
    %4 = vector.load %arg3[%c0_3, %c0_4] : memref<16x32xf32, #tpu.memory_space<vmem>>, vector<16x32xf32>
    %5 = arith.truncf %4 : vector<16x32xf32> to vector<16x32xbf16>
    %c0_5 = arith.constant 0 : index
    %c0_6 = arith.constant 0 : index
    %6 = vector.load %arg8[%c0_5, %c0_6] : memref<32x32xbf16, #tpu.memory_space<vmem>>, vector<32x32xbf16>
    %cst = arith.constant dense<0.000000e+00> : vector<16x32xf32>
    %7 = tpu.matmul %5, %6, %cst {dimension_numbers = #tpu.dot_dimension_numbers<[1], [0], [0], [1], [0, 0, 1, 1], [], []>} : vector<16x32xbf16>, vector<32x32xbf16>, vector<16x32xf32> -> vector<16x32xf32>
    %c0_7 = arith.constant 0 : index
    %c0_8 = arith.constant 0 : index
    %8 = vector.load %arg9[%c0_7, %c0_8] : memref<1x32xf32, #tpu.memory_space<vmem>>, vector<1x32xf32>
    %9 = vector.broadcast %8 : vector<1x32xf32> to vector<16x32xf32>
    %10 = arith.addf %7, %9 : vector<16x32xf32>
    %11 = arith.truncf %10 : vector<16x32xf32> to vector<16x32xbf16>
    %c0_9 = arith.constant 0 : index
    %c0_10 = arith.constant 0 : index
    %c0_11 = arith.constant 0 : index
    %12 = vector.load %arg4[%c0_9, %c0_10, %c0_11] : memref<4x32x8xbf16, #tpu.memory_space<vmem>>, vector<1x32x8xbf16>
    %13 = vector.shape_cast %12 : vector<1x32x8xbf16> to vector<32x8xbf16>
    %cst_12 = arith.constant dense<0.000000e+00> : vector<16x8xf32>
    %14 = tpu.matmul %1, %13, %cst_12 {dimension_numbers = #tpu.dot_dimension_numbers<[1], [0], [0], [1], [0, 0, 1, 1], [], []>} : vector<16x32xbf16>, vector<32x8xbf16>, vector<16x8xf32> -> vector<16x8xf32>
    %c0_13 = arith.constant 0 : index
    %c0_14 = arith.constant 0 : index
    %c0_15 = arith.constant 0 : index
    %15 = vector.load %arg5[%c0_13, %c0_14, %c0_15] : memref<4x1x8xf32, #tpu.memory_space<vmem>>, vector<1x1x8xf32>
    %16 = vector.shape_cast %15 : vector<1x1x8xf32> to vector<1x8xf32>
    %17 = vector.broadcast %16 : vector<1x8xf32> to vector<16x8xf32>
    %18 = arith.addf %14, %17 : vector<16x8xf32>
    %c0_16 = arith.constant 0 : index
    %c0_17 = arith.constant 0 : index
    %c0_18 = arith.constant 0 : index
    %19 = vector.load %arg6[%c0_16, %c0_17, %c0_18] : memref<4x32x8xbf16, #tpu.memory_space<vmem>>, vector<1x32x8xbf16>
    %20 = vector.shape_cast %19 : vector<1x32x8xbf16> to vector<32x8xbf16>
    %cst_19 = arith.constant dense<0.000000e+00> : vector<16x8xf32>
    %21 = tpu.matmul %3, %20, %cst_19 {dimension_numbers = #tpu.dot_dimension_numbers<[1], [0], [0], [1], [0, 0, 1, 1], [], []>} : vector<16x32xbf16>, vector<32x8xbf16>, vector<16x8xf32> -> vector<16x8xf32>
    %c0_20 = arith.constant 0 : index
    %c0_21 = arith.constant 0 : index
    %c0_22 = arith.constant 0 : index
    %22 = vector.load %arg7[%c0_20, %c0_21, %c0_22] : memref<4x1x8xf32, #tpu.memory_space<vmem>>, vector<1x1x8xf32>
    %23 = vector.shape_cast %22 : vector<1x1x8xf32> to vector<1x8xf32>
    %24 = vector.broadcast %23 : vector<1x8xf32> to vector<16x8xf32>
    %25 = arith.addf %21, %24 : vector<16x8xf32>
    %26 = arith.truncf %18 : vector<16x8xf32> to vector<16x8xbf16>
    %27 = arith.truncf %25 : vector<16x8xf32> to vector<16x8xbf16>
    %c1 = arith.constant 1 : index
    %c0_23 = arith.constant 0 : index
    %c0_24 = arith.constant 0 : index
    %28 = vector.load %arg4[%c1, %c0_23, %c0_24] : memref<4x32x8xbf16, #tpu.memory_space<vmem>>, vector<1x32x8xbf16>
    %29 = vector.shape_cast %28 : vector<1x32x8xbf16> to vector<32x8xbf16>
    %cst_25 = arith.constant dense<0.000000e+00> : vector<16x8xf32>
    %30 = tpu.matmul %1, %29, %cst_25 {dimension_numbers = #tpu.dot_dimension_numbers<[1], [0], [0], [1], [0, 0, 1, 1], [], []>} : vector<16x32xbf16>, vector<32x8xbf16>, vector<16x8xf32> -> vector<16x8xf32>
    %c1_26 = arith.constant 1 : index
    %c0_27 = arith.constant 0 : index
    %c0_28 = arith.constant 0 : index
    %31 = vector.load %arg5[%c1_26, %c0_27, %c0_28] : memref<4x1x8xf32, #tpu.memory_space<vmem>>, vector<1x1x8xf32>
    %32 = vector.shape_cast %31 : vector<1x1x8xf32> to vector<1x8xf32>
    %33 = vector.broadcast %32 : vector<1x8xf32> to vector<16x8xf32>
    %34 = arith.addf %30, %33 : vector<16x8xf32>
    %c1_29 = arith.constant 1 : index
    %c0_30 = arith.constant 0 : index
    %c0_31 = arith.constant 0 : index
    %35 = vector.load %arg6[%c1_29, %c0_30, %c0_31] : memref<4x32x8xbf16, #tpu.memory_space<vmem>>, vector<1x32x8xbf16>
    %36 = vector.shape_cast %35 : vector<1x32x8xbf16> to vector<32x8xbf16>
    %cst_32 = arith.constant dense<0.000000e+00> : vector<16x8xf32>
    %37 = tpu.matmul %3, %36, %cst_32 {dimension_numbers = #tpu.dot_dimension_numbers<[1], [0], [0], [1], [0, 0, 1, 1], [], []>} : vector<16x32xbf16>, vector<32x8xbf16>, vector<16x8xf32> -> vector<16x8xf32>
    %c1_33 = arith.constant 1 : index
    %c0_34 = arith.constant 0 : index
    %c0_35 = arith.constant 0 : index
    %38 = vector.load %arg7[%c1_33, %c0_34, %c0_35] : memref<4x1x8xf32, #tpu.memory_space<vmem>>, vector<1x1x8xf32>
    %39 = vector.shape_cast %38 : vector<1x1x8xf32> to vector<1x8xf32>
    %40 = vector.broadcast %39 : vector<1x8xf32> to vector<16x8xf32>
    %41 = arith.addf %37, %40 : vector<16x8xf32>
    %42 = arith.truncf %34 : vector<16x8xf32> to vector<16x8xbf16>
    %43 = arith.truncf %41 : vector<16x8xf32> to vector<16x8xbf16>
    %c2 = arith.constant 2 : index
    %c0_36 = arith.constant 0 : index
    %c0_37 = arith.constant 0 : index
    %44 = vector.load %arg4[%c2, %c0_36, %c0_37] : memref<4x32x8xbf16, #tpu.memory_space<vmem>>, vector<1x32x8xbf16>
    %45 = vector.shape_cast %44 : vector<1x32x8xbf16> to vector<32x8xbf16>
    %cst_38 = arith.constant dense<0.000000e+00> : vector<16x8xf32>
    %46 = tpu.matmul %1, %45, %cst_38 {dimension_numbers = #tpu.dot_dimension_numbers<[1], [0], [0], [1], [0, 0, 1, 1], [], []>} : vector<16x32xbf16>, vector<32x8xbf16>, vector<16x8xf32> -> vector<16x8xf32>
    %c2_39 = arith.constant 2 : index
    %c0_40 = arith.constant 0 : index
    %c0_41 = arith.constant 0 : index
    %47 = vector.load %arg5[%c2_39, %c0_40, %c0_41] : memref<4x1x8xf32, #tpu.memory_space<vmem>>, vector<1x1x8xf32>
    %48 = vector.shape_cast %47 : vector<1x1x8xf32> to vector<1x8xf32>
    %49 = vector.broadcast %48 : vector<1x8xf32> to vector<16x8xf32>
    %50 = arith.addf %46, %49 : vector<16x8xf32>
    %c2_42 = arith.constant 2 : index
    %c0_43 = arith.constant 0 : index
    %c0_44 = arith.constant 0 : index
    %51 = vector.load %arg6[%c2_42, %c0_43, %c0_44] : memref<4x32x8xbf16, #tpu.memory_space<vmem>>, vector<1x32x8xbf16>
    %52 = vector.shape_cast %51 : vector<1x32x8xbf16> to vector<32x8xbf16>
    %cst_45 = arith.constant dense<0.000000e+00> : vector<16x8xf32>
    %53 = tpu.matmul %3, %52, %cst_45 {dimension_numbers = #tpu.dot_dimension_numbers<[1], [0], [0], [1], [0, 0, 1, 1], [], []>} : vector<16x32xbf16>, vector<32x8xbf16>, vector<16x8xf32> -> vector<16x8xf32>
    %c2_46 = arith.constant 2 : index
    %c0_47 = arith.constant 0 : index
    %c0_48 = arith.constant 0 : index
    %54 = vector.load %arg7[%c2_46, %c0_47, %c0_48] : memref<4x1x8xf32, #tpu.memory_space<vmem>>, vector<1x1x8xf32>
    %55 = vector.shape_cast %54 : vector<1x1x8xf32> to vector<1x8xf32>
    %56 = vector.broadcast %55 : vector<1x8xf32> to vector<16x8xf32>
    %57 = arith.addf %53, %56 : vector<16x8xf32>
    %58 = arith.truncf %50 : vector<16x8xf32> to vector<16x8xbf16>
    %59 = arith.truncf %57 : vector<16x8xf32> to vector<16x8xbf16>
    %c3 = arith.constant 3 : index
    %c0_49 = arith.constant 0 : index
    %c0_50 = arith.constant 0 : index
    %60 = vector.load %arg4[%c3, %c0_49, %c0_50] : memref<4x32x8xbf16, #tpu.memory_space<vmem>>, vector<1x32x8xbf16>
    %61 = vector.shape_cast %60 : vector<1x32x8xbf16> to vector<32x8xbf16>
    %cst_51 = arith.constant dense<0.000000e+00> : vector<16x8xf32>
    %62 = tpu.matmul %1, %61, %cst_51 {dimension_numbers = #tpu.dot_dimension_numbers<[1], [0], [0], [1], [0, 0, 1, 1], [], []>} : vector<16x32xbf16>, vector<32x8xbf16>, vector<16x8xf32> -> vector<16x8xf32>
    %c3_52 = arith.constant 3 : index
    %c0_53 = arith.constant 0 : index
    %c0_54 = arith.constant 0 : index
    %63 = vector.load %arg5[%c3_52, %c0_53, %c0_54] : memref<4x1x8xf32, #tpu.memory_space<vmem>>, vector<1x1x8xf32>
    %64 = vector.shape_cast %63 : vector<1x1x8xf32> to vector<1x8xf32>
    %65 = vector.broadcast %64 : vector<1x8xf32> to vector<16x8xf32>
    %66 = arith.addf %62, %65 : vector<16x8xf32>
    %c3_55 = arith.constant 3 : index
    %c0_56 = arith.constant 0 : index
    %c0_57 = arith.constant 0 : index
    %67 = vector.load %arg6[%c3_55, %c0_56, %c0_57] : memref<4x32x8xbf16, #tpu.memory_space<vmem>>, vector<1x32x8xbf16>
    %68 = vector.shape_cast %67 : vector<1x32x8xbf16> to vector<32x8xbf16>
    %cst_58 = arith.constant dense<0.000000e+00> : vector<16x8xf32>
    %69 = tpu.matmul %3, %68, %cst_58 {dimension_numbers = #tpu.dot_dimension_numbers<[1], [0], [0], [1], [0, 0, 1, 1], [], []>} : vector<16x32xbf16>, vector<32x8xbf16>, vector<16x8xf32> -> vector<16x8xf32>
    %c3_59 = arith.constant 3 : index
    %c0_60 = arith.constant 0 : index
    %c0_61 = arith.constant 0 : index
    %70 = vector.load %arg7[%c3_59, %c0_60, %c0_61] : memref<4x1x8xf32, #tpu.memory_space<vmem>>, vector<1x1x8xf32>
    %71 = vector.shape_cast %70 : vector<1x1x8xf32> to vector<1x8xf32>
    %72 = vector.broadcast %71 : vector<1x8xf32> to vector<16x8xf32>
    %73 = arith.addf %69, %72 : vector<16x8xf32>
    %74 = arith.truncf %66 : vector<16x8xf32> to vector<16x8xbf16>
    %75 = arith.truncf %73 : vector<16x8xf32> to vector<16x8xbf16>
    %76 = tpu.iota {dimensions = array<i32: 1>} : vector<1x32xi32>
    %c0_i32 = arith.constant 0 : i32
    %77 = vector.broadcast %c0_i32 : i32 to vector<1x32xi32>
    %78 = arith.cmpi sge, %76, %77 : vector<1x32xi32>
    %c8_i32 = arith.constant 8 : i32
    %79 = vector.broadcast %c8_i32 : i32 to vector<1x32xi32>
    %80 = arith.cmpi slt, %76, %79 : vector<1x32xi32>
    %81 = arith.andi %78, %80 : vector<1x32xi1>
    %c8_i32_62 = arith.constant 8 : i32
    %82 = vector.broadcast %c8_i32_62 : i32 to vector<1x32xi32>
    %83 = arith.cmpi sge, %76, %82 : vector<1x32xi32>
    %c16_i32 = arith.constant 16 : i32
    %84 = vector.broadcast %c16_i32 : i32 to vector<1x32xi32>
    %85 = arith.cmpi slt, %76, %84 : vector<1x32xi32>
    %86 = arith.andi %83, %85 : vector<1x32xi1>
    %c16_i32_63 = arith.constant 16 : i32
    %87 = vector.broadcast %c16_i32_63 : i32 to vector<1x32xi32>
    %88 = arith.cmpi sge, %76, %87 : vector<1x32xi32>
    %c24_i32 = arith.constant 24 : i32
    %89 = vector.broadcast %c24_i32 : i32 to vector<1x32xi32>
    %90 = arith.cmpi slt, %76, %89 : vector<1x32xi32>
    %91 = arith.andi %88, %90 : vector<1x32xi1>
    %c24_i32_64 = arith.constant 24 : i32
    %92 = vector.broadcast %c24_i32_64 : i32 to vector<1x32xi32>
    %93 = arith.cmpi sge, %76, %92 : vector<1x32xi32>
    %c32_i32 = arith.constant 32 : i32
    %94 = vector.broadcast %c32_i32 : i32 to vector<1x32xi32>
    %95 = arith.cmpi slt, %76, %94 : vector<1x32xi32>
    %96 = arith.andi %93, %95 : vector<1x32xi1>
    %97 = vector.extract_strided_slice %11 {offsets = [0, 0], sizes = [8, 32], strides = [1, 1]} : vector<16x32xbf16> to vector<8x32xbf16>
    %cst_65 = arith.constant 0.000000e+00 : f32
    %98 = vector.broadcast %cst_65 : f32 to vector<8x32xf32>
    %99 = vector.extract_strided_slice %26 {offsets = [0, 0], sizes = [8, 8], strides = [1, 1]} : vector<16x8xbf16> to vector<8x8xbf16>
    %100 = vector.extract_strided_slice %27 {offsets = [0, 0], sizes = [8, 8], strides = [1, 1]} : vector<16x8xbf16> to vector<8x8xbf16>
    "tpu.trace_start"() <{level = 10 : i32, message = "qd,kd->qk"}> : () -> ()
    %cst_66 = arith.constant dense<0.000000e+00> : vector<8x8xf32>
    %101 = tpu.matmul %99, %100, %cst_66 {dimension_numbers = #tpu.dot_dimension_numbers<[1], [1], [0], [0], [0, 0, 1, 0], [], []>} : vector<8x8xbf16>, vector<8x8xbf16>, vector<8x8xf32> -> vector<8x8xf32>
    "tpu.trace_stop"() : () -> ()
    %cst_67 = arith.constant dense<0xFF800000> : vector<8xf32>
    %102 = vector.multi_reduction <maximumf>, %101, %cst_67 [1] : vector<8x8xf32> to vector<8xf32>
    %103 = vector.shape_cast %102 : vector<8xf32> to vector<8x1xf32>
    %104 = vector.broadcast %103 : vector<8x1xf32> to vector<8x8xf32>
    %105 = arith.subf %101, %104 : vector<8x8xf32>
    %106 = math.exp %105 : vector<8x8xf32>
    %cst_68 = arith.constant dense<0.000000e+00> : vector<8xf32>
    %107 = vector.multi_reduction <add>, %106, %cst_68 [1] : vector<8x8xf32> to vector<8xf32>
    %108 = vector.shape_cast %107 : vector<8xf32> to vector<8x1xf32>
    %109 = tpu.reciprocal %108 {approx = true} : vector<8x1xf32> -> vector<8x1xf32>
    %110 = arith.truncf %106 : vector<8x8xf32> to vector<8x8xbf16>
    %cst_69 = arith.constant dense<0.000000e+00> : vector<8x32xf32>
    %111 = tpu.matmul %110, %97, %cst_69 {dimension_numbers = #tpu.dot_dimension_numbers<[1], [0], [0], [1], [0, 0, 1, 1], [], []>} : vector<8x8xbf16>, vector<8x32xbf16>, vector<8x32xf32> -> vector<8x32xf32>
    %112 = vector.broadcast %109 : vector<8x1xf32> to vector<8x32xf32>
    %113 = arith.mulf %111, %112 : vector<8x32xf32>
    %cst_70 = arith.constant 0.000000e+00 : f32
    %114 = vector.shape_cast %81 : vector<1x32xi1> to vector<1x32xi1>
    %115 = vector.broadcast %114 : vector<1x32xi1> to vector<8x32xi1>
    %116 = vector.broadcast %cst_70 : f32 to vector<8x32xf32>
    %117 = arith.select %115, %113, %116 : vector<8x32xi1>, vector<8x32xf32>
    %118 = arith.addf %98, %117 : vector<8x32xf32>
    %119 = vector.extract_strided_slice %42 {offsets = [0, 0], sizes = [8, 8], strides = [1, 1]} : vector<16x8xbf16> to vector<8x8xbf16>
    %120 = vector.extract_strided_slice %43 {offsets = [0, 0], sizes = [8, 8], strides = [1, 1]} : vector<16x8xbf16> to vector<8x8xbf16>
    "tpu.trace_start"() <{level = 10 : i32, message = "qd,kd->qk"}> : () -> ()
    %cst_71 = arith.constant dense<0.000000e+00> : vector<8x8xf32>
    %121 = tpu.matmul %119, %120, %cst_71 {dimension_numbers = #tpu.dot_dimension_numbers<[1], [1], [0], [0], [0, 0, 1, 0], [], []>} : vector<8x8xbf16>, vector<8x8xbf16>, vector<8x8xf32> -> vector<8x8xf32>
    "tpu.trace_stop"() : () -> ()
    %cst_72 = arith.constant dense<0xFF800000> : vector<8xf32>
    %122 = vector.multi_reduction <maximumf>, %121, %cst_72 [1] : vector<8x8xf32> to vector<8xf32>
    %123 = vector.shape_cast %122 : vector<8xf32> to vector<8x1xf32>
    %124 = vector.broadcast %123 : vector<8x1xf32> to vector<8x8xf32>
    %125 = arith.subf %121, %124 : vector<8x8xf32>
    %126 = math.exp %125 : vector<8x8xf32>
    %cst_73 = arith.constant dense<0.000000e+00> : vector<8xf32>
    %127 = vector.multi_reduction <add>, %126, %cst_73 [1] : vector<8x8xf32> to vector<8xf32>
    %128 = vector.shape_cast %127 : vector<8xf32> to vector<8x1xf32>
    %129 = tpu.reciprocal %128 {approx = true} : vector<8x1xf32> -> vector<8x1xf32>
    %130 = arith.truncf %126 : vector<8x8xf32> to vector<8x8xbf16>
    %cst_74 = arith.constant dense<0.000000e+00> : vector<8x32xf32>
    %131 = tpu.matmul %130, %97, %cst_74 {dimension_numbers = #tpu.dot_dimension_numbers<[1], [0], [0], [1], [0, 0, 1, 1], [], []>} : vector<8x8xbf16>, vector<8x32xbf16>, vector<8x32xf32> -> vector<8x32xf32>
    %132 = vector.broadcast %129 : vector<8x1xf32> to vector<8x32xf32>
    %133 = arith.mulf %131, %132 : vector<8x32xf32>
    %cst_75 = arith.constant 0.000000e+00 : f32
    %134 = vector.shape_cast %86 : vector<1x32xi1> to vector<1x32xi1>
    %135 = vector.broadcast %134 : vector<1x32xi1> to vector<8x32xi1>
    %136 = vector.broadcast %cst_75 : f32 to vector<8x32xf32>
    %137 = arith.select %135, %133, %136 : vector<8x32xi1>, vector<8x32xf32>
    %138 = arith.addf %118, %137 : vector<8x32xf32>
    %139 = vector.extract_strided_slice %58 {offsets = [0, 0], sizes = [8, 8], strides = [1, 1]} : vector<16x8xbf16> to vector<8x8xbf16>
    %140 = vector.extract_strided_slice %59 {offsets = [0, 0], sizes = [8, 8], strides = [1, 1]} : vector<16x8xbf16> to vector<8x8xbf16>
    "tpu.trace_start"() <{level = 10 : i32, message = "qd,kd->qk"}> : () -> ()
    %cst_76 = arith.constant dense<0.000000e+00> : vector<8x8xf32>
    %141 = tpu.matmul %139, %140, %cst_76 {dimension_numbers = #tpu.dot_dimension_numbers<[1], [1], [0], [0], [0, 0, 1, 0], [], []>} : vector<8x8xbf16>, vector<8x8xbf16>, vector<8x8xf32> -> vector<8x8xf32>
    "tpu.trace_stop"() : () -> ()
    %cst_77 = arith.constant dense<0xFF800000> : vector<8xf32>
    %142 = vector.multi_reduction <maximumf>, %141, %cst_77 [1] : vector<8x8xf32> to vector<8xf32>
    %143 = vector.shape_cast %142 : vector<8xf32> to vector<8x1xf32>
    %144 = vector.broadcast %143 : vector<8x1xf32> to vector<8x8xf32>
    %145 = arith.subf %141, %144 : vector<8x8xf32>
    %146 = math.exp %145 : vector<8x8xf32>
    %cst_78 = arith.constant dense<0.000000e+00> : vector<8xf32>
    %147 = vector.multi_reduction <add>, %146, %cst_78 [1] : vector<8x8xf32> to vector<8xf32>
    %148 = vector.shape_cast %147 : vector<8xf32> to vector<8x1xf32>
    %149 = tpu.reciprocal %148 {approx = true} : vector<8x1xf32> -> vector<8x1xf32>
    %150 = arith.truncf %146 : vector<8x8xf32> to vector<8x8xbf16>
    %cst_79 = arith.constant dense<0.000000e+00> : vector<8x32xf32>
    %151 = tpu.matmul %150, %97, %cst_79 {dimension_numbers = #tpu.dot_dimension_numbers<[1], [0], [0], [1], [0, 0, 1, 1], [], []>} : vector<8x8xbf16>, vector<8x32xbf16>, vector<8x32xf32> -> vector<8x32xf32>
    %152 = vector.broadcast %149 : vector<8x1xf32> to vector<8x32xf32>
    %153 = arith.mulf %151, %152 : vector<8x32xf32>
    %cst_80 = arith.constant 0.000000e+00 : f32
    %154 = vector.shape_cast %91 : vector<1x32xi1> to vector<1x32xi1>
    %155 = vector.broadcast %154 : vector<1x32xi1> to vector<8x32xi1>
    %156 = vector.broadcast %cst_80 : f32 to vector<8x32xf32>
    %157 = arith.select %155, %153, %156 : vector<8x32xi1>, vector<8x32xf32>
    %158 = arith.addf %138, %157 : vector<8x32xf32>
    %159 = vector.extract_strided_slice %74 {offsets = [0, 0], sizes = [8, 8], strides = [1, 1]} : vector<16x8xbf16> to vector<8x8xbf16>
    %160 = vector.extract_strided_slice %75 {offsets = [0, 0], sizes = [8, 8], strides = [1, 1]} : vector<16x8xbf16> to vector<8x8xbf16>
    "tpu.trace_start"() <{level = 10 : i32, message = "qd,kd->qk"}> : () -> ()
    %cst_81 = arith.constant dense<0.000000e+00> : vector<8x8xf32>
    %161 = tpu.matmul %159, %160, %cst_81 {dimension_numbers = #tpu.dot_dimension_numbers<[1], [1], [0], [0], [0, 0, 1, 0], [], []>} : vector<8x8xbf16>, vector<8x8xbf16>, vector<8x8xf32> -> vector<8x8xf32>
    "tpu.trace_stop"() : () -> ()
    %cst_82 = arith.constant dense<0xFF800000> : vector<8xf32>
    %162 = vector.multi_reduction <maximumf>, %161, %cst_82 [1] : vector<8x8xf32> to vector<8xf32>
    %163 = vector.shape_cast %162 : vector<8xf32> to vector<8x1xf32>
    %164 = vector.broadcast %163 : vector<8x1xf32> to vector<8x8xf32>
    %165 = arith.subf %161, %164 : vector<8x8xf32>
    %166 = math.exp %165 : vector<8x8xf32>
    %cst_83 = arith.constant dense<0.000000e+00> : vector<8xf32>
    %167 = vector.multi_reduction <add>, %166, %cst_83 [1] : vector<8x8xf32> to vector<8xf32>
    %168 = vector.shape_cast %167 : vector<8xf32> to vector<8x1xf32>
    %169 = tpu.reciprocal %168 {approx = true} : vector<8x1xf32> -> vector<8x1xf32>
    %170 = arith.truncf %166 : vector<8x8xf32> to vector<8x8xbf16>
    %cst_84 = arith.constant dense<0.000000e+00> : vector<8x32xf32>
    %171 = tpu.matmul %170, %97, %cst_84 {dimension_numbers = #tpu.dot_dimension_numbers<[1], [0], [0], [1], [0, 0, 1, 1], [], []>} : vector<8x8xbf16>, vector<8x32xbf16>, vector<8x32xf32> -> vector<8x32xf32>
    %172 = vector.broadcast %169 : vector<8x1xf32> to vector<8x32xf32>
    %173 = arith.mulf %171, %172 : vector<8x32xf32>
    %cst_85 = arith.constant 0.000000e+00 : f32
    %174 = vector.shape_cast %96 : vector<1x32xi1> to vector<1x32xi1>
    %175 = vector.broadcast %174 : vector<1x32xi1> to vector<8x32xi1>
    %176 = vector.broadcast %cst_85 : f32 to vector<8x32xf32>
    %177 = arith.select %175, %173, %176 : vector<8x32xi1>, vector<8x32xf32>
    %178 = arith.addf %158, %177 : vector<8x32xf32>
    %179 = vector.extract_strided_slice %11 {offsets = [8, 0], sizes = [8, 32], strides = [1, 1]} : vector<16x32xbf16> to vector<8x32xbf16>
    %cst_86 = arith.constant 0.000000e+00 : f32
    %180 = vector.broadcast %cst_86 : f32 to vector<8x32xf32>
    %181 = vector.extract_strided_slice %26 {offsets = [8, 0], sizes = [8, 8], strides = [1, 1]} : vector<16x8xbf16> to vector<8x8xbf16>
    %182 = vector.extract_strided_slice %27 {offsets = [8, 0], sizes = [8, 8], strides = [1, 1]} : vector<16x8xbf16> to vector<8x8xbf16>
    "tpu.trace_start"() <{level = 10 : i32, message = "qd,kd->qk"}> : () -> ()
    %cst_87 = arith.constant dense<0.000000e+00> : vector<8x8xf32>
    %183 = tpu.matmul %181, %182, %cst_87 {dimension_numbers = #tpu.dot_dimension_numbers<[1], [1], [0], [0], [0, 0, 1, 0], [], []>} : vector<8x8xbf16>, vector<8x8xbf16>, vector<8x8xf32> -> vector<8x8xf32>
    "tpu.trace_stop"() : () -> ()
    %cst_88 = arith.constant dense<0xFF800000> : vector<8xf32>
    %184 = vector.multi_reduction <maximumf>, %183, %cst_88 [1] : vector<8x8xf32> to vector<8xf32>
    %185 = vector.shape_cast %184 : vector<8xf32> to vector<8x1xf32>
    %186 = vector.broadcast %185 : vector<8x1xf32> to vector<8x8xf32>
    %187 = arith.subf %183, %186 : vector<8x8xf32>
    %188 = math.exp %187 : vector<8x8xf32>
    %cst_89 = arith.constant dense<0.000000e+00> : vector<8xf32>
    %189 = vector.multi_reduction <add>, %188, %cst_89 [1] : vector<8x8xf32> to vector<8xf32>
    %190 = vector.shape_cast %189 : vector<8xf32> to vector<8x1xf32>
    %191 = tpu.reciprocal %190 {approx = true} : vector<8x1xf32> -> vector<8x1xf32>
    %192 = arith.truncf %188 : vector<8x8xf32> to vector<8x8xbf16>
    %cst_90 = arith.constant dense<0.000000e+00> : vector<8x32xf32>
    %193 = tpu.matmul %192, %179, %cst_90 {dimension_numbers = #tpu.dot_dimension_numbers<[1], [0], [0], [1], [0, 0, 1, 1], [], []>} : vector<8x8xbf16>, vector<8x32xbf16>, vector<8x32xf32> -> vector<8x32xf32>
    %194 = vector.broadcast %191 : vector<8x1xf32> to vector<8x32xf32>
    %195 = arith.mulf %193, %194 : vector<8x32xf32>
    %cst_91 = arith.constant 0.000000e+00 : f32
    %196 = vector.shape_cast %81 : vector<1x32xi1> to vector<1x32xi1>
    %197 = vector.broadcast %196 : vector<1x32xi1> to vector<8x32xi1>
    %198 = vector.broadcast %cst_91 : f32 to vector<8x32xf32>
    %199 = arith.select %197, %195, %198 : vector<8x32xi1>, vector<8x32xf32>
    %200 = arith.addf %180, %199 : vector<8x32xf32>
    %201 = vector.extract_strided_slice %42 {offsets = [8, 0], sizes = [8, 8], strides = [1, 1]} : vector<16x8xbf16> to vector<8x8xbf16>
    %202 = vector.extract_strided_slice %43 {offsets = [8, 0], sizes = [8, 8], strides = [1, 1]} : vector<16x8xbf16> to vector<8x8xbf16>
    "tpu.trace_start"() <{level = 10 : i32, message = "qd,kd->qk"}> : () -> ()
    %cst_92 = arith.constant dense<0.000000e+00> : vector<8x8xf32>
    %203 = tpu.matmul %201, %202, %cst_92 {dimension_numbers = #tpu.dot_dimension_numbers<[1], [1], [0], [0], [0, 0, 1, 0], [], []>} : vector<8x8xbf16>, vector<8x8xbf16>, vector<8x8xf32> -> vector<8x8xf32>
    "tpu.trace_stop"() : () -> ()
    %cst_93 = arith.constant dense<0xFF800000> : vector<8xf32>
    %204 = vector.multi_reduction <maximumf>, %203, %cst_93 [1] : vector<8x8xf32> to vector<8xf32>
    %205 = vector.shape_cast %204 : vector<8xf32> to vector<8x1xf32>
    %206 = vector.broadcast %205 : vector<8x1xf32> to vector<8x8xf32>
    %207 = arith.subf %203, %206 : vector<8x8xf32>
    %208 = math.exp %207 : vector<8x8xf32>
    %cst_94 = arith.constant dense<0.000000e+00> : vector<8xf32>
    %209 = vector.multi_reduction <add>, %208, %cst_94 [1] : vector<8x8xf32> to vector<8xf32>
    %210 = vector.shape_cast %209 : vector<8xf32> to vector<8x1xf32>
    %211 = tpu.reciprocal %210 {approx = true} : vector<8x1xf32> -> vector<8x1xf32>
    %212 = arith.truncf %208 : vector<8x8xf32> to vector<8x8xbf16>
    %cst_95 = arith.constant dense<0.000000e+00> : vector<8x32xf32>
    %213 = tpu.matmul %212, %179, %cst_95 {dimension_numbers = #tpu.dot_dimension_numbers<[1], [0], [0], [1], [0, 0, 1, 1], [], []>} : vector<8x8xbf16>, vector<8x32xbf16>, vector<8x32xf32> -> vector<8x32xf32>
    %214 = vector.broadcast %211 : vector<8x1xf32> to vector<8x32xf32>
    %215 = arith.mulf %213, %214 : vector<8x32xf32>
    %cst_96 = arith.constant 0.000000e+00 : f32
    %216 = vector.shape_cast %86 : vector<1x32xi1> to vector<1x32xi1>
    %217 = vector.broadcast %216 : vector<1x32xi1> to vector<8x32xi1>
    %218 = vector.broadcast %cst_96 : f32 to vector<8x32xf32>
    %219 = arith.select %217, %215, %218 : vector<8x32xi1>, vector<8x32xf32>
    %220 = arith.addf %200, %219 : vector<8x32xf32>
    %221 = vector.extract_strided_slice %58 {offsets = [8, 0], sizes = [8, 8], strides = [1, 1]} : vector<16x8xbf16> to vector<8x8xbf16>
    %222 = vector.extract_strided_slice %59 {offsets = [8, 0], sizes = [8, 8], strides = [1, 1]} : vector<16x8xbf16> to vector<8x8xbf16>
    "tpu.trace_start"() <{level = 10 : i32, message = "qd,kd->qk"}> : () -> ()
    %cst_97 = arith.constant dense<0.000000e+00> : vector<8x8xf32>
    %223 = tpu.matmul %221, %222, %cst_97 {dimension_numbers = #tpu.dot_dimension_numbers<[1], [1], [0], [0], [0, 0, 1, 0], [], []>} : vector<8x8xbf16>, vector<8x8xbf16>, vector<8x8xf32> -> vector<8x8xf32>
    "tpu.trace_stop"() : () -> ()
    %cst_98 = arith.constant dense<0xFF800000> : vector<8xf32>
    %224 = vector.multi_reduction <maximumf>, %223, %cst_98 [1] : vector<8x8xf32> to vector<8xf32>
    %225 = vector.shape_cast %224 : vector<8xf32> to vector<8x1xf32>
    %226 = vector.broadcast %225 : vector<8x1xf32> to vector<8x8xf32>
    %227 = arith.subf %223, %226 : vector<8x8xf32>
    %228 = math.exp %227 : vector<8x8xf32>
    %cst_99 = arith.constant dense<0.000000e+00> : vector<8xf32>
    %229 = vector.multi_reduction <add>, %228, %cst_99 [1] : vector<8x8xf32> to vector<8xf32>
    %230 = vector.shape_cast %229 : vector<8xf32> to vector<8x1xf32>
    %231 = tpu.reciprocal %230 {approx = true} : vector<8x1xf32> -> vector<8x1xf32>
    %232 = arith.truncf %228 : vector<8x8xf32> to vector<8x8xbf16>
    %cst_100 = arith.constant dense<0.000000e+00> : vector<8x32xf32>
    %233 = tpu.matmul %232, %179, %cst_100 {dimension_numbers = #tpu.dot_dimension_numbers<[1], [0], [0], [1], [0, 0, 1, 1], [], []>} : vector<8x8xbf16>, vector<8x32xbf16>, vector<8x32xf32> -> vector<8x32xf32>
    %234 = vector.broadcast %231 : vector<8x1xf32> to vector<8x32xf32>
    %235 = arith.mulf %233, %234 : vector<8x32xf32>
    %cst_101 = arith.constant 0.000000e+00 : f32
    %236 = vector.shape_cast %91 : vector<1x32xi1> to vector<1x32xi1>
    %237 = vector.broadcast %236 : vector<1x32xi1> to vector<8x32xi1>
    %238 = vector.broadcast %cst_101 : f32 to vector<8x32xf32>
    %239 = arith.select %237, %235, %238 : vector<8x32xi1>, vector<8x32xf32>
    %240 = arith.addf %220, %239 : vector<8x32xf32>
    %241 = vector.extract_strided_slice %74 {offsets = [8, 0], sizes = [8, 8], strides = [1, 1]} : vector<16x8xbf16> to vector<8x8xbf16>
    %242 = vector.extract_strided_slice %75 {offsets = [8, 0], sizes = [8, 8], strides = [1, 1]} : vector<16x8xbf16> to vector<8x8xbf16>
    "tpu.trace_start"() <{level = 10 : i32, message = "qd,kd->qk"}> : () -> ()
    %cst_102 = arith.constant dense<0.000000e+00> : vector<8x8xf32>
    %243 = tpu.matmul %241, %242, %cst_102 {dimension_numbers = #tpu.dot_dimension_numbers<[1], [1], [0], [0], [0, 0, 1, 0], [], []>} : vector<8x8xbf16>, vector<8x8xbf16>, vector<8x8xf32> -> vector<8x8xf32>
    "tpu.trace_stop"() : () -> ()
    %cst_103 = arith.constant dense<0xFF800000> : vector<8xf32>
    %244 = vector.multi_reduction <maximumf>, %243, %cst_103 [1] : vector<8x8xf32> to vector<8xf32>
    %245 = vector.shape_cast %244 : vector<8xf32> to vector<8x1xf32>
    %246 = vector.broadcast %245 : vector<8x1xf32> to vector<8x8xf32>
    %247 = arith.subf %243, %246 : vector<8x8xf32>
    %248 = math.exp %247 : vector<8x8xf32>
    %cst_104 = arith.constant dense<0.000000e+00> : vector<8xf32>
    %249 = vector.multi_reduction <add>, %248, %cst_104 [1] : vector<8x8xf32> to vector<8xf32>
    %250 = vector.shape_cast %249 : vector<8xf32> to vector<8x1xf32>
    %251 = tpu.reciprocal %250 {approx = true} : vector<8x1xf32> -> vector<8x1xf32>
    %252 = arith.truncf %248 : vector<8x8xf32> to vector<8x8xbf16>
    %cst_105 = arith.constant dense<0.000000e+00> : vector<8x32xf32>
    %253 = tpu.matmul %252, %179, %cst_105 {dimension_numbers = #tpu.dot_dimension_numbers<[1], [0], [0], [1], [0, 0, 1, 1], [], []>} : vector<8x8xbf16>, vector<8x32xbf16>, vector<8x32xf32> -> vector<8x32xf32>
    %254 = vector.broadcast %251 : vector<8x1xf32> to vector<8x32xf32>
    %255 = arith.mulf %253, %254 : vector<8x32xf32>
    %cst_106 = arith.constant 0.000000e+00 : f32
    %256 = vector.shape_cast %96 : vector<1x32xi1> to vector<1x32xi1>
    %257 = vector.broadcast %256 : vector<1x32xi1> to vector<8x32xi1>
    %258 = vector.broadcast %cst_106 : f32 to vector<8x32xf32>
    %259 = arith.select %257, %255, %258 : vector<8x32xi1>, vector<8x32xf32>
    %260 = arith.addf %240, %259 : vector<8x32xf32>
    %261 = tpu.concatenate %178, %260 in 0 : vector<8x32xf32>, vector<8x32xf32> -> vector<16x32xf32>
    %262 = arith.truncf %261 : vector<16x32xf32> to vector<16x32xbf16>
    %c0_107 = arith.constant 0 : index
    %c0_108 = arith.constant 0 : index
    %263 = vector.load %arg10[%c0_107, %c0_108] : memref<32x32xbf16, #tpu.memory_space<vmem>>, vector<32x32xbf16>
    %cst_109 = arith.constant dense<0.000000e+00> : vector<16x32xf32>
    %264 = tpu.matmul %262, %263, %cst_109 {dimension_numbers = #tpu.dot_dimension_numbers<[1], [0], [0], [1], [0, 0, 1, 1], [], []>} : vector<16x32xbf16>, vector<32x32xbf16>, vector<16x32xf32> -> vector<16x32xf32>
    %265 = tpu.iota {dimensions = array<i32: 0>} : vector<16x32xi32>
    %c8_i32_110 = arith.constant 8 : i32
    %c0_i32_111 = arith.constant 0 : i32
    %266 = arith.cmpi eq, %c8_i32_110, %c0_i32_111 : i32
    %c1_i32 = arith.constant 1 : i32
    %267 = arith.select %266, %c1_i32, %c8_i32_110 : i32
    %268 = vector.broadcast %267 : i32 to vector<16x32xi32>
    %269 = arith.remsi %265, %268 : vector<16x32xi32>
    %c0_i32_112 = arith.constant 0 : i32
    %270 = vector.broadcast %c0_i32_112 : i32 to vector<16x32xi32>
    %271 = arith.cmpi ne, %269, %270 : vector<16x32xi32>
    %c0_i32_113 = arith.constant 0 : i32
    %272 = vector.broadcast %c0_i32_113 : i32 to vector<16x32xi32>
    %273 = arith.cmpi slt, %269, %272 : vector<16x32xi32>
    %c0_i32_114 = arith.constant 0 : i32
    %274 = arith.cmpi slt, %267, %c0_i32_114 : i32
    %275 = vector.broadcast %274 : i1 to vector<16x32xi1>
    %276 = vector.broadcast %275 : vector<16x32xi1> to vector<16x32xi1>
    %277 = arith.xori %273, %276 : vector<16x32xi1>
    %278 = arith.andi %277, %271 : vector<16x32xi1>
    %279 = vector.broadcast %267 : i32 to vector<16x32xi32>
    %280 = arith.addi %269, %279 : vector<16x32xi32>
    %281 = arith.select %278, %280, %269 : vector<16x32xi1>, vector<16x32xi32>
    %c2_i32 = arith.constant 2 : i32
    %282 = tpu.dynamic_rotate %10 by %c2_i32 dim 0 : vector<16x32xf32>, i32 -> vector<16x32xf32>
    %c2_i32_115 = arith.constant 2 : i32
    %283 = vector.broadcast %c2_i32_115 : i32 to vector<16x32xi32>
    %284 = arith.cmpi sge, %281, %283 : vector<16x32xi32>
    %cst_116 = arith.constant 0.000000e+00 : f32
    %285 = vector.broadcast %cst_116 : f32 to vector<16x32xf32>
    %286 = arith.select %284, %282, %285 : vector<16x32xi1>, vector<16x32xf32>
    %c1_i32_117 = arith.constant 1 : i32
    %287 = tpu.dynamic_rotate %10 by %c1_i32_117 dim 0 : vector<16x32xf32>, i32 -> vector<16x32xf32>
    %c1_i32_118 = arith.constant 1 : i32
    %288 = vector.broadcast %c1_i32_118 : i32 to vector<16x32xi32>
    %289 = arith.cmpi sge, %281, %288 : vector<16x32xi32>
    %cst_119 = arith.constant 0.000000e+00 : f32
    %290 = vector.broadcast %cst_119 : f32 to vector<16x32xf32>
    %291 = arith.select %289, %287, %290 : vector<16x32xi1>, vector<16x32xf32>
    %c15_i32 = arith.constant 15 : i32
    %292 = tpu.dynamic_rotate %10 by %c15_i32 dim 0 : vector<16x32xf32>, i32 -> vector<16x32xf32>
    %c7_i32 = arith.constant 7 : i32
    %293 = vector.broadcast %c7_i32 : i32 to vector<16x32xi32>
    %294 = arith.cmpi slt, %281, %293 : vector<16x32xi32>
    %cst_120 = arith.constant 0.000000e+00 : f32
    %295 = vector.broadcast %cst_120 : f32 to vector<16x32xf32>
    %296 = arith.select %294, %292, %295 : vector<16x32xi1>, vector<16x32xf32>
    %c14_i32 = arith.constant 14 : i32
    %297 = tpu.dynamic_rotate %10 by %c14_i32 dim 0 : vector<16x32xf32>, i32 -> vector<16x32xf32>
    %c6_i32 = arith.constant 6 : i32
    %298 = vector.broadcast %c6_i32 : i32 to vector<16x32xi32>
    %299 = arith.cmpi slt, %281, %298 : vector<16x32xi32>
    %cst_121 = arith.constant 0.000000e+00 : f32
    %300 = vector.broadcast %cst_121 : f32 to vector<16x32xf32>
    %301 = arith.select %299, %297, %300 : vector<16x32xi1>, vector<16x32xf32>
    %c0_122 = arith.constant 0 : index
    %c0_123 = arith.constant 0 : index
    %302 = vector.load %arg12[%c0_122, %c0_123] : memref<3x32xf32, #tpu.memory_space<vmem>>, vector<1x32xf32>
    %303 = vector.broadcast %302 : vector<1x32xf32> to vector<16x32xf32>
    %304 = arith.mulf %291, %303 : vector<16x32xf32>
    %c1_124 = arith.constant 1 : index
    %c0_125 = arith.constant 0 : index
    %305 = vector.load %arg12[%c1_124, %c0_125] : memref<3x32xf32, #tpu.memory_space<vmem>>, vector<1x32xf32>
    %306 = vector.broadcast %305 : vector<1x32xf32> to vector<16x32xf32>
    %307 = arith.mulf %10, %306 : vector<16x32xf32>
    %308 = arith.addf %304, %307 : vector<16x32xf32>
    %c2_126 = arith.constant 2 : index
    %c0_127 = arith.constant 0 : index
    %309 = vector.load %arg12[%c2_126, %c0_127] : memref<3x32xf32, #tpu.memory_space<vmem>>, vector<1x32xf32>
    %310 = vector.broadcast %309 : vector<1x32xf32> to vector<16x32xf32>
    %311 = arith.mulf %296, %310 : vector<16x32xf32>
    %312 = arith.addf %308, %311 : vector<16x32xf32>
    %c0_128 = arith.constant 0 : index
    %c0_129 = arith.constant 0 : index
    %313 = vector.load %arg13[%c0_128, %c0_129] : memref<1x32xf32, #tpu.memory_space<vmem>>, vector<1x32xf32>
    %314 = vector.broadcast %313 : vector<1x32xf32> to vector<16x32xf32>
    %315 = arith.addf %312, %314 : vector<16x32xf32>
    %c0_130 = arith.constant 0 : index
    %c0_131 = arith.constant 0 : index
    %316 = vector.load %arg15[%c0_130, %c0_131] : memref<5x32xf32, #tpu.memory_space<vmem>>, vector<1x32xf32>
    %317 = vector.broadcast %316 : vector<1x32xf32> to vector<16x32xf32>
    %318 = arith.mulf %286, %317 : vector<16x32xf32>
    %c1_132 = arith.constant 1 : index
    %c0_133 = arith.constant 0 : index
    %319 = vector.load %arg15[%c1_132, %c0_133] : memref<5x32xf32, #tpu.memory_space<vmem>>, vector<1x32xf32>
    %320 = vector.broadcast %319 : vector<1x32xf32> to vector<16x32xf32>
    %321 = arith.mulf %291, %320 : vector<16x32xf32>
    %322 = arith.addf %318, %321 : vector<16x32xf32>
    %c2_134 = arith.constant 2 : index
    %c0_135 = arith.constant 0 : index
    %323 = vector.load %arg15[%c2_134, %c0_135] : memref<5x32xf32, #tpu.memory_space<vmem>>, vector<1x32xf32>
    %324 = vector.broadcast %323 : vector<1x32xf32> to vector<16x32xf32>
    %325 = arith.mulf %10, %324 : vector<16x32xf32>
    %326 = arith.addf %322, %325 : vector<16x32xf32>
    %c3_136 = arith.constant 3 : index
    %c0_137 = arith.constant 0 : index
    %327 = vector.load %arg15[%c3_136, %c0_137] : memref<5x32xf32, #tpu.memory_space<vmem>>, vector<1x32xf32>
    %328 = vector.broadcast %327 : vector<1x32xf32> to vector<16x32xf32>
    %329 = arith.mulf %296, %328 : vector<16x32xf32>
    %330 = arith.addf %326, %329 : vector<16x32xf32>
    %c4 = arith.constant 4 : index
    %c0_138 = arith.constant 0 : index
    %331 = vector.load %arg15[%c4, %c0_138] : memref<5x32xf32, #tpu.memory_space<vmem>>, vector<1x32xf32>
    %332 = vector.broadcast %331 : vector<1x32xf32> to vector<16x32xf32>
    %333 = arith.mulf %301, %332 : vector<16x32xf32>
    %334 = arith.addf %330, %333 : vector<16x32xf32>
    %c0_139 = arith.constant 0 : index
    %c0_140 = arith.constant 0 : index
    %335 = vector.load %arg16[%c0_139, %c0_140] : memref<1x32xf32, #tpu.memory_space<vmem>>, vector<1x32xf32>
    %336 = vector.broadcast %335 : vector<1x32xf32> to vector<16x32xf32>
    %337 = arith.addf %334, %336 : vector<16x32xf32>
    %c0_141 = arith.constant 0 : index
    %c0_142 = arith.constant 0 : index
    %338 = vector.load %arg11[%c0_141, %c0_142] : memref<32x32xbf16, #tpu.memory_space<vmem>>, vector<32x32xbf16>
    %cst_143 = arith.constant dense<0.000000e+00> : vector<16x32xf32>
    %339 = tpu.matmul %11, %338, %cst_143 {dimension_numbers = #tpu.dot_dimension_numbers<[1], [0], [0], [1], [0, 0, 1, 1], [], []>} : vector<16x32xbf16>, vector<32x32xbf16>, vector<16x32xf32> -> vector<16x32xf32>
    %340 = arith.addf %264, %339 : vector<16x32xf32>
    %341 = arith.truncf %315 : vector<16x32xf32> to vector<16x32xbf16>
    %c0_144 = arith.constant 0 : index
    %c0_145 = arith.constant 0 : index
    %342 = vector.load %arg14[%c0_144, %c0_145] : memref<32x32xbf16, #tpu.memory_space<vmem>>, vector<32x32xbf16>
    %cst_146 = arith.constant dense<0.000000e+00> : vector<16x32xf32>
    %343 = tpu.matmul %341, %342, %cst_146 {dimension_numbers = #tpu.dot_dimension_numbers<[1], [0], [0], [1], [0, 0, 1, 1], [], []>} : vector<16x32xbf16>, vector<32x32xbf16>, vector<16x32xf32> -> vector<16x32xf32>
    %344 = arith.addf %340, %343 : vector<16x32xf32>
    %345 = arith.truncf %337 : vector<16x32xf32> to vector<16x32xbf16>
    %c0_147 = arith.constant 0 : index
    %c0_148 = arith.constant 0 : index
    %346 = vector.load %arg17[%c0_147, %c0_148] : memref<32x32xbf16, #tpu.memory_space<vmem>>, vector<32x32xbf16>
    %cst_149 = arith.constant dense<0.000000e+00> : vector<16x32xf32>
    %347 = tpu.matmul %345, %346, %cst_149 {dimension_numbers = #tpu.dot_dimension_numbers<[1], [0], [0], [1], [0, 0, 1, 1], [], []>} : vector<16x32xbf16>, vector<32x32xbf16>, vector<16x32xf32> -> vector<16x32xf32>
    %348 = arith.addf %344, %347 : vector<16x32xf32>
    %c0_150 = arith.constant 0 : index
    %c0_151 = arith.constant 0 : index
    %349 = vector.load %arg18[%c0_150, %c0_151] : memref<1x32xf32, #tpu.memory_space<vmem>>, vector<1x32xf32>
    %350 = vector.broadcast %349 : vector<1x32xf32> to vector<16x32xf32>
    %351 = arith.addf %348, %350 : vector<16x32xf32>
    %c0_152 = arith.constant 0 : index
    %c0_153 = arith.constant 0 : index
    %352 = vector.load %arg19[%c0_152, %c0_153] : memref<16x32xf32, #tpu.memory_space<vmem>>, vector<16x32xf32>
    tpu.vector_store %arg19[%c0_152, %c0_153], %351 {strides = array<i32>} : memref<16x32xf32, #tpu.memory_space<vmem>>, vector<16x32xf32>,
    return
  }
  func.func @transform_0(%arg0: i32) -> (i32, i32) {
    %c0_i32 = arith.constant 0 : i32
    %c0_i32_0 = arith.constant 0 : i32
    return %arg0, %c0_i32 : i32, i32
  }
  func.func @transform_1(%arg0: i32) -> (i32, i32) {
    %c0_i32 = arith.constant 0 : i32
    %c0_i32_0 = arith.constant 0 : i32
    return %arg0, %c0_i32 : i32, i32
  }
  func.func @transform_2(%arg0: i32) -> (i32, i32) {
    %c0_i32 = arith.constant 0 : i32
    %c0_i32_0 = arith.constant 0 : i32
    return %arg0, %c0_i32 : i32, i32
  }
  func.func @transform_3(%arg0: i32) -> (i32, i32, i32) {
    %c0_i32 = arith.constant 0 : i32
    %c0_i32_0 = arith.constant 0 : i32
    %c0_i32_1 = arith.constant 0 : i32
    %c0_i32_2 = arith.constant 0 : i32
    return %c0_i32, %c0_i32_0, %c0_i32_1 : i32, i32, i32
  }
  func.func @transform_4(%arg0: i32) -> (i32, i32, i32) {
    %c0_i32 = arith.constant 0 : i32
    %c0_i32_0 = arith.constant 0 : i32
    %c0_i32_1 = arith.constant 0 : i32
    %c0_i32_2 = arith.constant 0 : i32
    return %c0_i32, %c0_i32_0, %c0_i32_1 : i32, i32, i32
  }
  func.func @transform_5(%arg0: i32) -> (i32, i32, i32) {
    %c0_i32 = arith.constant 0 : i32
    %c0_i32_0 = arith.constant 0 : i32
    %c0_i32_1 = arith.constant 0 : i32
    %c0_i32_2 = arith.constant 0 : i32
    return %c0_i32, %c0_i32_0, %c0_i32_1 : i32, i32, i32
  }
  func.func @transform_6(%arg0: i32) -> (i32, i32, i32) {
    %c0_i32 = arith.constant 0 : i32
    %c0_i32_0 = arith.constant 0 : i32
    %c0_i32_1 = arith.constant 0 : i32
    %c0_i32_2 = arith.constant 0 : i32
    return %c0_i32, %c0_i32_0, %c0_i32_1 : i32, i32, i32
  }
  func.func @transform_7(%arg0: i32) -> (i32, i32) {
    %c0_i32 = arith.constant 0 : i32
    %c0_i32_0 = arith.constant 0 : i32
    %c0_i32_1 = arith.constant 0 : i32
    return %c0_i32, %c0_i32_0 : i32, i32
  }
  func.func @transform_8(%arg0: i32) -> (i32, i32) {
    %c0_i32 = arith.constant 0 : i32
    %c0_i32_0 = arith.constant 0 : i32
    %c0_i32_1 = arith.constant 0 : i32
    return %c0_i32, %c0_i32_0 : i32, i32
  }
  func.func @transform_9(%arg0: i32) -> (i32, i32) {
    %c0_i32 = arith.constant 0 : i32
    %c0_i32_0 = arith.constant 0 : i32
    %c0_i32_1 = arith.constant 0 : i32
    return %c0_i32, %c0_i32_0 : i32, i32
  }
  func.func @transform_10(%arg0: i32) -> (i32, i32) {
    %c0_i32 = arith.constant 0 : i32
    %c0_i32_0 = arith.constant 0 : i32
    %c0_i32_1 = arith.constant 0 : i32
    return %c0_i32, %c0_i32_0 : i32, i32
  }
  func.func @transform_11(%arg0: i32) -> (i32, i32) {
    %c0_i32 = arith.constant 0 : i32
    %c0_i32_0 = arith.constant 0 : i32
    %c0_i32_1 = arith.constant 0 : i32
    return %c0_i32, %c0_i32_0 : i32, i32
  }
  func.func @transform_12(%arg0: i32) -> (i32, i32) {
    %c0_i32 = arith.constant 0 : i32
    %c0_i32_0 = arith.constant 0 : i32
    %c0_i32_1 = arith.constant 0 : i32
    return %c0_i32, %c0_i32_0 : i32, i32
  }
  func.func @transform_13(%arg0: i32) -> (i32, i32) {
    %c0_i32 = arith.constant 0 : i32
    %c0_i32_0 = arith.constant 0 : i32
    %c0_i32_1 = arith.constant 0 : i32
    return %c0_i32, %c0_i32_0 : i32, i32
  }
  func.func @transform_14(%arg0: i32) -> (i32, i32) {
    %c0_i32 = arith.constant 0 : i32
    %c0_i32_0 = arith.constant 0 : i32
    %c0_i32_1 = arith.constant 0 : i32
    return %c0_i32, %c0_i32_0 : i32, i32
  }
  func.func @transform_15(%arg0: i32) -> (i32, i32) {
    %c0_i32 = arith.constant 0 : i32
    %c0_i32_0 = arith.constant 0 : i32
    %c0_i32_1 = arith.constant 0 : i32
    return %c0_i32, %c0_i32_0 : i32, i32
  }
  func.func @transform_16(%arg0: i32) -> (i32, i32) {
    %c0_i32 = arith.constant 0 : i32
    %c0_i32_0 = arith.constant 0 : i32
    %c0_i32_1 = arith.constant 0 : i32
    return %c0_i32, %c0_i32_0 : i32, i32
  }
  func.func @transform_17(%arg0: i32) -> (i32, i32) {
    %c0_i32 = arith.constant 0 : i32
    %c0_i32_0 = arith.constant 0 : i32
    %c0_i32_1 = arith.constant 0 : i32
    return %c0_i32, %c0_i32_0 : i32, i32
  }
  func.func @transform_18(%arg0: i32) -> (i32, i32) {
    %c0_i32 = arith.constant 0 : i32
    %c0_i32_0 = arith.constant 0 : i32
    return %arg0, %c0_i32 : i32, i32
  }
}

</mosaic_0001>

<llo_original>
// kernel: tpu_custom_call.1
$region0: #{tpu_custom_call.1}
  #allocation0 [shape = 'u32[]', space=smem, size = 0x4, offset = 0x4, fixed_abs, tag = 'smem constant byte address 0x4 - core index']
  #allocation1 [shape = 'u32[144,128]{1,0:T(1,128)}', space=vmem, size = 0x12000, scoped, tag = 'internal scratch']
  %s0 = inlined_call_operand.vmem [shape: f32[64,32], index: 0, kind: input, shape index: {}]
  %s1 = inlined_call_operand.vmem [shape: f32[64,32], index: 1, kind: input, shape index: {}]
  %s2 = inlined_call_operand.vmem [shape: f32[64,32], index: 2, kind: input, shape index: {}]
  %s3 = inlined_call_operand.vmem [shape: bf16[4,32,8], index: 3, kind: input, shape index: {}]
  %s4 = inlined_call_operand.vmem [shape: f32[4,1,8], index: 4, kind: input, shape index: {}]
  %s5 = inlined_call_operand.vmem [shape: bf16[4,32,8], index: 5, kind: input, shape index: {}]
  %s6 = inlined_call_operand.vmem [shape: f32[4,1,8], index: 6, kind: input, shape index: {}]
  %s7 = inlined_call_operand.vmem [shape: bf16[32,32], index: 7, kind: input, shape index: {}]
  %s8 = inlined_call_operand.vmem [shape: f32[1,32], index: 8, kind: input, shape index: {}]
  %s9 = inlined_call_operand.vmem [shape: bf16[32,32], index: 9, kind: input, shape index: {}]
  %s10 = inlined_call_operand.vmem [shape: bf16[32,32], index: 10, kind: input, shape index: {}]
  %s11 = inlined_call_operand.vmem [shape: f32[3,32], index: 11, kind: input, shape index: {}]
  %s12 = inlined_call_operand.vmem [shape: f32[1,32], index: 12, kind: input, shape index: {}]
  %s13 = inlined_call_operand.vmem [shape: bf16[32,32], index: 13, kind: input, shape index: {}]
  %s14 = inlined_call_operand.vmem [shape: f32[5,32], index: 14, kind: input, shape index: {}]
  %s15 = inlined_call_operand.vmem [shape: f32[1,32], index: 15, kind: input, shape index: {}]
  %s16 = inlined_call_operand.vmem [shape: bf16[32,32], index: 16, kind: input, shape index: {}]
  %s17 = inlined_call_operand.vmem [shape: f32[1,32], index: 17, kind: input, shape index: {}]
  %s18 = inlined_call_operand.vmem [shape: f32[64,32], index: 18, kind: output, shape index: {}]
  %s19 = sld [smem:[#allocation0]]
  $region105: #{tpu_custom_call.1} parent=0
    _
  %s21 = ssub.s32 1, %s19
  %s22 = scalar_select 0, %s21, %s19
  loop: start=0, step=1, limit=6
  $region2: #{tpu_custom_call.1} parent=0 // loop_pre_header
    _
  $region3: #{tpu_custom_call.1} parent=0 // loop_header
    %s24 = sphi 0, %s28
    %p25 = scmp.ge.s32.totalorder %s24, 6
    %s34 = sphi 0, %s36
    %s37 = sphi 0, %s34
    %s38 = sphi 0, %s37
    %s54 = sphi 0, %s38
    %s60 = sphi 0, %s62
    %s63 = sphi 0, %s60
    %s64 = sphi 0, %s63
    %s80 = sphi 0, %s64
    %s86 = sphi 0, %s88
    %s89 = sphi 0, %s86
    %s90 = sphi 0, %s89
    %s106 = sphi 0, %s90
    %s110 = sphi 0, %s110
    %s112 = sphi 0, %s110
    %s113 = sphi 0, %s112
    %s127 = sphi 0, %s113
    %s131 = sphi 0, %s131
    %s133 = sphi 0, %s131
    %s134 = sphi 0, %s133
    %s148 = sphi 0, %s134
    %s152 = sphi 0, %s152
    %s154 = sphi 0, %s152
    %s155 = sphi 0, %s154
    %s169 = sphi 0, %s155
    %s173 = sphi 0, %s173
    %s175 = sphi 0, %s173
    %s176 = sphi 0, %s175
    %s190 = sphi 0, %s176
    %s194 = sphi 0, %s194
    %s196 = sphi 0, %s194
    %s197 = sphi 0, %s196
    %s211 = sphi 0, %s197
    %s215 = sphi 0, %s215
    %s217 = sphi 0, %s215
    %s218 = sphi 0, %s217
    %s232 = sphi 0, %s218
    %s236 = sphi 0, %s236
    %s238 = sphi 0, %s236
    %s239 = sphi 0, %s238
    %s253 = sphi 0, %s239
    %s257 = sphi 0, %s257
    %s259 = sphi 0, %s257
    %s260 = sphi 0, %s259
    %s274 = sphi 0, %s260
    %s278 = sphi 0, %s278
    %s280 = sphi 0, %s278
    %s281 = sphi 0, %s280
    %s295 = sphi 0, %s281
    %s299 = sphi 0, %s299
    %s301 = sphi 0, %s299
    %s302 = sphi 0, %s301
    %s316 = sphi 0, %s302
    %s320 = sphi 0, %s320
    %s322 = sphi 0, %s320
    %s323 = sphi 0, %s322
    %s337 = sphi 0, %s323
    %s341 = sphi 0, %s341
    %s343 = sphi 0, %s341
    %s344 = sphi 0, %s343
    %s358 = sphi 0, %s344
    %s362 = sphi 0, %s362
    %s364 = sphi 0, %s362
    %s365 = sphi 0, %s364
    %s379 = sphi 0, %s365
    %s383 = sphi 0, %s383
    %s385 = sphi 0, %s383
    %s386 = sphi 0, %s385
    %s400 = sphi 0, %s386
    %s404 = sphi 0, %s404
    %s406 = sphi 0, %s404
    %s407 = sphi 0, %s406
    %s421 = sphi 0, %s407
    %s427 = sphi 0, %s429
    %s430 = sphi 0, %s427
    %s431 = sphi 0, %s430
    %s447 = sphi 0, %s431
  $region4: #{tpu_custom_call.1} parent=0 // loop_header_branch
    %27 = sbr.rel (%p25) target = $region8
  $region5: #{tpu_custom_call.1} parent=0 // loop_body
    %s29 = ssub.s32 %s24, 1
    %s30 = ssub.s32 %s24, 2
    %s31 = sadd.s32 %s24, 1
    %s32 = ssub.s32 %s24, %s31
    %p33 = scmp.eq.s32.totalorder %s32, 0
    %s35 = sadd.s32 %s34, 1
    %s36 = scalar_select %p33, %s34, %s35
    %p39 = pneg %p33
    %p40 = scmp.eq.s32.totalorder %s24, 3
    %p41 = por %p39, %p40
    %p42 = scmp.ne.s32.totalorder %s34, %s37
    %p43 = scmp.eq.s32.totalorder %s24, 0
    %p44 = por %p42, %p43
    %p45 = scmp.ne.s32.totalorder %s34, %s37
    %p46 = scmp.eq.s32.totalorder %s29, 3
    %p47 = por %p45, %p46
    %p48 = scmp.ne.s32.totalorder %s37, %s38
    %p49 = scmp.eq.s32.totalorder %s29, 0
    %p50 = por %p48, %p49
    %p51 = scmp.ne.s32.totalorder %s37, %s38
    %p52 = scmp.eq.s32.totalorder %s30, 3
    %p53 = por %p51, %p52
    %p55 = scmp.ne.s32.totalorder %s38, %s54
    %p56 = scmp.eq.s32.totalorder %s30, 0
    %p57 = por %p55, %p56
    %s58 = ssub.s32 %s24, %s31
    %p59 = scmp.eq.s32.totalorder %s58, 0
    %s61 = sadd.s32 %s60, 1
    %s62 = scalar_select %p59, %s60, %s61
    %p65 = pneg %p59
    %p66 = scmp.eq.s32.totalorder %s24, 3
    %p67 = por %p65, %p66
    %p68 = scmp.ne.s32.totalorder %s60, %s63
    %p69 = scmp.eq.s32.totalorder %s24, 0
    %p70 = por %p68, %p69
    %p71 = scmp.ne.s32.totalorder %s60, %s63
    %p72 = scmp.eq.s32.totalorder %s29, 3
    %p73 = por %p71, %p72
    %p74 = scmp.ne.s32.totalorder %s63, %s64
    %p75 = scmp.eq.s32.totalorder %s29, 0
    %p76 = por %p74, %p75
    %p77 = scmp.ne.s32.totalorder %s63, %s64
    %p78 = scmp.eq.s32.totalorder %s30, 3
    %p79 = por %p77, %p78
    %p81 = scmp.ne.s32.totalorder %s64, %s80
    %p82 = scmp.eq.s32.totalorder %s30, 0
    %p83 = por %p81, %p82
    %s84 = ssub.s32 %s24, %s31
    %p85 = scmp.eq.s32.totalorder %s84, 0
    %s87 = sadd.s32 %s86, 1
    %s88 = scalar_select %p85, %s86, %s87
    %p91 = pneg %p85
    %p92 = scmp.eq.s32.totalorder %s24, 3
    %p93 = por %p91, %p92
    %p94 = scmp.ne.s32.totalorder %s86, %s89
    %p95 = scmp.eq.s32.totalorder %s24, 0
    %p96 = por %p94, %p95
    %p97 = scmp.ne.s32.totalorder %s86, %s89
    %p98 = scmp.eq.s32.totalorder %s29, 3
    %p99 = por %p97, %p98
    %p100 = scmp.ne.s32.totalorder %s89, %s90
    %p101 = scmp.eq.s32.totalorder %s29, 0
    %p102 = por %p100, %p101
    %p103 = scmp.ne.s32.totalorder %s89, %s90
    %p104 = scmp.eq.s32.totalorder %s30, 3
    %p105 = por %p103, %p104
    %p107 = scmp.ne.s32.totalorder %s90, %s106
    %p108 = scmp.eq.s32.totalorder %s30, 0
    %p109 = por %p107, %p108
    %s111 = sadd.s32 %s110, 1
    %p114 = scmp.eq.s32.totalorder %s24, 3
    %p115 = scmp.ne.s32.totalorder %s110, %s112
    %p116 = scmp.eq.s32.totalorder %s24, 0
    %p117 = por %p115, %p116
    %p118 = scmp.ne.s32.totalorder %s110, %s112
    %p119 = scmp.eq.s32.totalorder %s29, 3
    %p120 = por %p118, %p119
    %p121 = scmp.ne.s32.totalorder %s112, %s113
    %p122 = scmp.eq.s32.totalorder %s29, 0
    %p123 = por %p121, %p122
    %p124 = scmp.ne.s32.totalorder %s112, %s113
    %p125 = scmp.eq.s32.totalorder %s30, 3
    %p126 = por %p124, %p125
    %p128 = scmp.ne.s32.totalorder %s113, %s127
    %p129 = scmp.eq.s32.totalorder %s30, 0
    %p130 = por %p128, %p129
    %s132 = sadd.s32 %s131, 1
    %p135 = scmp.eq.s32.totalorder %s24, 3
    %p136 = scmp.ne.s32.totalorder %s131, %s133
    %p137 = scmp.eq.s32.totalorder %s24, 0
    %p138 = por %p136, %p137
    %p139 = scmp.ne.s32.totalorder %s131, %s133
    %p140 = scmp.eq.s32.totalorder %s29, 3
    %p141 = por %p139, %p140
    %p142 = scmp.ne.s32.totalorder %s133, %s134
    %p143 = scmp.eq.s32.totalorder %s29, 0
    %p144 = por %p142, %p143
    %p145 = scmp.ne.s32.totalorder %s133, %s134
    %p146 = scmp.eq.s32.totalorder %s30, 3
    %p147 = por %p145, %p146
    %p149 = scmp.ne.s32.totalorder %s134, %s148
    %p150 = scmp.eq.s32.totalorder %s30, 0
    %p151 = por %p149, %p150
    %s153 = sadd.s32 %s152, 1
    %p156 = scmp.eq.s32.totalorder %s24, 3
    %p157 = scmp.ne.s32.totalorder %s152, %s154
    %p158 = scmp.eq.s32.totalorder %s24, 0
    %p159 = por %p157, %p158
    %p160 = scmp.ne.s32.totalorder %s152, %s154
    %p161 = scmp.eq.s32.totalorder %s29, 3
    %p162 = por %p160, %p161
    %p163 = scmp.ne.s32.totalorder %s154, %s155
    %p164 = scmp.eq.s32.totalorder %s29, 0
    %p165 = por %p163, %p164
    %p166 = scmp.ne.s32.totalorder %s154, %s155
    %p167 = scmp.eq.s32.totalorder %s30, 3
    %p168 = por %p166, %p167
    %p170 = scmp.ne.s32.totalorder %s155, %s169
    %p171 = scmp.eq.s32.totalorder %s30, 0
    %p172 = por %p170, %p171
    %s174 = sadd.s32 %s173, 1
    %p177 = scmp.eq.s32.totalorder %s24, 3
    %p178 = scmp.ne.s32.totalorder %s173, %s175
    %p179 = scmp.eq.s32.totalorder %s24, 0
    %p180 = por %p178, %p179
    %p181 = scmp.ne.s32.totalorder %s173, %s175
    %p182 = scmp.eq.s32.totalorder %s29, 3
    %p183 = por %p181, %p182
    %p184 = scmp.ne.s32.totalorder %s175, %s176
    %p185 = scmp.eq.s32.totalorder %s29, 0
    %p186 = por %p184, %p185
    %p187 = scmp.ne.s32.totalorder %s175, %s176
    %p188 = scmp.eq.s32.totalorder %s30, 3
    %p189 = por %p187, %p188
    %p191 = scmp.ne.s32.totalorder %s176, %s190
    %p192 = scmp.eq.s32.totalorder %s30, 0
    %p193 = por %p191, %p192
    %s195 = sadd.s32 %s194, 1
    %p198 = scmp.eq.s32.totalorder %s24, 3
    %p199 = scmp.ne.s32.totalorder %s194, %s196
    %p200 = scmp.eq.s32.totalorder %s24, 0
    %p201 = por %p199, %p200
    %p202 = scmp.ne.s32.totalorder %s194, %s196
    %p203 = scmp.eq.s32.totalorder %s29, 3
    %p204 = por %p202, %p203
    %p205 = scmp.ne.s32.totalorder %s196, %s197
    %p206 = scmp.eq.s32.totalorder %s29, 0
    %p207 = por %p205, %p206
    %p208 = scmp.ne.s32.totalorder %s196, %s197
    %p209 = scmp.eq.s32.totalorder %s30, 3
    %p210 = por %p208, %p209
    %p212 = scmp.ne.s32.totalorder %s197, %s211
    %p213 = scmp.eq.s32.totalorder %s30, 0
    %p214 = por %p212, %p213
    %s216 = sadd.s32 %s215, 1
    %p219 = scmp.eq.s32.totalorder %s24, 3
    %p220 = scmp.ne.s32.totalorder %s215, %s217
    %p221 = scmp.eq.s32.totalorder %s24, 0
    %p222 = por %p220, %p221
    %p223 = scmp.ne.s32.totalorder %s215, %s217
    %p224 = scmp.eq.s32.totalorder %s29, 3
    %p225 = por %p223, %p224
    %p226 = scmp.ne.s32.totalorder %s217, %s218
    %p227 = scmp.eq.s32.totalorder %s29, 0
    %p228 = por %p226, %p227
    %p229 = scmp.ne.s32.totalorder %s217, %s218
    %p230 = scmp.eq.s32.totalorder %s30, 3
    %p231 = por %p229, %p230
    %p233 = scmp.ne.s32.totalorder %s218, %s232
    %p234 = scmp.eq.s32.totalorder %s30, 0
    %p235 = por %p233, %p234
    %s237 = sadd.s32 %s236, 1
    %p240 = scmp.eq.s32.totalorder %s24, 3
    %p241 = scmp.ne.s32.totalorder %s236, %s238
    %p242 = scmp.eq.s32.totalorder %s24, 0
    %p243 = por %p241, %p242
    %p244 = scmp.ne.s32.totalorder %s236, %s238
    %p245 = scmp.eq.s32.totalorder %s29, 3
    %p246 = por %p244, %p245
    %p247 = scmp.ne.s32.totalorder %s238, %s239
    %p248 = scmp.eq.s32.totalorder %s29, 0
    %p249 = por %p247, %p248
    %p250 = scmp.ne.s32.totalorder %s238, %s239
    %p251 = scmp.eq.s32.totalorder %s30, 3
    %p252 = por %p250, %p251
    %p254 = scmp.ne.s32.totalorder %s239, %s253
    %p255 = scmp.eq.s32.totalorder %s30, 0
    %p256 = por %p254, %p255
    %s258 = sadd.s32 %s257, 1
    %p261 = scmp.eq.s32.totalorder %s24, 3
    %p262 = scmp.ne.s32.totalorder %s257, %s259
    %p263 = scmp.eq.s32.totalorder %s24, 0
    %p264 = por %p262, %p263
    %p265 = scmp.ne.s32.totalorder %s257, %s259
    %p266 = scmp.eq.s32.totalorder %s29, 3
    %p267 = por %p265, %p266
    %p268 = scmp.ne.s32.totalorder %s259, %s260
    %p269 = scmp.eq.s32.totalorder %s29, 0
    %p270 = por %p268, %p269
    %p271 = scmp.ne.s32.totalorder %s259, %s260
    %p272 = scmp.eq.s32.totalorder %s30, 3
    %p273 = por %p271, %p272
    %p275 = scmp.ne.s32.totalorder %s260, %s274
    %p276 = scmp.eq.s32.totalorder %s30, 0
    %p277 = por %p275, %p276
    %s279 = sadd.s32 %s278, 1
    %p282 = scmp.eq.s32.totalorder %s24, 3
    %p283 = scmp.ne.s32.totalorder %s278, %s280
    %p284 = scmp.eq.s32.totalorder %s24, 0
    %p285 = por %p283, %p284
    %p286 = scmp.ne.s32.totalorder %s278, %s280
    %p287 = scmp.eq.s32.totalorder %s29, 3
    %p288 = por %p286, %p287
    %p289 = scmp.ne.s32.totalorder %s280, %s281
    %p290 = scmp.eq.s32.totalorder %s29, 0
    %p291 = por %p289, %p290
    %p292 = scmp.ne.s32.totalorder %s280, %s281
    %p293 = scmp.eq.s32.totalorder %s30, 3
    %p294 = por %p292, %p293
    %p296 = scmp.ne.s32.totalorder %s281, %s295
    %p297 = scmp.eq.s32.totalorder %s30, 0
    %p298 = por %p296, %p297
    %s300 = sadd.s32 %s299, 1
    %p303 = scmp.eq.s32.totalorder %s24, 3
    %p304 = scmp.ne.s32.totalorder %s299, %s301
    %p305 = scmp.eq.s32.totalorder %s24, 0
    %p306 = por %p304, %p305
    %p307 = scmp.ne.s32.totalorder %s299, %s301
    %p308 = scmp.eq.s32.totalorder %s29, 3
    %p309 = por %p307, %p308
    %p310 = scmp.ne.s32.totalorder %s301, %s302
    %p311 = scmp.eq.s32.totalorder %s29, 0
    %p312 = por %p310, %p311
    %p313 = scmp.ne.s32.totalorder %s301, %s302
    %p314 = scmp.eq.s32.totalorder %s30, 3
    %p315 = por %p313, %p314
    %p317 = scmp.ne.s32.totalorder %s302, %s316
    %p318 = scmp.eq.s32.totalorder %s30, 0
    %p319 = por %p317, %p318
    %s321 = sadd.s32 %s320, 1
    %p324 = scmp.eq.s32.totalorder %s24, 3
    %p325 = scmp.ne.s32.totalorder %s320, %s322
    %p326 = scmp.eq.s32.totalorder %s24, 0
    %p327 = por %p325, %p326
    %p328 = scmp.ne.s32.totalorder %s320, %s322
    %p329 = scmp.eq.s32.totalorder %s29, 3
    %p330 = por %p328, %p329
    %p331 = scmp.ne.s32.totalorder %s322, %s323
    %p332 = scmp.eq.s32.totalorder %s29, 0
    %p333 = por %p331, %p332
    %p334 = scmp.ne.s32.totalorder %s322, %s323
    %p335 = scmp.eq.s32.totalorder %s30, 3
    %p336 = por %p334, %p335
    %p338 = scmp.ne.s32.totalorder %s323, %s337
    %p339 = scmp.eq.s32.totalorder %s30, 0
    %p340 = por %p338, %p339
    %s342 = sadd.s32 %s341, 1
    %p345 = scmp.eq.s32.totalorder %s24, 3
    %p346 = scmp.ne.s32.totalorder %s341, %s343
    %p347 = scmp.eq.s32.totalorder %s24, 0
    %p348 = por %p346, %p347
    %p349 = scmp.ne.s32.totalorder %s341, %s343
    %p350 = scmp.eq.s32.totalorder %s29, 3
    %p351 = por %p349, %p350
    %p352 = scmp.ne.s32.totalorder %s343, %s344
    %p353 = scmp.eq.s32.totalorder %s29, 0
    %p354 = por %p352, %p353
    %p355 = scmp.ne.s32.totalorder %s343, %s344
    %p356 = scmp.eq.s32.totalorder %s30, 3
    %p357 = por %p355, %p356
    %p359 = scmp.ne.s32.totalorder %s344, %s358
    %p360 = scmp.eq.s32.totalorder %s30, 0
    %p361 = por %p359, %p360
    %s363 = sadd.s32 %s362, 1
    %p366 = scmp.eq.s32.totalorder %s24, 3
    %p367 = scmp.ne.s32.totalorder %s362, %s364
    %p368 = scmp.eq.s32.totalorder %s24, 0
    %p369 = por %p367, %p368
    %p370 = scmp.ne.s32.totalorder %s362, %s364
    %p371 = scmp.eq.s32.totalorder %s29, 3
    %p372 = por %p370, %p371
    %p373 = scmp.ne.s32.totalorder %s364, %s365
    %p374 = scmp.eq.s32.totalorder %s29, 0
    %p375 = por %p373, %p374
    %p376 = scmp.ne.s32.totalorder %s364, %s365
    %p377 = scmp.eq.s32.totalorder %s30, 3
    %p378 = por %p376, %p377
    %p380 = scmp.ne.s32.totalorder %s365, %s379
    %p381 = scmp.eq.s32.totalorder %s30, 0
    %p382 = por %p380, %p381
    %s384 = sadd.s32 %s383, 1
    %p387 = scmp.eq.s32.totalorder %s24, 3
    %p388 = scmp.ne.s32.totalorder %s383, %s385
    %p389 = scmp.eq.s32.totalorder %s24, 0
    %p390 = por %p388, %p389
    %p391 = scmp.ne.s32.totalorder %s383, %s385
    %p392 = scmp.eq.s32.totalorder %s29, 3
    %p393 = por %p391, %p392
    %p394 = scmp.ne.s32.totalorder %s385, %s386
    %p395 = scmp.eq.s32.totalorder %s29, 0
    %p396 = por %p394, %p395
    %p397 = scmp.ne.s32.totalorder %s385, %s386
    %p398 = scmp.eq.s32.totalorder %s30, 3
    %p399 = por %p397, %p398
    %p401 = scmp.ne.s32.totalorder %s386, %s400
    %p402 = scmp.eq.s32.totalorder %s30, 0
    %p403 = por %p401, %p402
    %s405 = sadd.s32 %s404, 1
    %p408 = scmp.eq.s32.totalorder %s24, 3
    %p409 = scmp.ne.s32.totalorder %s404, %s406
    %p410 = scmp.eq.s32.totalorder %s24, 0
    %p411 = por %p409, %p410
    %p412 = scmp.ne.s32.totalorder %s404, %s406
    %p413 = scmp.eq.s32.totalorder %s29, 3
    %p414 = por %p412, %p413
    %p415 = scmp.ne.s32.totalorder %s406, %s407
    %p416 = scmp.eq.s32.totalorder %s29, 0
    %p417 = por %p415, %p416
    %p418 = scmp.ne.s32.totalorder %s406, %s407
    %p419 = scmp.eq.s32.totalorder %s30, 3
    %p420 = por %p418, %p419
    %p422 = scmp.ne.s32.totalorder %s407, %s421
    %p423 = scmp.eq.s32.totalorder %s30, 0
    %p424 = por %p422, %p423
    %s425 = ssub.s32 %s24, %s31
    %p426 = scmp.eq.s32.totalorder %s425, 0
    %s428 = sadd.s32 %s427, 1
    %s429 = scalar_select %p426, %s427, %s428
    %p432 = pneg %p426
    %p433 = scmp.eq.s32.totalorder %s24, 3
    %p434 = por %p432, %p433
    %p435 = scmp.ne.s32.totalorder %s427, %s430
    %p436 = scmp.eq.s32.totalorder %s24, 0
    %p437 = por %p435, %p436
    %p438 = scmp.ne.s32.totalorder %s427, %s430
    %p439 = scmp.eq.s32.totalorder %s29, 3
    %p440 = por %p438, %p439
    %p441 = scmp.ne.s32.totalorder %s430, %s431
    %p442 = scmp.eq.s32.totalorder %s29, 0
    %p443 = por %p441, %p442
    %p444 = scmp.ne.s32.totalorder %s430, %s431
    %p445 = scmp.eq.s32.totalorder %s30, 3
    %p446 = por %p444, %p445
    %p448 = scmp.ne.s32.totalorder %s431, %s447
    %p449 = scmp.eq.s32.totalorder %s30, 0
    %p450 = por %p448, %p449
    %p451 = scmp.le.s32.totalorder 1, %s24
    %p452 = scmp.lt.s32.totalorder %s24, 5
    %p453 = pnand %p451, %p452
    %p454 = pneg %p453
    // Predicated region
    $region9: #{tpu_custom_call.1} parent=5 // pred_check
      _
    $region10: #{tpu_custom_call.1} parent=5 // pred_check_branch
      %456 = sbr.rel (%p453) target = $region12
    $region11: #{tpu_custom_call.1} parent=5 // pred_region
      %s457 = ssub.s32 %s24, 1
      // Predicated region
      $region13: #{tpu_custom_call.1} parent=11 // pred_check
        %p458 = pneg %p123
      $region14: #{tpu_custom_call.1} parent=11 // pred_check_branch
        %460 = sbr.rel (%p458) target = $region16
      $region15: #{tpu_custom_call.1} parent=11 // pred_region
        _
      $region16: #{tpu_custom_call.1} parent=11 // pred_fallthru
        _
      // Predicated region
      $region17: #{tpu_custom_call.1} parent=11 // pred_check
        %p461 = pneg %p144
      $region18: #{tpu_custom_call.1} parent=11 // pred_check_branch
        %463 = sbr.rel (%p461) target = $region20
      $region19: #{tpu_custom_call.1} parent=11 // pred_region
        _
      $region20: #{tpu_custom_call.1} parent=11 // pred_fallthru
        _
      // Predicated region
      $region21: #{tpu_custom_call.1} parent=11 // pred_check
        %p464 = pneg %p165
      $region22: #{tpu_custom_call.1} parent=11 // pred_check_branch
        %466 = sbr.rel (%p464) target = $region24
      $region23: #{tpu_custom_call.1} parent=11 // pred_region
        _
      $region24: #{tpu_custom_call.1} parent=11 // pred_fallthru
        _
      // Predicated region
      $region25: #{tpu_custom_call.1} parent=11 // pred_check
        %p467 = pneg %p186
      $region26: #{tpu_custom_call.1} parent=11 // pred_check_branch
        %469 = sbr.rel (%p467) target = $region28
      $region27: #{tpu_custom_call.1} parent=11 // pred_region
        _
      $region28: #{tpu_custom_call.1} parent=11 // pred_fallthru
        _
      // Predicated region
      $region29: #{tpu_custom_call.1} parent=11 // pred_check
        %p470 = pneg %p207
      $region30: #{tpu_custom_call.1} parent=11 // pred_check_branch
        %472 = sbr.rel (%p470) target = $region32
      $region31: #{tpu_custom_call.1} parent=11 // pred_region
        _
      $region32: #{tpu_custom_call.1} parent=11 // pred_fallthru
        _
      // Predicated region
      $region33: #{tpu_custom_call.1} parent=11 // pred_check
        %p473 = pneg %p228
      $region34: #{tpu_custom_call.1} parent=11 // pred_check_branch
        %475 = sbr.rel (%p473) target = $region36
      $region35: #{tpu_custom_call.1} parent=11 // pred_region
        _
      $region36: #{tpu_custom_call.1} parent=11 // pred_fallthru
        _
      // Predicated region
      $region37: #{tpu_custom_call.1} parent=11 // pred_check
        %p476 = pneg %p249
      $region38: #{tpu_custom_call.1} parent=11 // pred_check_branch
        %478 = sbr.rel (%p476) target = $region40
      $region39: #{tpu_custom_call.1} parent=11 // pred_region
        _
      $region40: #{tpu_custom_call.1} parent=11 // pred_fallthru
        _
      // Predicated region
      $region41: #{tpu_custom_call.1} parent=11 // pred_check
        %p479 = pneg %p270
      $region42: #{tpu_custom_call.1} parent=11 // pred_check_branch
        %481 = sbr.rel (%p479) target = $region44
      $region43: #{tpu_custom_call.1} parent=11 // pred_region
        _
      $region44: #{tpu_custom_call.1} parent=11 // pred_fallthru
        _
      // Predicated region
      $region45: #{tpu_custom_call.1} parent=11 // pred_check
        %p482 = pneg %p291
      $region46: #{tpu_custom_call.1} parent=11 // pred_check_branch
        %484 = sbr.rel (%p482) target = $region48
      $region47: #{tpu_custom_call.1} parent=11 // pred_region
        _
      $region48: #{tpu_custom_call.1} parent=11 // pred_fallthru
        _
      // Predicated region
      $region49: #{tpu_custom_call.1} parent=11 // pred_check
        %p485 = pneg %p312
      $region50: #{tpu_custom_call.1} parent=11 // pred_check_branch
        %487 = sbr.rel (%p485) target = $region52
      $region51: #{tpu_custom_call.1} parent=11 // pred_region
        _
      $region52: #{tpu_custom_call.1} parent=11 // pred_fallthru
        _
      // Predicated region
      $region53: #{tpu_custom_call.1} parent=11 // pred_check
        %p488 = pneg %p333
      $region54: #{tpu_custom_call.1} parent=11 // pred_check_branch
        %490 = sbr.rel (%p488) target = $region56
      $region55: #{tpu_custom_call.1} parent=11 // pred_region
        _
      $region56: #{tpu_custom_call.1} parent=11 // pred_fallthru
        _
      // Predicated region
      $region57: #{tpu_custom_call.1} parent=11 // pred_check
        %p491 = pneg %p354
      $region58: #{tpu_custom_call.1} parent=11 // pred_check_branch
        %493 = sbr.rel (%p491) target = $region60
      $region59: #{tpu_custom_call.1} parent=11 // pred_region
        _
      $region60: #{tpu_custom_call.1} parent=11 // pred_fallthru
        _
      // Predicated region
      $region61: #{tpu_custom_call.1} parent=11 // pred_check
        %p494 = pneg %p375
      $region62: #{tpu_custom_call.1} parent=11 // pred_check_branch
        %496 = sbr.rel (%p494) target = $region64
      $region63: #{tpu_custom_call.1} parent=11 // pred_region
        _
      $region64: #{tpu_custom_call.1} parent=11 // pred_fallthru
        _
      // Predicated region
      $region65: #{tpu_custom_call.1} parent=11 // pred_check
        %p497 = pneg %p396
      $region66: #{tpu_custom_call.1} parent=11 // pred_check_branch
        %499 = sbr.rel (%p497) target = $region68
      $region67: #{tpu_custom_call.1} parent=11 // pred_region
        _
      $region68: #{tpu_custom_call.1} parent=11 // pred_fallthru
        _
      // Predicated region
      $region69: #{tpu_custom_call.1} parent=11 // pred_check
        %p500 = pneg %p417
      $region70: #{tpu_custom_call.1} parent=11 // pred_check_branch
        %502 = sbr.rel (%p500) target = $region72
      $region71: #{tpu_custom_call.1} parent=11 // pred_region
        _
      $region72: #{tpu_custom_call.1} parent=11 // pred_fallthru
        _
    $region12: #{tpu_custom_call.1} parent=5 // pred_fallthru
      _
    %p503 = scmp.lt.s32.totalorder %s24, 4
    // Predicated region
    $region73: #{tpu_custom_call.1} parent=5 // pred_check
      %p504 = pneg %p503
    $region74: #{tpu_custom_call.1} parent=5 // pred_check_branch
      %506 = sbr.rel (%p504) target = $region76
    $region75: #{tpu_custom_call.1} parent=5 // pred_region
      // Predicated region
      $region77: #{tpu_custom_call.1} parent=75 // pred_check
        %p507 = pneg %p44
      $region78: #{tpu_custom_call.1} parent=75 // pred_check_branch
        %509 = sbr.rel (%p507) target = $region80
      $region79: #{tpu_custom_call.1} parent=75 // pred_region
        %s510 = smul.u32 2, %s24
        %p511 = scmp.lt.s32.totalorder %s510, 7
        %s512 = scalar_select %p511, %s510, 7
        %s513 = smul.addr %s512, 8
        %s514 = scalar_lea.vmem %s0, %s513
        %s515 = smul.u32 2, %s24
      $region80: #{tpu_custom_call.1} parent=75 // pred_fallthru
        _
      // Predicated region
      $region81: #{tpu_custom_call.1} parent=75 // pred_check
        %p516 = pneg %p70
      $region82: #{tpu_custom_call.1} parent=75 // pred_check_branch
        %518 = sbr.rel (%p516) target = $region84
      $region83: #{tpu_custom_call.1} parent=75 // pred_region
        %s519 = smul.u32 2, %s24
        %p520 = scmp.lt.s32.totalorder %s519, 7
        %s521 = scalar_select %p520, %s519, 7
        %s522 = smul.addr %s521, 8
        %s523 = scalar_lea.vmem %s1, %s522
        %s524 = smul.u32 2, %s24
      $region84: #{tpu_custom_call.1} parent=75 // pred_fallthru
        _
      // Predicated region
      $region85: #{tpu_custom_call.1} parent=75 // pred_check
        %p525 = pneg %p96
      $region86: #{tpu_custom_call.1} parent=75 // pred_check_branch
        %527 = sbr.rel (%p525) target = $region88
      $region87: #{tpu_custom_call.1} parent=75 // pred_region
        %s528 = smul.u32 2, %s24
        %p529 = scmp.lt.s32.totalorder %s528, 7
        %s530 = scalar_select %p529, %s528, 7
        %s531 = smul.addr %s530, 8
        %s532 = scalar_lea.vmem %s2, %s531
        %s533 = smul.u32 2, %s24
      $region88: #{tpu_custom_call.1} parent=75 // pred_fallthru
        _
    $region76: #{tpu_custom_call.1} parent=5 // pred_fallthru
      _
    %p534 = scmp.le.s32.totalorder 1, %s24
    %p535 = scmp.lt.s32.totalorder %s24, 5
    %p536 = pnand %p534, %p535
    %p537 = pneg %p536
    // Predicated region
    $region89: #{tpu_custom_call.1} parent=5 // pred_check
      _
    $region90: #{tpu_custom_call.1} parent=5 // pred_check_branch
      %539 = sbr.rel (%p536) target = $region92
    $region91: #{tpu_custom_call.1} parent=5 // pred_region
      %s540 = ssub.s32 %s24, 1
      %s541 = smul.u32 2, %s29
      %p542 = scmp.lt.s32.totalorder %s541, 7
      %s543 = scalar_select %p542, %s541, 7
      %s544 = smul.addr %s543, 8
      %s545 = scalar_lea.vmem %s0, %s544
      %p546 = pneg %p50
      %p547 = pneg %p47
      %s548 = smul.u32 2, %s29
      %p549 = scmp.lt.s32.totalorder %s548, 7
      %s550 = scalar_select %p549, %s548, 7
      %s551 = smul.addr %s550, 8
      %s552 = scalar_lea.vmem %s1, %s551
      %p553 = pneg %p76
      %p554 = pneg %p73
      %s555 = smul.u32 2, %s29
      %p556 = scmp.lt.s32.totalorder %s555, 7
      %s557 = scalar_select %p556, %s555, 7
      %s558 = smul.addr %s557, 8
      %s559 = scalar_lea.vmem %s2, %s558
      %p560 = pneg %p102
      %p561 = pneg %p99
      %p562 = pneg %p123
      %p563 = pneg %p120
      %p564 = pneg %p144
      %p565 = pneg %p141
      %p566 = pneg %p165
      %p567 = pneg %p162
      %p568 = pneg %p186
      %p569 = pneg %p183
      %p570 = pneg %p207
      %p571 = pneg %p204
      %p572 = pneg %p228
      %p573 = pneg %p225
      %p574 = pneg %p249
      %p575 = pneg %p246
      %p576 = pneg %p270
      %p577 = pneg %p267
      %p578 = pneg %p291
      %p579 = pneg %p288
      %p580 = pneg %p312
      %p581 = pneg %p309
      %p582 = pneg %p333
      %p583 = pneg %p330
      %p584 = pneg %p354
      %p585 = pneg %p351
      %p586 = pneg %p375
      %p587 = pneg %p372
      %p588 = pneg %p396
      %p589 = pneg %p393
      %p590 = pneg %p417
      %p591 = pneg %p414
      %p592 = pneg %p443
      %p593 = pneg %p440
      %s594 = smul.u32 2, %s29
      %p595 = scmp.lt.s32.totalorder %s594, 7
      %s596 = scalar_select %p595, %s594, 7
      %s597 = smul.addr %s596, 8
      %s598 = scalar_lea.vmem %s18, %s597
      %s599 = smul.u32 2, %s29
      %p600 = scmp.lt.s32.totalorder %s599, 7
      %s601 = scalar_select %p600, %s599, 7
      %s602 = smul.addr %s601, 8
      %s603 = scalar_lea.vmem %s0, %s602
      %s604 = smul.u32 2, %s29
      %s605 = smul.u32 2, %s29
      %p606 = scmp.lt.s32.totalorder %s605, 7
      %s607 = scalar_select %p606, %s605, 7
      %s608 = smul.addr %s607, 8
      %s609 = scalar_lea.vmem %s1, %s608
      %s610 = smul.u32 2, %s29
      %s611 = smul.u32 2, %s29
      %p612 = scmp.lt.s32.totalorder %s611, 7
      %s613 = scalar_select %p612, %s611, 7
      %s614 = smul.addr %s613, 8
      %s615 = scalar_lea.vmem %s2, %s614
      %s616 = smul.u32 2, %s29
      %s617 = smul.u32 2, %s29
      %p618 = scmp.lt.s32.totalorder %s617, 7
      %s619 = scalar_select %p618, %s617, 7
      %s620 = smul.addr %s619, 8
      %s621 = scalar_lea.vmem %s18, %s620
      %s622 = smul.u32 2, %s29
      %v624 = vld [vmem:[%s603] sm:$0xff]
      %v625 = vld [vmem:[%s603 + $0x8] sm:$0xff]
      %v626 = vpack.c.bf16 %v625, %v624
      %v627 = vld [vmem:[%s609] sm:$0xff]
      %v628 = vld [vmem:[%s609 + $0x8] sm:$0xff]
      %v629 = vpack.c.bf16 %v628, %v627
      %v630 = vld [vmem:[%s615] sm:$0xff]
      %v631 = vld [vmem:[%s615 + $0x8] sm:$0xff]
      %v632 = vpack.c.bf16 %v631, %v630
      %v633 = vld [vmem:[%s7] sm:$0xf]
      %v634 = vld [vmem:[%s7 + $0x4] sm:$0xf]
      %v635 = vld [vmem:[%s7 + $0x8] sm:$0xf]
      %v636 = vld [vmem:[%s7 + $0xc] sm:$0xf]
      %v637 = vld [vmem:[%s8] sm:$0x1]
      %v639 = vlaneseq
      %v640 = vshrl.u32 %v639, 7
      %v641 = vsub.s32 0, %v640
      %v642 = vrot.slane %v637, %v641
      %v648 = vunpack.c.l.b16 %v633
      %v649 = vunpack.c.l.b16 %v634
      %v650 = vunpack.c.l.b16 %v635
      %v651 = vunpack.c.l.b16 %v636
      %v652 = vpack.c.b16 %v649, %v648
      %v653 = vpack.c.b16 %v651, %v650
      %vm656 = vcmask 261120
      %v658 = vsel %vm656, %v632, 0
      %660 = vmatprep.subr.bf16.mxu0 0
      %661 = vmatpush1.bf16.msra.mxu0 %v652
      %662 = vmatprep.subr.bf16.mxu0 0
      %663 = vmatpush1.bf16.msra.mxu0 %v653
      %664 = vmatprep.subr.bf16.mxu0 0
      %665 = vmatpush1.bf16.msra.mxu0 0
      %666 = vmatprep.subr.bf16.mxu0 0
      %667 = vmatpush1.bf16.msra.mxu0 0
      %668 = vmatprep.subr.bf16.mxu0 0
      %669 = vmatpush1.bf16.msra.mxu0 0
      %670 = vmatprep.subr.bf16.mxu0 0
      %671 = vmatpush1.bf16.msra.mxu0 0
      %672 = vmatprep.subr.bf16.mxu0 0
      %673 = vmatpush1.bf16.msra.mxu0 0
      %674 = vmatprep.subr.bf16.mxu0 0
      %675 = vmatpush1.bf16.msra.mxu0 0
      %676 = vmatprep.subr.bf16.mxu0 0
      %677 = vmatpush1.bf16.msra.mxu0 0
      %678 = vmatprep.subr.bf16.mxu0 0
      %679 = vmatpush1.bf16.msra.mxu0 0
      %680 = vmatprep.subr.bf16.mxu0 0
      %681 = vmatpush1.bf16.msra.mxu0 0
      %682 = vmatprep.subr.bf16.mxu0 0
      %683 = vmatpush1.bf16.msra.mxu0 0
      %684 = vmatprep.subr.bf16.mxu0 0
      %685 = vmatpush1.bf16.msra.mxu0 0
      %686 = vmatprep.subr.bf16.mxu0 0
      %687 = vmatpush1.bf16.msra.mxu0 0
      %688 = vmatprep.subr.bf16.mxu0 0
      %689 = vmatpush1.bf16.msra.mxu0 0
      %690 = vmatprep.subr.bf16.mxu0 0
      %691 = vmatpush1.bf16.msra.mxu0 0
      %692 = vmatprep.mubr.bf16.mxu0 0
      %693 = vmatmul.mubr.bf16.gmra.mrb[0].mxu0 %v658
      %v694 = vpop.f32.mrb[0].mxu0
      %v695 = vadd.f32 %v642, %v694
      %v696 = vpop.f32.mrb[0].mxu0
      %v697 = vpop.f32.mrb[0].mxu0
      %v698 = vadd.f32 %v642, %v697
      %v699 = vpop.f32.mrb[0].mxu0
      %700 = vdwg.mxu0
      %v701 = vpack.c.bf16 %v698, %v695
      %v702 = vld [vmem:[%s3] sm:$0xf]
      %v703 = vld [vmem:[%s3 + $0x4] sm:$0xf]
      %v704 = vld [vmem:[%s3 + $0x8] sm:$0xf]
      %v705 = vld [vmem:[%s3 + $0xc] sm:$0xf]
      %v706 = vld [vmem:[%s4] sm:$0x1]
      %v708 = vlaneseq
      %v709 = vshrl.u32 %v708, 7
      %v710 = vsub.s32 0, %v709
      %v711 = vrot.slane %v706, %v710
      %v717 = vunpack.c.l.b16 %v702
      %v718 = vunpack.c.l.b16 %v703
      %v719 = vunpack.c.l.b16 %v704
      %v720 = vunpack.c.l.b16 %v705
      %v721 = vpack.c.b16 %v718, %v717
      %v722 = vpack.c.b16 %v720, %v719
      %v726 = vsel %vm656, %v626, 0
      %728 = vmatprep.subr.bf16.mxu0 0
      %729 = vmatpush1.bf16.msra.mxu0 %v721
      %730 = vmatprep.subr.bf16.mxu0 0
      %731 = vmatpush1.bf16.msra.mxu0 %v722
      %732 = vmatprep.subr.bf16.mxu0 0
      %733 = vmatpush1.bf16.msra.mxu0 0
      %734 = vmatprep.subr.bf16.mxu0 0
      %735 = vmatpush1.bf16.msra.mxu0 0
      %736 = vmatprep.subr.bf16.mxu0 0
      %737 = vmatpush1.bf16.msra.mxu0 0
      %738 = vmatprep.subr.bf16.mxu0 0
      %739 = vmatpush1.bf16.msra.mxu0 0
      %740 = vmatprep.subr.bf16.mxu0 0
      %741 = vmatpush1.bf16.msra.mxu0 0
      %742 = vmatprep.subr.bf16.mxu0 0
      %743 = vmatpush1.bf16.msra.mxu0 0
      %744 = vmatprep.subr.bf16.mxu0 0
      %745 = vmatpush1.bf16.msra.mxu0 0
      %746 = vmatprep.subr.bf16.mxu0 0
      %747 = vmatpush1.bf16.msra.mxu0 0
      %748 = vmatprep.subr.bf16.mxu0 0
      %749 = vmatpush1.bf16.msra.mxu0 0
      %750 = vmatprep.subr.bf16.mxu0 0
      %751 = vmatpush1.bf16.msra.mxu0 0
      %752 = vmatprep.subr.bf16.mxu0 0
      %753 = vmatpush1.bf16.msra.mxu0 0
      %754 = vmatprep.subr.bf16.mxu0 0
      %755 = vmatpush1.bf16.msra.mxu0 0
      %756 = vmatprep.subr.bf16.mxu0 0
      %757 = vmatpush1.bf16.msra.mxu0 0
      %758 = vmatprep.subr.bf16.mxu0 0
      %759 = vmatpush1.bf16.msra.mxu0 0
      %760 = vmatprep.mubr.bf16.mxu0 0
      %761 = vmatmul.mubr.bf16.gmra.mrb[0].mxu0 %v726
      %v762 = vpop.f32.mrb[0].mxu0
      %v763 = vadd.f32 %v711, %v762
      %v764 = vpop.f32.mrb[0].mxu0
      %v765 = vpop.f32.mrb[0].mxu0
      %v766 = vadd.f32 %v711, %v765
      %v767 = vpop.f32.mrb[0].mxu0
      %768 = vdwg.mxu0
      %v769 = vld [vmem:[%s5] sm:$0xf]
      %v770 = vld [vmem:[%s5 + $0x4] sm:$0xf]
      %v771 = vld [vmem:[%s5 + $0x8] sm:$0xf]
      %v772 = vld [vmem:[%s5 + $0xc] sm:$0xf]
      %v773 = vld [vmem:[%s6] sm:$0x1]
      %v775 = vlaneseq
      %v776 = vshrl.u32 %v775, 7
      %v777 = vsub.s32 0, %v776
      %v778 = vrot.slane %v773, %v777
      %v784 = vunpack.c.l.b16 %v769
      %v785 = vunpack.c.l.b16 %v770
      %v786 = vunpack.c.l.b16 %v771
      %v787 = vunpack.c.l.b16 %v772
      %v788 = vpack.c.b16 %v785, %v784
      %v789 = vpack.c.b16 %v787, %v786
      %v793 = vsel %vm656, %v629, 0
      %795 = vmatprep.subr.bf16.mxu0 0
      %796 = vmatpush1.bf16.msra.mxu0 %v788
      %797 = vmatprep.subr.bf16.mxu0 0
      %798 = vmatpush1.bf16.msra.mxu0 %v789
      %799 = vmatprep.subr.bf16.mxu0 0
      %800 = vmatpush1.bf16.msra.mxu0 0
      %801 = vmatprep.subr.bf16.mxu0 0
      %802 = vmatpush1.bf16.msra.mxu0 0
      %803 = vmatprep.subr.bf16.mxu0 0
      %804 = vmatpush1.bf16.msra.mxu0 0
      %805 = vmatprep.subr.bf16.mxu0 0
      %806 = vmatpush1.bf16.msra.mxu0 0
      %807 = vmatprep.subr.bf16.mxu0 0
      %808 = vmatpush1.bf16.msra.mxu0 0
      %809 = vmatprep.subr.bf16.mxu0 0
      %810 = vmatpush1.bf16.msra.mxu0 0
      %811 = vmatprep.subr.bf16.mxu0 0
      %812 = vmatpush1.bf16.msra.mxu0 0
      %813 = vmatprep.subr.bf16.mxu0 0
      %814 = vmatpush1.bf16.msra.mxu0 0
      %815 = vmatprep.subr.bf16.mxu0 0
      %816 = vmatpush1.bf16.msra.mxu0 0
      %817 = vmatprep.subr.bf16.mxu0 0
      %818 = vmatpush1.bf16.msra.mxu0 0
      %819 = vmatprep.subr.bf16.mxu0 0
      %820 = vmatpush1.bf16.msra.mxu0 0
      %821 = vmatprep.subr.bf16.mxu0 0
      %822 = vmatpush1.bf16.msra.mxu0 0
      %823 = vmatprep.subr.bf16.mxu0 0
      %824 = vmatpush1.bf16.msra.mxu0 0
      %825 = vmatprep.subr.bf16.mxu0 0
      %826 = vmatpush1.bf16.msra.mxu0 0
      %827 = vmatprep.mubr.bf16.mxu0 0
      %828 = vmatmul.mubr.bf16.gmra.mrb[0].mxu0 %v793
      %v829 = vpop.f32.mrb[0].mxu0
      %v830 = vadd.f32 %v778, %v829
      %v831 = vpop.f32.mrb[0].mxu0
      %v832 = vpop.f32.mrb[0].mxu0
      %v833 = vadd.f32 %v778, %v832
      %v834 = vpop.f32.mrb[0].mxu0
      %835 = vdwg.mxu0
      %v836 = vpack.c.bf16 %v766, %v763
      %v837 = vpack.c.bf16 %v833, %v830
      %s838 = scalar_lea.vmem %s3, 16
      %v839 = vld [vmem:[%s838] sm:$0xf]
      %v840 = vld [vmem:[%s838 + $0x4] sm:$0xf]
      %v841 = vld [vmem:[%s838 + $0x8] sm:$0xf]
      %v842 = vld [vmem:[%s838 + $0xc] sm:$0xf]
      %s843 = scalar_lea.vmem %s4, 1
      %v844 = vld [vmem:[%s843] sm:$0x1]
      %v846 = vlaneseq
      %v847 = vshrl.u32 %v846, 7
      %v848 = vsub.s32 0, %v847
      %v849 = vrot.slane %v844, %v848
      %v855 = vunpack.c.l.b16 %v839
      %v856 = vunpack.c.l.b16 %v840
      %v857 = vunpack.c.l.b16 %v841
      %v858 = vunpack.c.l.b16 %v842
      %v859 = vpack.c.b16 %v856, %v855
      %v860 = vpack.c.b16 %v858, %v857
      %863 = vmatprep.subr.bf16.mxu0 0
      %864 = vmatpush1.bf16.msra.mxu0 %v859
      %865 = vmatprep.subr.bf16.mxu0 0
      %866 = vmatpush1.bf16.msra.mxu0 %v860
      %867 = vmatprep.subr.bf16.mxu0 0
      %868 = vmatpush1.bf16.msra.mxu0 0
      %869 = vmatprep.subr.bf16.mxu0 0
      %870 = vmatpush1.bf16.msra.mxu0 0
      %871 = vmatprep.subr.bf16.mxu0 0
      %872 = vmatpush1.bf16.msra.mxu0 0
      %873 = vmatprep.subr.bf16.mxu0 0
      %874 = vmatpush1.bf16.msra.mxu0 0
      %875 = vmatprep.subr.bf16.mxu0 0
      %876 = vmatpush1.bf16.msra.mxu0 0
      %877 = vmatprep.subr.bf16.mxu0 0
      %878 = vmatpush1.bf16.msra.mxu0 0
      %879 = vmatprep.subr.bf16.mxu0 0
      %880 = vmatpush1.bf16.msra.mxu0 0
      %881 = vmatprep.subr.bf16.mxu0 0
      %882 = vmatpush1.bf16.msra.mxu0 0
      %883 = vmatprep.subr.bf16.mxu0 0
      %884 = vmatpush1.bf16.msra.mxu0 0
      %885 = vmatprep.subr.bf16.mxu0 0
      %886 = vmatpush1.bf16.msra.mxu0 0
      %887 = vmatprep.subr.bf16.mxu0 0
      %888 = vmatpush1.bf16.msra.mxu0 0
      %889 = vmatprep.subr.bf16.mxu0 0
      %890 = vmatpush1.bf16.msra.mxu0 0
      %891 = vmatprep.subr.bf16.mxu0 0
      %892 = vmatpush1.bf16.msra.mxu0 0
      %893 = vmatprep.subr.bf16.mxu0 0
      %894 = vmatpush1.bf16.msra.mxu0 0
      %895 = vmatprep.mubr.bf16.mxu0 0
      %896 = vmatmul.mubr.bf16.gmra.mrb[0].mxu0 %v726
      %v897 = vpop.f32.mrb[0].mxu0
      %v898 = vadd.f32 %v849, %v897
      %v899 = vpop.f32.mrb[0].mxu0
      %v900 = vpop.f32.mrb[0].mxu0
      %v901 = vadd.f32 %v849, %v900
      %v902 = vpop.f32.mrb[0].mxu0
      %903 = vdwg.mxu0
      %s904 = scalar_lea.vmem %s5, 16
      %v905 = vld [vmem:[%s904] sm:$0xf]
      %v906 = vld [vmem:[%s904 + $0x4] sm:$0xf]
      %v907 = vld [vmem:[%s904 + $0x8] sm:$0xf]
      %v908 = vld [vmem:[%s904 + $0xc] sm:$0xf]
      %s909 = scalar_lea.vmem %s6, 1
      %v910 = vld [vmem:[%s909] sm:$0x1]
      %v912 = vlaneseq
      %v913 = vshrl.u32 %v912, 7
      %v914 = vsub.s32 0, %v913
      %v915 = vrot.slane %v910, %v914
      %v921 = vunpack.c.l.b16 %v905
      %v922 = vunpack.c.l.b16 %v906
      %v923 = vunpack.c.l.b16 %v907
      %v924 = vunpack.c.l.b16 %v908
      %v925 = vpack.c.b16 %v922, %v921
      %v926 = vpack.c.b16 %v924, %v923
      %929 = vmatprep.subr.bf16.mxu0 0
      %930 = vmatpush1.bf16.msra.mxu0 %v925
      %931 = vmatprep.subr.bf16.mxu0 0
      %932 = vmatpush1.bf16.msra.mxu0 %v926
      %933 = vmatprep.subr.bf16.mxu0 0
      %934 = vmatpush1.bf16.msra.mxu0 0
      %935 = vmatprep.subr.bf16.mxu0 0
      %936 = vmatpush1.bf16.msra.mxu0 0
      %937 = vmatprep.subr.bf16.mxu0 0
      %938 = vmatpush1.bf16.msra.mxu0 0
      %939 = vmatprep.subr.bf16.mxu0 0
      %940 = vmatpush1.bf16.msra.mxu0 0
      %941 = vmatprep.subr.bf16.mxu0 0
      %942 = vmatpush1.bf16.msra.mxu0 0
      %943 = vmatprep.subr.bf16.mxu0 0
      %944 = vmatpush1.bf16.msra.mxu0 0
      %945 = vmatprep.subr.bf16.mxu0 0
      %946 = vmatpush1.bf16.msra.mxu0 0
      %947 = vmatprep.subr.bf16.mxu0 0
      %948 = vmatpush1.bf16.msra.mxu0 0
      %949 = vmatprep.subr.bf16.mxu0 0
      %950 = vmatpush1.bf16.msra.mxu0 0
      %951 = vmatprep.subr.bf16.mxu0 0
      %952 = vmatpush1.bf16.msra.mxu0 0
      %953 = vmatprep.subr.bf16.mxu0 0
      %954 = vmatpush1.bf16.msra.mxu0 0
      %955 = vmatprep.subr.bf16.mxu0 0
      %956 = vmatpush1.bf16.msra.mxu0 0
      %957 = vmatprep.subr.bf16.mxu0 0
      %958 = vmatpush1.bf16.msra.mxu0 0
      %959 = vmatprep.subr.bf16.mxu0 0
      %960 = vmatpush1.bf16.msra.mxu0 0
      %961 = vmatprep.mubr.bf16.mxu0 0
      %962 = vmatmul.mubr.bf16.gmra.mrb[0].mxu0 %v793
      %v963 = vpop.f32.mrb[0].mxu0
      %v964 = vadd.f32 %v915, %v963
      %v965 = vpop.f32.mrb[0].mxu0
      %v966 = vpop.f32.mrb[0].mxu0
      %v967 = vadd.f32 %v915, %v966
      %v968 = vpop.f32.mrb[0].mxu0
      %969 = vdwg.mxu0
      %v970 = vpack.c.bf16 %v901, %v898
      %v971 = vpack.c.bf16 %v967, %v964
      %s972 = scalar_lea.vmem %s3, 32
      %v973 = vld [vmem:[%s972] sm:$0xf]
      %v974 = vld [vmem:[%s972 + $0x4] sm:$0xf]
      %v975 = vld [vmem:[%s972 + $0x8] sm:$0xf]
      %v976 = vld [vmem:[%s972 + $0xc] sm:$0xf]
      %s977 = scalar_lea.vmem %s4, 2
      %v978 = vld [vmem:[%s977] sm:$0x1]
      %v980 = vlaneseq
      %v981 = vshrl.u32 %v980, 7
      %v982 = vsub.s32 0, %v981
      %v983 = vrot.slane %v978, %v982
      %v989 = vunpack.c.l.b16 %v973
      %v990 = vunpack.c.l.b16 %v974
      %v991 = vunpack.c.l.b16 %v975
      %v992 = vunpack.c.l.b16 %v976
      %v993 = vpack.c.b16 %v990, %v989
      %v994 = vpack.c.b16 %v992, %v991
      %997 = vmatprep.subr.bf16.mxu0 0
      %998 = vmatpush1.bf16.msra.mxu0 %v993
      %999 = vmatprep.subr.bf16.mxu0 0
      %1000 = vmatpush1.bf16.msra.mxu0 %v994
      %1001 = vmatprep.subr.bf16.mxu0 0
      %1002 = vmatpush1.bf16.msra.mxu0 0
      %1003 = vmatprep.subr.bf16.mxu0 0
      %1004 = vmatpush1.bf16.msra.mxu0 0
      %1005 = vmatprep.subr.bf16.mxu0 0
      %1006 = vmatpush1.bf16.msra.mxu0 0
      %1007 = vmatprep.subr.bf16.mxu0 0
      %1008 = vmatpush1.bf16.msra.mxu0 0
      %1009 = vmatprep.subr.bf16.mxu0 0
      %1010 = vmatpush1.bf16.msra.mxu0 0
      %1011 = vmatprep.subr.bf16.mxu0 0
      %1012 = vmatpush1.bf16.msra.mxu0 0
      %1013 = vmatprep.subr.bf16.mxu0 0
      %1014 = vmatpush1.bf16.msra.mxu0 0
      %1015 = vmatprep.subr.bf16.mxu0 0
      %1016 = vmatpush1.bf16.msra.mxu0 0
      %1017 = vmatprep.subr.bf16.mxu0 0
      %1018 = vmatpush1.bf16.msra.mxu0 0
      %1019 = vmatprep.subr.bf16.mxu0 0
      %1020 = vmatpush1.bf16.msra.mxu0 0
      %1021 = vmatprep.subr.bf16.mxu0 0
      %1022 = vmatpush1.bf16.msra.mxu0 0
      %1023 = vmatprep.subr.bf16.mxu0 0
      %1024 = vmatpush1.bf16.msra.mxu0 0
      %1025 = vmatprep.subr.bf16.mxu0 0
      %1026 = vmatpush1.bf16.msra.mxu0 0
      %1027 = vmatprep.subr.bf16.mxu0 0
      %1028 = vmatpush1.bf16.msra.mxu0 0
      %1029 = vmatprep.mubr.bf16.mxu0 0
      %1030 = vmatmul.mubr.bf16.gmra.mrb[0].mxu0 %v726
      %v1031 = vpop.f32.mrb[0].mxu0
      %v1032 = vadd.f32 %v983, %v1031
      %v1033 = vpop.f32.mrb[0].mxu0
      %v1034 = vpop.f32.mrb[0].mxu0
      %v1035 = vadd.f32 %v983, %v1034
      %v1036 = vpop.f32.mrb[0].mxu0
      %1037 = vdwg.mxu0
      %s1038 = scalar_lea.vmem %s5, 32
      %v1039 = vld [vmem:[%s1038] sm:$0xf]
      %v1040 = vld [vmem:[%s1038 + $0x4] sm:$0xf]
      %v1041 = vld [vmem:[%s1038 + $0x8] sm:$0xf]
      %v1042 = vld [vmem:[%s1038 + $0xc] sm:$0xf]
      %s1043 = scalar_lea.vmem %s6, 2
      %v1044 = vld [vmem:[%s1043] sm:$0x1]
      %v1046 = vlaneseq
      %v1047 = vshrl.u32 %v1046, 7
      %v1048 = vsub.s32 0, %v1047
      %v1049 = vrot.slane %v1044, %v1048
      %v1055 = vunpack.c.l.b16 %v1039
      %v1056 = vunpack.c.l.b16 %v1040
      %v1057 = vunpack.c.l.b16 %v1041
      %v1058 = vunpack.c.l.b16 %v1042
      %v1059 = vpack.c.b16 %v1056, %v1055
      %v1060 = vpack.c.b16 %v1058, %v1057
      %1063 = vmatprep.subr.bf16.mxu0 0
      %1064 = vmatpush1.bf16.msra.mxu0 %v1059
      %1065 = vmatprep.subr.bf16.mxu0 0
      %1066 = vmatpush1.bf16.msra.mxu0 %v1060
      %1067 = vmatprep.subr.bf16.mxu0 0
      %1068 = vmatpush1.bf16.msra.mxu0 0
      %1069 = vmatprep.subr.bf16.mxu0 0
      %1070 = vmatpush1.bf16.msra.mxu0 0
      %1071 = vmatprep.subr.bf16.mxu0 0
      %1072 = vmatpush1.bf16.msra.mxu0 0
      %1073 = vmatprep.subr.bf16.mxu0 0
      %1074 = vmatpush1.bf16.msra.mxu0 0
      %1075 = vmatprep.subr.bf16.mxu0 0
      %1076 = vmatpush1.bf16.msra.mxu0 0
      %1077 = vmatprep.subr.bf16.mxu0 0
      %1078 = vmatpush1.bf16.msra.mxu0 0
      %1079 = vmatprep.subr.bf16.mxu0 0
      %1080 = vmatpush1.bf16.msra.mxu0 0
      %1081 = vmatprep.subr.bf16.mxu0 0
      %1082 = vmatpush1.bf16.msra.mxu0 0
      %1083 = vmatprep.subr.bf16.mxu0 0
      %1084 = vmatpush1.bf16.msra.mxu0 0
      %1085 = vmatprep.subr.bf16.mxu0 0
      %1086 = vmatpush1.bf16.msra.mxu0 0
      %1087 = vmatprep.subr.bf16.mxu0 0
      %1088 = vmatpush1.bf16.msra.mxu0 0
      %1089 = vmatprep.subr.bf16.mxu0 0
      %1090 = vmatpush1.bf16.msra.mxu0 0
      %1091 = vmatprep.subr.bf16.mxu0 0
      %1092 = vmatpush1.bf16.msra.mxu0 0
      %1093 = vmatprep.subr.bf16.mxu0 0
      %1094 = vmatpush1.bf16.msra.mxu0 0
      %1095 = vmatprep.mubr.bf16.mxu0 0
      %1096 = vmatmul.mubr.bf16.gmra.mrb[0].mxu0 %v793
      %v1097 = vpop.f32.mrb[0].mxu0
      %v1098 = vadd.f32 %v1049, %v1097
      %v1099 = vpop.f32.mrb[0].mxu0
      %v1100 = vpop.f32.mrb[0].mxu0
      %v1101 = vadd.f32 %v1049, %v1100
      %v1102 = vpop.f32.mrb[0].mxu0
      %1103 = vdwg.mxu0
      %v1104 = vpack.c.bf16 %v1035, %v1032
      %v1105 = vpack.c.bf16 %v1101, %v1098
      %s1106 = scalar_lea.vmem %s3, 48
      %v1107 = vld [vmem:[%s1106] sm:$0xf]
      %v1108 = vld [vmem:[%s1106 + $0x4] sm:$0xf]
      %v1109 = vld [vmem:[%s1106 + $0x8] sm:$0xf]
      %v1110 = vld [vmem:[%s1106 + $0xc] sm:$0xf]
      %s1111 = scalar_lea.vmem %s4, 3
      %v1112 = vld [vmem:[%s1111] sm:$0x1]
      %v1114 = vlaneseq
      %v1115 = vshrl.u32 %v1114, 7
      %v1116 = vsub.s32 0, %v1115
      %v1117 = vrot.slane %v1112, %v1116
      %v1123 = vunpack.c.l.b16 %v1107
      %v1124 = vunpack.c.l.b16 %v1108
      %v1125 = vunpack.c.l.b16 %v1109
      %v1126 = vunpack.c.l.b16 %v1110
      %v1127 = vpack.c.b16 %v1124, %v1123
      %v1128 = vpack.c.b16 %v1126, %v1125
      %1131 = vmatprep.subr.bf16.mxu0 0
      %1132 = vmatpush1.bf16.msra.mxu0 %v1127
      %1133 = vmatprep.subr.bf16.mxu0 0
      %1134 = vmatpush1.bf16.msra.mxu0 %v1128
      %1135 = vmatprep.subr.bf16.mxu0 0
      %1136 = vmatpush1.bf16.msra.mxu0 0
      %1137 = vmatprep.subr.bf16.mxu0 0
      %1138 = vmatpush1.bf16.msra.mxu0 0
      %1139 = vmatprep.subr.bf16.mxu0 0
      %1140 = vmatpush1.bf16.msra.mxu0 0
      %1141 = vmatprep.subr.bf16.mxu0 0
      %1142 = vmatpush1.bf16.msra.mxu0 0
      %1143 = vmatprep.subr.bf16.mxu0 0
      %1144 = vmatpush1.bf16.msra.mxu0 0
      %1145 = vmatprep.subr.bf16.mxu0 0
      %1146 = vmatpush1.bf16.msra.mxu0 0
      %1147 = vmatprep.subr.bf16.mxu0 0
      %1148 = vmatpush1.bf16.msra.mxu0 0
      %1149 = vmatprep.subr.bf16.mxu0 0
      %1150 = vmatpush1.bf16.msra.mxu0 0
      %1151 = vmatprep.subr.bf16.mxu0 0
      %1152 = vmatpush1.bf16.msra.mxu0 0
      %1153 = vmatprep.subr.bf16.mxu0 0
      %1154 = vmatpush1.bf16.msra.mxu0 0
      %1155 = vmatprep.subr.bf16.mxu0 0
      %1156 = vmatpush1.bf16.msra.mxu0 0
      %1157 = vmatprep.subr.bf16.mxu0 0
      %1158 = vmatpush1.bf16.msra.mxu0 0
      %1159 = vmatprep.subr.bf16.mxu0 0
      %1160 = vmatpush1.bf16.msra.mxu0 0
      %1161 = vmatprep.subr.bf16.mxu0 0
      %1162 = vmatpush1.bf16.msra.mxu0 0
      %1163 = vmatprep.mubr.bf16.mxu0 0
      %1164 = vmatmul.mubr.bf16.gmra.mrb[0].mxu0 %v726
      %v1165 = vpop.f32.mrb[0].mxu0
      %v1166 = vadd.f32 %v1117, %v1165
      %v1167 = vpop.f32.mrb[0].mxu0
      %v1168 = vpop.f32.mrb[0].mxu0
      %v1169 = vadd.f32 %v1117, %v1168
      %v1170 = vpop.f32.mrb[0].mxu0
      %1171 = vdwg.mxu0
      %s1172 = scalar_lea.vmem %s5, 48
      %v1173 = vld [vmem:[%s1172] sm:$0xf]
      %v1174 = vld [vmem:[%s1172 + $0x4] sm:$0xf]
      %v1175 = vld [vmem:[%s1172 + $0x8] sm:$0xf]
      %v1176 = vld [vmem:[%s1172 + $0xc] sm:$0xf]
      %s1177 = scalar_lea.vmem %s6, 3
      %v1178 = vld [vmem:[%s1177] sm:$0x1]
      %v1180 = vlaneseq
      %v1181 = vshrl.u32 %v1180, 7
      %v1182 = vsub.s32 0, %v1181
      %v1183 = vrot.slane %v1178, %v1182
      %v1189 = vunpack.c.l.b16 %v1173
      %v1190 = vunpack.c.l.b16 %v1174
      %v1191 = vunpack.c.l.b16 %v1175
      %v1192 = vunpack.c.l.b16 %v1176
      %v1193 = vpack.c.b16 %v1190, %v1189
      %v1194 = vpack.c.b16 %v1192, %v1191
      %1197 = vmatprep.subr.bf16.mxu0 0
      %1198 = vmatpush1.bf16.msra.mxu0 %v1193
      %1199 = vmatprep.subr.bf16.mxu0 0
      %1200 = vmatpush1.bf16.msra.mxu0 %v1194
      %1201 = vmatprep.subr.bf16.mxu0 0
      %1202 = vmatpush1.bf16.msra.mxu0 0
      %1203 = vmatprep.subr.bf16.mxu0 0
      %1204 = vmatpush1.bf16.msra.mxu0 0
      %1205 = vmatprep.subr.bf16.mxu0 0
      %1206 = vmatpush1.bf16.msra.mxu0 0
      %1207 = vmatprep.subr.bf16.mxu0 0
      %1208 = vmatpush1.bf16.msra.mxu0 0
      %1209 = vmatprep.subr.bf16.mxu0 0
      %1210 = vmatpush1.bf16.msra.mxu0 0
      %1211 = vmatprep.subr.bf16.mxu0 0
      %1212 = vmatpush1.bf16.msra.mxu0 0
      %1213 = vmatprep.subr.bf16.mxu0 0
      %1214 = vmatpush1.bf16.msra.mxu0 0
      %1215 = vmatprep.subr.bf16.mxu0 0
      %1216 = vmatpush1.bf16.msra.mxu0 0
      %1217 = vmatprep.subr.bf16.mxu0 0
      %1218 = vmatpush1.bf16.msra.mxu0 0
      %1219 = vmatprep.subr.bf16.mxu0 0
      %1220 = vmatpush1.bf16.msra.mxu0 0
      %1221 = vmatprep.subr.bf16.mxu0 0
      %1222 = vmatpush1.bf16.msra.mxu0 0
      %1223 = vmatprep.subr.bf16.mxu0 0
      %1224 = vmatpush1.bf16.msra.mxu0 0
      %1225 = vmatprep.subr.bf16.mxu0 0
      %1226 = vmatpush1.bf16.msra.mxu0 0
      %1227 = vmatprep.subr.bf16.mxu0 0
      %1228 = vmatpush1.bf16.msra.mxu0 0
      %1229 = vmatprep.mubr.bf16.mxu0 0
      %1230 = vmatmul.mubr.bf16.gmra.mrb[0].mxu0 %v793
      %v1231 = vpop.f32.mrb[0].mxu0
      %v1232 = vadd.f32 %v1183, %v1231
      %v1233 = vpop.f32.mrb[0].mxu0
      %v1234 = vpop.f32.mrb[0].mxu0
      %v1235 = vadd.f32 %v1183, %v1234
      %v1236 = vpop.f32.mrb[0].mxu0
      %1237 = vdwg.mxu0
      %v1238 = vpack.c.bf16 %v1169, %v1166
      %v1239 = vpack.c.bf16 %v1235, %v1232
      %v1240 = vlaneseq
      %v1241 = vand.u32 %v1240, 127
      %vm1242 = vcmp.ge.s32.totalorder %v1241, 0
      %vm1243 = vcmp.lt.s32.totalorder %v1241, 8
      %vm1244 = vmand %vm1242, %vm1243
      %vm1245 = vcmp.ge.s32.totalorder %v1241, 8
      %vm1246 = vcmp.lt.s32.totalorder %v1241, 16
      %vm1247 = vmand %vm1245, %vm1246
      %vm1248 = vcmp.ge.s32.totalorder %v1241, 16
      %vm1249 = vcmp.lt.s32.totalorder %v1241, 24
      %vm1250 = vmand %vm1248, %vm1249
      %vm1251 = vcmp.ge.s32.totalorder %v1241, 24
      %vm1252 = vcmp.lt.s32.totalorder %v1241, 32
      %vm1253 = vmand %vm1251, %vm1252
      %vm1254 = vcmask 64512
      %v1256 = vsel %vm1254, %v836, 0
      %v1259 = vsel %vm1254, %v837, 0
      %1261 = vmatprep.subr.bf16.mxu0 0
      %1262 = vmatpush1.bf16.xpose.msra.mxu0 %v1259
      %1263 = vmatprep.subr.bf16.mxu0 0
      %1264 = vmatpush1.bf16.xpose.msra.mxu0 0
      %1265 = vmatprep.subr.bf16.mxu0 0
      %1266 = vmatpush1.bf16.xpose.msra.mxu0 0
      %1267 = vmatprep.subr.bf16.mxu0 0
      %1268 = vmatpush1.bf16.xpose.msra.mxu0 0
      %1269 = vmatprep.subr.bf16.mxu0 0
      %1270 = vmatpush1.bf16.xpose.msra.mxu0 0
      %1271 = vmatprep.subr.bf16.mxu0 0
      %1272 = vmatpush1.bf16.xpose.msra.mxu0 0
      %1273 = vmatprep.subr.bf16.mxu0 0
      %1274 = vmatpush1.bf16.xpose.msra.mxu0 0
      %1275 = vmatprep.subr.bf16.mxu0 0
      %1276 = vmatpush1.bf16.xpose.msra.mxu0 0
      %1277 = vmatprep.subr.bf16.mxu0 0
      %1278 = vmatpush1.bf16.xpose.msra.mxu0 0
      %1279 = vmatprep.subr.bf16.mxu0 0
      %1280 = vmatpush1.bf16.xpose.msra.mxu0 0
      %1281 = vmatprep.subr.bf16.mxu0 0
      %1282 = vmatpush1.bf16.xpose.msra.mxu0 0
      %1283 = vmatprep.subr.bf16.mxu0 0
      %1284 = vmatpush1.bf16.xpose.msra.mxu0 0
      %1285 = vmatprep.subr.bf16.mxu0 0
      %1286 = vmatpush1.bf16.xpose.msra.mxu0 0
      %1287 = vmatprep.subr.bf16.mxu0 0
      %1288 = vmatpush1.bf16.xpose.msra.mxu0 0
      %1289 = vmatprep.subr.bf16.mxu0 0
      %1290 = vmatpush1.bf16.xpose.msra.mxu0 0
      %1291 = vmatprep.subr.bf16.mxu0 0
      %1292 = vmatpush1.bf16.xpose.msra.mxu0 0
      %1293 = vmatprep.mubr.bf16.mxu0 0
      %1294 = vmatmul.mubr.bf16.gmra.mrb[0].mxu0 %v1256
      %v1295 = vpop.f32.mrb[0].mxu0
      %v1296 = vadd.f32 0.0, %v1295
      %v1297 = vpop.f32.mrb[0].mxu0
      %v1298 = vpop.f32.mrb[0].mxu0
      %v1299 = vpop.f32.mrb[0].mxu0
      %1300 = vdwg.mxu0
      %v1301 = vsel %vm1254, %v1296, -inf
      %1302 = vmax.xlane.f32.xlu0 %v1301
      %v1303 = vpop.xlane.xlu0 %1302
      %v1304 = vsub.f32 %v1296, %v1303
      %v1305 = vmul.f32 %v1304, 1.442695
      %v1306 = vpow.pop %v1305
      %v1307 = vsel %vm1254, %v1306, 0.0
      %1308 = vadd.xlane.f32.xlu0 %v1307
      %v1309 = vpop.xlane.xlu0 %1308
      %v1310 = vrcp.pop %v1309
      %v1311 = vpack.c.bf16 %v1306, %v1306
      %v1313 = vsel %vm1254, %v1311, 0
      %vm1315 = vcmask 1043456
      %v1317 = vsel %vm1315, %v701, 0
      %1319 = vmatprep.subr.bf16.mxu0 0
      %1320 = vmatpush1.bf16.msra.mxu0 %v1317
      %1321 = vmatprep.subr.bf16.mxu0 0
      %1322 = vmatpush1.bf16.msra.mxu0 0
      %1323 = vmatprep.subr.bf16.mxu0 0
      %1324 = vmatpush1.bf16.msra.mxu0 0
      %1325 = vmatprep.subr.bf16.mxu0 0
      %1326 = vmatpush1.bf16.msra.mxu0 0
      %1327 = vmatprep.subr.bf16.mxu0 0
      %1328 = vmatpush1.bf16.msra.mxu0 0
      %1329 = vmatprep.subr.bf16.mxu0 0
      %1330 = vmatpush1.bf16.msra.mxu0 0
      %1331 = vmatprep.subr.bf16.mxu0 0
      %1332 = vmatpush1.bf16.msra.mxu0 0
      %1333 = vmatprep.subr.bf16.mxu0 0
      %1334 = vmatpush1.bf16.msra.mxu0 0
      %1335 = vmatprep.subr.bf16.mxu0 0
      %1336 = vmatpush1.bf16.msra.mxu0 0
      %1337 = vmatprep.subr.bf16.mxu0 0
      %1338 = vmatpush1.bf16.msra.mxu0 0
      %1339 = vmatprep.subr.bf16.mxu0 0
      %1340 = vmatpush1.bf16.msra.mxu0 0
      %1341 = vmatprep.subr.bf16.mxu0 0
      %1342 = vmatpush1.bf16.msra.mxu0 0
      %1343 = vmatprep.subr.bf16.mxu0 0
      %1344 = vmatpush1.bf16.msra.mxu0 0
      %1345 = vmatprep.subr.bf16.mxu0 0
      %1346 = vmatpush1.bf16.msra.mxu0 0
      %1347 = vmatprep.subr.bf16.mxu0 0
      %1348 = vmatpush1.bf16.msra.mxu0 0
      %1349 = vmatprep.subr.bf16.mxu0 0
      %1350 = vmatpush1.bf16.msra.mxu0 0
      %1351 = vmatprep.mubr.bf16.mxu0 0
      %1352 = vmatmul.mubr.bf16.gmra.mrb[0].mxu0 %v1313
      %v1353 = vpop.f32.mrb[0].mxu0
      %v1354 = vadd.f32 0.0, %v1353
      %v1355 = vpop.f32.mrb[0].mxu0
      %v1356 = vpop.f32.mrb[0].mxu0
      %v1357 = vpop.f32.mrb[0].mxu0
      %1358 = vdwg.mxu0
      %v1359 = vmul.f32 %v1354, %v1310
      %v1360 = vsel %vm1244, 1, 0
      %vm1361 = vcmp.eq.s32.totalorder %v1360, 1
      %v1362 = vsel %vm1361, %v1359, 0.0
      %v1363 = vadd.f32 %v1362, 0.0
      %v1365 = vsel %vm1254, %v970, 0
      %v1368 = vsel %vm1254, %v971, 0
      %1370 = vmatprep.subr.bf16.mxu0 0
      %1371 = vmatpush1.bf16.xpose.msra.mxu0 %v1368
      %1372 = vmatprep.subr.bf16.mxu0 0
      %1373 = vmatpush1.bf16.xpose.msra.mxu0 0
      %1374 = vmatprep.subr.bf16.mxu0 0
      %1375 = vmatpush1.bf16.xpose.msra.mxu0 0
      %1376 = vmatprep.subr.bf16.mxu0 0
      %1377 = vmatpush1.bf16.xpose.msra.mxu0 0
      %1378 = vmatprep.subr.bf16.mxu0 0
      %1379 = vmatpush1.bf16.xpose.msra.mxu0 0
      %1380 = vmatprep.subr.bf16.mxu0 0
      %1381 = vmatpush1.bf16.xpose.msra.mxu0 0
      %1382 = vmatprep.subr.bf16.mxu0 0
      %1383 = vmatpush1.bf16.xpose.msra.mxu0 0
      %1384 = vmatprep.subr.bf16.mxu0 0
      %1385 = vmatpush1.bf16.xpose.msra.mxu0 0
      %1386 = vmatprep.subr.bf16.mxu0 0
      %1387 = vmatpush1.bf16.xpose.msra.mxu0 0
      %1388 = vmatprep.subr.bf16.mxu0 0
      %1389 = vmatpush1.bf16.xpose.msra.mxu0 0
      %1390 = vmatprep.subr.bf16.mxu0 0
      %1391 = vmatpush1.bf16.xpose.msra.mxu0 0
      %1392 = vmatprep.subr.bf16.mxu0 0
      %1393 = vmatpush1.bf16.xpose.msra.mxu0 0
      %1394 = vmatprep.subr.bf16.mxu0 0
      %1395 = vmatpush1.bf16.xpose.msra.mxu0 0
      %1396 = vmatprep.subr.bf16.mxu0 0
      %1397 = vmatpush1.bf16.xpose.msra.mxu0 0
      %1398 = vmatprep.subr.bf16.mxu0 0
      %1399 = vmatpush1.bf16.xpose.msra.mxu0 0
      %1400 = vmatprep.subr.bf16.mxu0 0
      %1401 = vmatpush1.bf16.xpose.msra.mxu0 0
      %1402 = vmatprep.mubr.bf16.mxu0 0
      %1403 = vmatmul.mubr.bf16.gmra.mrb[0].mxu0 %v1365
      %v1404 = vpop.f32.mrb[0].mxu0
      %v1405 = vadd.f32 0.0, %v1404
      %v1406 = vpop.f32.mrb[0].mxu0
      %v1407 = vpop.f32.mrb[0].mxu0
      %v1408 = vpop.f32.mrb[0].mxu0
      %1409 = vdwg.mxu0
      %v1410 = vsel %vm1254, %v1405, -inf
      %1411 = vmax.xlane.f32.xlu0 %v1410
      %v1412 = vpop.xlane.xlu0 %1411
      %v1413 = vsub.f32 %v1405, %v1412
      %v1414 = vmul.f32 %v1413, 1.442695
      %v1415 = vpow.pop %v1414
      %v1416 = vsel %vm1254, %v1415, 0.0
      %1417 = vadd.xlane.f32.xlu0 %v1416
      %v1418 = vpop.xlane.xlu0 %1417
      %v1419 = vrcp.pop %v1418
      %v1420 = vpack.c.bf16 %v1415, %v1415
      %v1422 = vsel %vm1254, %v1420, 0
      %1424 = vmatprep.subr.bf16.mxu0 0
      %1425 = vmatpush1.bf16.msra.mxu0 %v1317
      %1426 = vmatprep.subr.bf16.mxu0 0
      %1427 = vmatpush1.bf16.msra.mxu0 0
      %1428 = vmatprep.subr.bf16.mxu0 0
      %1429 = vmatpush1.bf16.msra.mxu0 0
      %1430 = vmatprep.subr.bf16.mxu0 0
      %1431 = vmatpush1.bf16.msra.mxu0 0
      %1432 = vmatprep.subr.bf16.mxu0 0
      %1433 = vmatpush1.bf16.msra.mxu0 0
      %1434 = vmatprep.subr.bf16.mxu0 0
      %1435 = vmatpush1.bf16.msra.mxu0 0
      %1436 = vmatprep.subr.bf16.mxu0 0
      %1437 = vmatpush1.bf16.msra.mxu0 0
      %1438 = vmatprep.subr.bf16.mxu0 0
      %1439 = vmatpush1.bf16.msra.mxu0 0
      %1440 = vmatprep.subr.bf16.mxu0 0
      %1441 = vmatpush1.bf16.msra.mxu0 0
      %1442 = vmatprep.subr.bf16.mxu0 0
      %1443 = vmatpush1.bf16.msra.mxu0 0
      %1444 = vmatprep.subr.bf16.mxu0 0
      %1445 = vmatpush1.bf16.msra.mxu0 0
      %1446 = vmatprep.subr.bf16.mxu0 0
      %1447 = vmatpush1.bf16.msra.mxu0 0
      %1448 = vmatprep.subr.bf16.mxu0 0
      %1449 = vmatpush1.bf16.msra.mxu0 0
      %1450 = vmatprep.subr.bf16.mxu0 0
      %1451 = vmatpush1.bf16.msra.mxu0 0
      %1452 = vmatprep.subr.bf16.mxu0 0
      %1453 = vmatpush1.bf16.msra.mxu0 0
      %1454 = vmatprep.subr.bf16.mxu0 0
      %1455 = vmatpush1.bf16.msra.mxu0 0
      %1456 = vmatprep.mubr.bf16.mxu0 0
      %1457 = vmatmul.mubr.bf16.gmra.mrb[0].mxu0 %v1422
      %v1458 = vpop.f32.mrb[0].mxu0
      %v1459 = vadd.f32 0.0, %v1458
      %v1460 = vpop.f32.mrb[0].mxu0
      %v1461 = vpop.f32.mrb[0].mxu0
      %v1462 = vpop.f32.mrb[0].mxu0
      %1463 = vdwg.mxu0
      %v1464 = vmul.f32 %v1459, %v1419
      %v1465 = vsel %vm1247, 1, 0
      %vm1466 = vcmp.eq.s32.totalorder %v1465, 1
      %v1467 = vsel %vm1466, %v1464, 0.0
      %v1468 = vadd.f32 %v1363, %v1467
      %v1470 = vsel %vm1254, %v1104, 0
      %v1473 = vsel %vm1254, %v1105, 0
      %1475 = vmatprep.subr.bf16.mxu0 0
      %1476 = vmatpush1.bf16.xpose.msra.mxu0 %v1473
      %1477 = vmatprep.subr.bf16.mxu0 0
      %1478 = vmatpush1.bf16.xpose.msra.mxu0 0
      %1479 = vmatprep.subr.bf16.mxu0 0
      %1480 = vmatpush1.bf16.xpose.msra.mxu0 0
      %1481 = vmatprep.subr.bf16.mxu0 0
      %1482 = vmatpush1.bf16.xpose.msra.mxu0 0
      %1483 = vmatprep.subr.bf16.mxu0 0
      %1484 = vmatpush1.bf16.xpose.msra.mxu0 0
      %1485 = vmatprep.subr.bf16.mxu0 0
      %1486 = vmatpush1.bf16.xpose.msra.mxu0 0
      %1487 = vmatprep.subr.bf16.mxu0 0
      %1488 = vmatpush1.bf16.xpose.msra.mxu0 0
      %1489 = vmatprep.subr.bf16.mxu0 0
      %1490 = vmatpush1.bf16.xpose.msra.mxu0 0
      %1491 = vmatprep.subr.bf16.mxu0 0
      %1492 = vmatpush1.bf16.xpose.msra.mxu0 0
      %1493 = vmatprep.subr.bf16.mxu0 0
      %1494 = vmatpush1.bf16.xpose.msra.mxu0 0
      %1495 = vmatprep.subr.bf16.mxu0 0
      %1496 = vmatpush1.bf16.xpose.msra.mxu0 0
      %1497 = vmatprep.subr.bf16.mxu0 0
      %1498 = vmatpush1.bf16.xpose.msra.mxu0 0
      %1499 = vmatprep.subr.bf16.mxu0 0
      %1500 = vmatpush1.bf16.xpose.msra.mxu0 0
      %1501 = vmatprep.subr.bf16.mxu0 0
      %1502 = vmatpush1.bf16.xpose.msra.mxu0 0
      %1503 = vmatprep.subr.bf16.mxu0 0
      %1504 = vmatpush1.bf16.xpose.msra.mxu0 0
      %1505 = vmatprep.subr.bf16.mxu0 0
      %1506 = vmatpush1.bf16.xpose.msra.mxu0 0
      %1507 = vmatprep.mubr.bf16.mxu0 0
      %1508 = vmatmul.mubr.bf16.gmra.mrb[0].mxu0 %v1470
      %v1509 = vpop.f32.mrb[0].mxu0
      %v1510 = vadd.f32 0.0, %v1509
      %v1511 = vpop.f32.mrb[0].mxu0
      %v1512 = vpop.f32.mrb[0].mxu0
      %v1513 = vpop.f32.mrb[0].mxu0
      %1514 = vdwg.mxu0
      %v1515 = vsel %vm1254, %v1510, -inf
      %1516 = vmax.xlane.f32.xlu0 %v1515
      %v1517 = vpop.xlane.xlu0 %1516
      %v1518 = vsub.f32 %v1510, %v1517
      %v1519 = vmul.f32 %v1518, 1.442695
      %v1520 = vpow.pop %v1519
      %v1521 = vsel %vm1254, %v1520, 0.0
      %1522 = vadd.xlane.f32.xlu0 %v1521
      %v1523 = vpop.xlane.xlu0 %1522
      %v1524 = vrcp.pop %v1523
      %v1525 = vpack.c.bf16 %v1520, %v1520
      %v1527 = vsel %vm1254, %v1525, 0
      %1529 = vmatprep.subr.bf16.mxu0 0
      %1530 = vmatpush1.bf16.msra.mxu0 %v1317
      %1531 = vmatprep.subr.bf16.mxu0 0
      %1532 = vmatpush1.bf16.msra.mxu0 0
      %1533 = vmatprep.subr.bf16.mxu0 0
      %1534 = vmatpush1.bf16.msra.mxu0 0
      %1535 = vmatprep.subr.bf16.mxu0 0
      %1536 = vmatpush1.bf16.msra.mxu0 0
      %1537 = vmatprep.subr.bf16.mxu0 0
      %1538 = vmatpush1.bf16.msra.mxu0 0
      %1539 = vmatprep.subr.bf16.mxu0 0
      %1540 = vmatpush1.bf16.msra.mxu0 0
      %1541 = vmatprep.subr.bf16.mxu0 0
      %1542 = vmatpush1.bf16.msra.mxu0 0
      %1543 = vmatprep.subr.bf16.mxu0 0
      %1544 = vmatpush1.bf16.msra.mxu0 0
      %1545 = vmatprep.subr.bf16.mxu0 0
      %1546 = vmatpush1.bf16.msra.mxu0 0
      %1547 = vmatprep.subr.bf16.mxu0 0
      %1548 = vmatpush1.bf16.msra.mxu0 0
      %1549 = vmatprep.subr.bf16.mxu0 0
      %1550 = vmatpush1.bf16.msra.mxu0 0
      %1551 = vmatprep.subr.bf16.mxu0 0
      %1552 = vmatpush1.bf16.msra.mxu0 0
      %1553 = vmatprep.subr.bf16.mxu0 0
      %1554 = vmatpush1.bf16.msra.mxu0 0
      %1555 = vmatprep.subr.bf16.mxu0 0
      %1556 = vmatpush1.bf16.msra.mxu0 0
      %1557 = vmatprep.subr.bf16.mxu0 0
      %1558 = vmatpush1.bf16.msra.mxu0 0
      %1559 = vmatprep.subr.bf16.mxu0 0
      %1560 = vmatpush1.bf16.msra.mxu0 0
      %1561 = vmatprep.mubr.bf16.mxu0 0
      %1562 = vmatmul.mubr.bf16.gmra.mrb[0].mxu0 %v1527
      %v1563 = vpop.f32.mrb[0].mxu0
      %v1564 = vadd.f32 0.0, %v1563
      %v1565 = vpop.f32.mrb[0].mxu0
      %v1566 = vpop.f32.mrb[0].mxu0
      %v1567 = vpop.f32.mrb[0].mxu0
      %1568 = vdwg.mxu0
      %v1569 = vmul.f32 %v1564, %v1524
      %v1570 = vsel %vm1250, 1, 0
      %vm1571 = vcmp.eq.s32.totalorder %v1570, 1
      %v1572 = vsel %vm1571, %v1569, 0.0
      %v1573 = vadd.f32 %v1468, %v1572
      %v1575 = vsel %vm1254, %v1238, 0
      %v1578 = vsel %vm1254, %v1239, 0
      %1580 = vmatprep.subr.bf16.mxu0 0
      %1581 = vmatpush1.bf16.xpose.msra.mxu0 %v1578
      %1582 = vmatprep.subr.bf16.mxu0 0
      %1583 = vmatpush1.bf16.xpose.msra.mxu0 0
      %1584 = vmatprep.subr.bf16.mxu0 0
      %1585 = vmatpush1.bf16.xpose.msra.mxu0 0
      %1586 = vmatprep.subr.bf16.mxu0 0
      %1587 = vmatpush1.bf16.xpose.msra.mxu0 0
      %1588 = vmatprep.subr.bf16.mxu0 0
      %1589 = vmatpush1.bf16.xpose.msra.mxu0 0
      %1590 = vmatprep.subr.bf16.mxu0 0
      %1591 = vmatpush1.bf16.xpose.msra.mxu0 0
      %1592 = vmatprep.subr.bf16.mxu0 0
      %1593 = vmatpush1.bf16.xpose.msra.mxu0 0
      %1594 = vmatprep.subr.bf16.mxu0 0
      %1595 = vmatpush1.bf16.xpose.msra.mxu0 0
      %1596 = vmatprep.subr.bf16.mxu0 0
      %1597 = vmatpush1.bf16.xpose.msra.mxu0 0
      %1598 = vmatprep.subr.bf16.mxu0 0
      %1599 = vmatpush1.bf16.xpose.msra.mxu0 0
      %1600 = vmatprep.subr.bf16.mxu0 0
      %1601 = vmatpush1.bf16.xpose.msra.mxu0 0
      %1602 = vmatprep.subr.bf16.mxu0 0
      %1603 = vmatpush1.bf16.xpose.msra.mxu0 0
      %1604 = vmatprep.subr.bf16.mxu0 0
      %1605 = vmatpush1.bf16.xpose.msra.mxu0 0
      %1606 = vmatprep.subr.bf16.mxu0 0
      %1607 = vmatpush1.bf16.xpose.msra.mxu0 0
      %1608 = vmatprep.subr.bf16.mxu0 0
      %1609 = vmatpush1.bf16.xpose.msra.mxu0 0
      %1610 = vmatprep.subr.bf16.mxu0 0
      %1611 = vmatpush1.bf16.xpose.msra.mxu0 0
      %1612 = vmatprep.mubr.bf16.mxu0 0
      %1613 = vmatmul.mubr.bf16.gmra.mrb[0].mxu0 %v1575
      %v1614 = vpop.f32.mrb[0].mxu0
      %v1615 = vadd.f32 0.0, %v1614
      %v1616 = vpop.f32.mrb[0].mxu0
      %v1617 = vpop.f32.mrb[0].mxu0
      %v1618 = vpop.f32.mrb[0].mxu0
      %1619 = vdwg.mxu0
      %v1620 = vsel %vm1254, %v1615, -inf
      %1621 = vmax.xlane.f32.xlu0 %v1620
      %v1622 = vpop.xlane.xlu0 %1621
      %v1623 = vsub.f32 %v1615, %v1622
      %v1624 = vmul.f32 %v1623, 1.442695
      %v1625 = vpow.pop %v1624
      %v1626 = vsel %vm1254, %v1625, 0.0
      %1627 = vadd.xlane.f32.xlu0 %v1626
      %v1628 = vpop.xlane.xlu0 %1627
      %v1629 = vrcp.pop %v1628
      %v1630 = vpack.c.bf16 %v1625, %v1625
      %v1632 = vsel %vm1254, %v1630, 0
      %1634 = vmatprep.subr.bf16.mxu0 0
      %1635 = vmatpush1.bf16.msra.mxu0 %v1317
      %1636 = vmatprep.subr.bf16.mxu0 0
      %1637 = vmatpush1.bf16.msra.mxu0 0
      %1638 = vmatprep.subr.bf16.mxu0 0
      %1639 = vmatpush1.bf16.msra.mxu0 0
      %1640 = vmatprep.subr.bf16.mxu0 0
      %1641 = vmatpush1.bf16.msra.mxu0 0
      %1642 = vmatprep.subr.bf16.mxu0 0
      %1643 = vmatpush1.bf16.msra.mxu0 0
      %1644 = vmatprep.subr.bf16.mxu0 0
      %1645 = vmatpush1.bf16.msra.mxu0 0
      %1646 = vmatprep.subr.bf16.mxu0 0
      %1647 = vmatpush1.bf16.msra.mxu0 0
      %1648 = vmatprep.subr.bf16.mxu0 0
      %1649 = vmatpush1.bf16.msra.mxu0 0
      %1650 = vmatprep.subr.bf16.mxu0 0
      %1651 = vmatpush1.bf16.msra.mxu0 0
      %1652 = vmatprep.subr.bf16.mxu0 0
      %1653 = vmatpush1.bf16.msra.mxu0 0
      %1654 = vmatprep.subr.bf16.mxu0 0
      %1655 = vmatpush1.bf16.msra.mxu0 0
      %1656 = vmatprep.subr.bf16.mxu0 0
      %1657 = vmatpush1.bf16.msra.mxu0 0
      %1658 = vmatprep.subr.bf16.mxu0 0
      %1659 = vmatpush1.bf16.msra.mxu0 0
      %1660 = vmatprep.subr.bf16.mxu0 0
      %1661 = vmatpush1.bf16.msra.mxu0 0
      %1662 = vmatprep.subr.bf16.mxu0 0
      %1663 = vmatpush1.bf16.msra.mxu0 0
      %1664 = vmatprep.subr.bf16.mxu0 0
      %1665 = vmatpush1.bf16.msra.mxu0 0
      %1666 = vmatprep.mubr.bf16.mxu0 0
      %1667 = vmatmul.mubr.bf16.gmra.mrb[0].mxu0 %v1632
      %v1668 = vpop.f32.mrb[0].mxu0
      %v1669 = vadd.f32 0.0, %v1668
      %v1670 = vpop.f32.mrb[0].mxu0
      %v1671 = vpop.f32.mrb[0].mxu0
      %v1672 = vpop.f32.mrb[0].mxu0
      %1673 = vdwg.mxu0
      %v1674 = vmul.f32 %v1669, %v1629
      %v1675 = vsel %vm1253, 1, 0
      %vm1676 = vcmp.eq.s32.totalorder %v1675, 1
      %v1677 = vsel %vm1676, %v1674, 0.0
      %v1678 = vadd.f32 %v1573, %v1677
      %v1680 = vrot.slane %v836, 4
      %v1682 = vrot.slane %v837, 4
      %v1684 = vsel %vm1254, %v1680, 0
      %v1687 = vsel %vm1254, %v1682, 0
      %1689 = vmatprep.subr.bf16.mxu0 0
      %1690 = vmatpush1.bf16.xpose.msra.mxu0 %v1687
      %1691 = vmatprep.subr.bf16.mxu0 0
      %1692 = vmatpush1.bf16.xpose.msra.mxu0 0
      %1693 = vmatprep.subr.bf16.mxu0 0
      %1694 = vmatpush1.bf16.xpose.msra.mxu0 0
      %1695 = vmatprep.subr.bf16.mxu0 0
      %1696 = vmatpush1.bf16.xpose.msra.mxu0 0
      %1697 = vmatprep.subr.bf16.mxu0 0
      %1698 = vmatpush1.bf16.xpose.msra.mxu0 0
      %1699 = vmatprep.subr.bf16.mxu0 0
      %1700 = vmatpush1.bf16.xpose.msra.mxu0 0
      %1701 = vmatprep.subr.bf16.mxu0 0
      %1702 = vmatpush1.bf16.xpose.msra.mxu0 0
      %1703 = vmatprep.subr.bf16.mxu0 0
      %1704 = vmatpush1.bf16.xpose.msra.mxu0 0
      %1705 = vmatprep.subr.bf16.mxu0 0
      %1706 = vmatpush1.bf16.xpose.msra.mxu0 0
      %1707 = vmatprep.subr.bf16.mxu0 0
      %1708 = vmatpush1.bf16.xpose.msra.mxu0 0
      %1709 = vmatprep.subr.bf16.mxu0 0
      %1710 = vmatpush1.bf16.xpose.msra.mxu0 0
      %1711 = vmatprep.subr.bf16.mxu0 0
      %1712 = vmatpush1.bf16.xpose.msra.mxu0 0
      %1713 = vmatprep.subr.bf16.mxu0 0
      %1714 = vmatpush1.bf16.xpose.msra.mxu0 0
      %1715 = vmatprep.subr.bf16.mxu0 0
      %1716 = vmatpush1.bf16.xpose.msra.mxu0 0
      %1717 = vmatprep.subr.bf16.mxu0 0
      %1718 = vmatpush1.bf16.xpose.msra.mxu0 0
      %1719 = vmatprep.subr.bf16.mxu0 0
      %1720 = vmatpush1.bf16.xpose.msra.mxu0 0
      %1721 = vmatprep.mubr.bf16.mxu0 0
      %1722 = vmatmul.mubr.bf16.gmra.mrb[0].mxu0 %v1684
      %v1723 = vpop.f32.mrb[0].mxu0
      %v1724 = vadd.f32 0.0, %v1723
      %v1725 = vpop.f32.mrb[0].mxu0
      %v1726 = vpop.f32.mrb[0].mxu0
      %v1727 = vpop.f32.mrb[0].mxu0
      %1728 = vdwg.mxu0
      %v1729 = vsel %vm1254, %v1724, -inf
      %1730 = vmax.xlane.f32.xlu0 %v1729
      %v1731 = vpop.xlane.xlu0 %1730
      %v1732 = vsub.f32 %v1724, %v1731
      %v1733 = vmul.f32 %v1732, 1.442695
      %v1734 = vpow.pop %v1733
      %v1735 = vsel %vm1254, %v1734, 0.0
      %1736 = vadd.xlane.f32.xlu0 %v1735
      %v1737 = vpop.xlane.xlu0 %1736
      %v1738 = vrcp.pop %v1737
      %v1739 = vpack.c.bf16 %v1734, %v1734
      %v1741 = vrot.slane %v701, 4
      %v1743 = vsel %vm1254, %v1739, 0
      %v1746 = vsel %vm1315, %v1741, 0
      %1748 = vmatprep.subr.bf16.mxu0 0
      %1749 = vmatpush1.bf16.msra.mxu0 %v1746
      %1750 = vmatprep.subr.bf16.mxu0 0
      %1751 = vmatpush1.bf16.msra.mxu0 0
      %1752 = vmatprep.subr.bf16.mxu0 0
      %1753 = vmatpush1.bf16.msra.mxu0 0
      %1754 = vmatprep.subr.bf16.mxu0 0
      %1755 = vmatpush1.bf16.msra.mxu0 0
      %1756 = vmatprep.subr.bf16.mxu0 0
      %1757 = vmatpush1.bf16.msra.mxu0 0
      %1758 = vmatprep.subr.bf16.mxu0 0
      %1759 = vmatpush1.bf16.msra.mxu0 0
      %1760 = vmatprep.subr.bf16.mxu0 0
      %1761 = vmatpush1.bf16.msra.mxu0 0
      %1762 = vmatprep.subr.bf16.mxu0 0
      %1763 = vmatpush1.bf16.msra.mxu0 0
      %1764 = vmatprep.subr.bf16.mxu0 0
      %1765 = vmatpush1.bf16.msra.mxu0 0
      %1766 = vmatprep.subr.bf16.mxu0 0
      %1767 = vmatpush1.bf16.msra.mxu0 0
      %1768 = vmatprep.subr.bf16.mxu0 0
      %1769 = vmatpush1.bf16.msra.mxu0 0
      %1770 = vmatprep.subr.bf16.mxu0 0
      %1771 = vmatpush1.bf16.msra.mxu0 0
      %1772 = vmatprep.subr.bf16.mxu0 0
      %1773 = vmatpush1.bf16.msra.mxu0 0
      %1774 = vmatprep.subr.bf16.mxu0 0
      %1775 = vmatpush1.bf16.msra.mxu0 0
      %1776 = vmatprep.subr.bf16.mxu0 0
      %1777 = vmatpush1.bf16.msra.mxu0 0
      %1778 = vmatprep.subr.bf16.mxu0 0
      %1779 = vmatpush1.bf16.msra.mxu0 0
      %1780 = vmatprep.mubr.bf16.mxu0 0
      %1781 = vmatmul.mubr.bf16.gmra.mrb[0].mxu0 %v1743
      %v1782 = vpop.f32.mrb[0].mxu0
      %v1783 = vadd.f32 0.0, %v1782
      %v1784 = vpop.f32.mrb[0].mxu0
      %v1785 = vpop.f32.mrb[0].mxu0
      %v1786 = vpop.f32.mrb[0].mxu0
      %1787 = vdwg.mxu0
      %v1788 = vmul.f32 %v1783, %v1738
      %v1789 = vsel %vm1361, %v1788, 0.0
      %v1790 = vadd.f32 %v1789, 0.0
      %v1792 = vrot.slane %v970, 4
      %v1794 = vrot.slane %v971, 4
      %v1796 = vsel %vm1254, %v1792, 0
      %v1799 = vsel %vm1254, %v1794, 0
      %1801 = vmatprep.subr.bf16.mxu0 0
      %1802 = vmatpush1.bf16.xpose.msra.mxu0 %v1799
      %1803 = vmatprep.subr.bf16.mxu0 0
      %1804 = vmatpush1.bf16.xpose.msra.mxu0 0
      %1805 = vmatprep.subr.bf16.mxu0 0
      %1806 = vmatpush1.bf16.xpose.msra.mxu0 0
      %1807 = vmatprep.subr.bf16.mxu0 0
      %1808 = vmatpush1.bf16.xpose.msra.mxu0 0
      %1809 = vmatprep.subr.bf16.mxu0 0
      %1810 = vmatpush1.bf16.xpose.msra.mxu0 0
      %1811 = vmatprep.subr.bf16.mxu0 0
      %1812 = vmatpush1.bf16.xpose.msra.mxu0 0
      %1813 = vmatprep.subr.bf16.mxu0 0
      %1814 = vmatpush1.bf16.xpose.msra.mxu0 0
      %1815 = vmatprep.subr.bf16.mxu0 0
      %1816 = vmatpush1.bf16.xpose.msra.mxu0 0
      %1817 = vmatprep.subr.bf16.mxu0 0
      %1818 = vmatpush1.bf16.xpose.msra.mxu0 0
      %1819 = vmatprep.subr.bf16.mxu0 0
      %1820 = vmatpush1.bf16.xpose.msra.mxu0 0
      %1821 = vmatprep.subr.bf16.mxu0 0
      %1822 = vmatpush1.bf16.xpose.msra.mxu0 0
      %1823 = vmatprep.subr.bf16.mxu0 0
      %1824 = vmatpush1.bf16.xpose.msra.mxu0 0
      %1825 = vmatprep.subr.bf16.mxu0 0
      %1826 = vmatpush1.bf16.xpose.msra.mxu0 0
      %1827 = vmatprep.subr.bf16.mxu0 0
      %1828 = vmatpush1.bf16.xpose.msra.mxu0 0
      %1829 = vmatprep.subr.bf16.mxu0 0
      %1830 = vmatpush1.bf16.xpose.msra.mxu0 0
      %1831 = vmatprep.subr.bf16.mxu0 0
      %1832 = vmatpush1.bf16.xpose.msra.mxu0 0
      %1833 = vmatprep.mubr.bf16.mxu0 0
      %1834 = vmatmul.mubr.bf16.gmra.mrb[0].mxu0 %v1796
      %v1835 = vpop.f32.mrb[0].mxu0
      %v1836 = vadd.f32 0.0, %v1835
      %v1837 = vpop.f32.mrb[0].mxu0
      %v1838 = vpop.f32.mrb[0].mxu0
      %v1839 = vpop.f32.mrb[0].mxu0
      %1840 = vdwg.mxu0
      %v1841 = vsel %vm1254, %v1836, -inf
      %1842 = vmax.xlane.f32.xlu0 %v1841
      %v1843 = vpop.xlane.xlu0 %1842
      %v1844 = vsub.f32 %v1836, %v1843
      %v1845 = vmul.f32 %v1844, 1.442695
      %v1846 = vpow.pop %v1845
      %v1847 = vsel %vm1254, %v1846, 0.0
      %1848 = vadd.xlane.f32.xlu0 %v1847
      %v1849 = vpop.xlane.xlu0 %1848
      %v1850 = vrcp.pop %v1849
      %v1851 = vpack.c.bf16 %v1846, %v1846
      %v1853 = vsel %vm1254, %v1851, 0
      %1855 = vmatprep.subr.bf16.mxu0 0
      %1856 = vmatpush1.bf16.msra.mxu0 %v1746
      %1857 = vmatprep.subr.bf16.mxu0 0
      %1858 = vmatpush1.bf16.msra.mxu0 0
      %1859 = vmatprep.subr.bf16.mxu0 0
      %1860 = vmatpush1.bf16.msra.mxu0 0
      %1861 = vmatprep.subr.bf16.mxu0 0
      %1862 = vmatpush1.bf16.msra.mxu0 0
      %1863 = vmatprep.subr.bf16.mxu0 0
      %1864 = vmatpush1.bf16.msra.mxu0 0
      %1865 = vmatprep.subr.bf16.mxu0 0
      %1866 = vmatpush1.bf16.msra.mxu0 0
      %1867 = vmatprep.subr.bf16.mxu0 0
      %1868 = vmatpush1.bf16.msra.mxu0 0
      %1869 = vmatprep.subr.bf16.mxu0 0
      %1870 = vmatpush1.bf16.msra.mxu0 0
      %1871 = vmatprep.subr.bf16.mxu0 0
      %1872 = vmatpush1.bf16.msra.mxu0 0
      %1873 = vmatprep.subr.bf16.mxu0 0
      %1874 = vmatpush1.bf16.msra.mxu0 0
      %1875 = vmatprep.subr.bf16.mxu0 0
      %1876 = vmatpush1.bf16.msra.mxu0 0
      %1877 = vmatprep.subr.bf16.mxu0 0
      %1878 = vmatpush1.bf16.msra.mxu0 0
      %1879 = vmatprep.subr.bf16.mxu0 0
      %1880 = vmatpush1.bf16.msra.mxu0 0
      %1881 = vmatprep.subr.bf16.mxu0 0
      %1882 = vmatpush1.bf16.msra.mxu0 0
      %1883 = vmatprep.subr.bf16.mxu0 0
      %1884 = vmatpush1.bf16.msra.mxu0 0
      %1885 = vmatprep.subr.bf16.mxu0 0
      %1886 = vmatpush1.bf16.msra.mxu0 0
      %1887 = vmatprep.mubr.bf16.mxu0 0
      %1888 = vmatmul.mubr.bf16.gmra.mrb[0].mxu0 %v1853
      %v1889 = vpop.f32.mrb[0].mxu0
      %v1890 = vadd.f32 0.0, %v1889
      %v1891 = vpop.f32.mrb[0].mxu0
      %v1892 = vpop.f32.mrb[0].mxu0
      %v1893 = vpop.f32.mrb[0].mxu0
      %1894 = vdwg.mxu0
      %v1895 = vmul.f32 %v1890, %v1850
      %v1896 = vsel %vm1466, %v1895, 0.0
      %v1897 = vadd.f32 %v1790, %v1896
      %v1899 = vrot.slane %v1104, 4
      %v1901 = vrot.slane %v1105, 4
      %v1903 = vsel %vm1254, %v1899, 0
      %v1906 = vsel %vm1254, %v1901, 0
      %1908 = vmatprep.subr.bf16.mxu0 0
      %1909 = vmatpush1.bf16.xpose.msra.mxu0 %v1906
      %1910 = vmatprep.subr.bf16.mxu0 0
      %1911 = vmatpush1.bf16.xpose.msra.mxu0 0
      %1912 = vmatprep.subr.bf16.mxu0 0
      %1913 = vmatpush1.bf16.xpose.msra.mxu0 0
      %1914 = vmatprep.subr.bf16.mxu0 0
      %1915 = vmatpush1.bf16.xpose.msra.mxu0 0
      %1916 = vmatprep.subr.bf16.mxu0 0
      %1917 = vmatpush1.bf16.xpose.msra.mxu0 0
      %1918 = vmatprep.subr.bf16.mxu0 0
      %1919 = vmatpush1.bf16.xpose.msra.mxu0 0
      %1920 = vmatprep.subr.bf16.mxu0 0
      %1921 = vmatpush1.bf16.xpose.msra.mxu0 0
      %1922 = vmatprep.subr.bf16.mxu0 0
      %1923 = vmatpush1.bf16.xpose.msra.mxu0 0
      %1924 = vmatprep.subr.bf16.mxu0 0
      %1925 = vmatpush1.bf16.xpose.msra.mxu0 0
      %1926 = vmatprep.subr.bf16.mxu0 0
      %1927 = vmatpush1.bf16.xpose.msra.mxu0 0
      %1928 = vmatprep.subr.bf16.mxu0 0
      %1929 = vmatpush1.bf16.xpose.msra.mxu0 0
      %1930 = vmatprep.subr.bf16.mxu0 0
      %1931 = vmatpush1.bf16.xpose.msra.mxu0 0
      %1932 = vmatprep.subr.bf16.mxu0 0
      %1933 = vmatpush1.bf16.xpose.msra.mxu0 0
      %1934 = vmatprep.subr.bf16.mxu0 0
      %1935 = vmatpush1.bf16.xpose.msra.mxu0 0
      %1936 = vmatprep.subr.bf16.mxu0 0
      %1937 = vmatpush1.bf16.xpose.msra.mxu0 0
      %1938 = vmatprep.subr.bf16.mxu0 0
      %1939 = vmatpush1.bf16.xpose.msra.mxu0 0
      %1940 = vmatprep.mubr.bf16.mxu0 0
      %1941 = vmatmul.mubr.bf16.gmra.mrb[0].mxu0 %v1903
      %v1942 = vpop.f32.mrb[0].mxu0
      %v1943 = vadd.f32 0.0, %v1942
      %v1944 = vpop.f32.mrb[0].mxu0
      %v1945 = vpop.f32.mrb[0].mxu0
      %v1946 = vpop.f32.mrb[0].mxu0
      %1947 = vdwg.mxu0
      %v1948 = vsel %vm1254, %v1943, -inf
      %1949 = vmax.xlane.f32.xlu0 %v1948
      %v1950 = vpop.xlane.xlu0 %1949
      %v1951 = vsub.f32 %v1943, %v1950
      %v1952 = vmul.f32 %v1951, 1.442695
      %v1953 = vpow.pop %v1952
      %v1954 = vsel %vm1254, %v1953, 0.0
      %1955 = vadd.xlane.f32.xlu0 %v1954
      %v1956 = vpop.xlane.xlu0 %1955
      %v1957 = vrcp.pop %v1956
      %v1958 = vpack.c.bf16 %v1953, %v1953
      %v1960 = vsel %vm1254, %v1958, 0
      %1962 = vmatprep.subr.bf16.mxu0 0
      %1963 = vmatpush1.bf16.msra.mxu0 %v1746
      %1964 = vmatprep.subr.bf16.mxu0 0
      %1965 = vmatpush1.bf16.msra.mxu0 0
      %1966 = vmatprep.subr.bf16.mxu0 0
      %1967 = vmatpush1.bf16.msra.mxu0 0
      %1968 = vmatprep.subr.bf16.mxu0 0
      %1969 = vmatpush1.bf16.msra.mxu0 0
      %1970 = vmatprep.subr.bf16.mxu0 0
      %1971 = vmatpush1.bf16.msra.mxu0 0
      %1972 = vmatprep.subr.bf16.mxu0 0
      %1973 = vmatpush1.bf16.msra.mxu0 0
      %1974 = vmatprep.subr.bf16.mxu0 0
      %1975 = vmatpush1.bf16.msra.mxu0 0
      %1976 = vmatprep.subr.bf16.mxu0 0
      %1977 = vmatpush1.bf16.msra.mxu0 0
      %1978 = vmatprep.subr.bf16.mxu0 0
      %1979 = vmatpush1.bf16.msra.mxu0 0
      %1980 = vmatprep.subr.bf16.mxu0 0
      %1981 = vmatpush1.bf16.msra.mxu0 0
      %1982 = vmatprep.subr.bf16.mxu0 0
      %1983 = vmatpush1.bf16.msra.mxu0 0
      %1984 = vmatprep.subr.bf16.mxu0 0
      %1985 = vmatpush1.bf16.msra.mxu0 0
      %1986 = vmatprep.subr.bf16.mxu0 0
      %1987 = vmatpush1.bf16.msra.mxu0 0
      %1988 = vmatprep.subr.bf16.mxu0 0
      %1989 = vmatpush1.bf16.msra.mxu0 0
      %1990 = vmatprep.subr.bf16.mxu0 0
      %1991 = vmatpush1.bf16.msra.mxu0 0
      %1992 = vmatprep.subr.bf16.mxu0 0
      %1993 = vmatpush1.bf16.msra.mxu0 0
      %1994 = vmatprep.mubr.bf16.mxu0 0
      %1995 = vmatmul.mubr.bf16.gmra.mrb[0].mxu0 %v1960
      %v1996 = vpop.f32.mrb[0].mxu0
      %v1997 = vadd.f32 0.0, %v1996
      %v1998 = vpop.f32.mrb[0].mxu0
      %v1999 = vpop.f32.mrb[0].mxu0
      %v2000 = vpop.f32.mrb[0].mxu0
      %2001 = vdwg.mxu0
      %v2002 = vmul.f32 %v1997, %v1957
      %v2003 = vsel %vm1571, %v2002, 0.0
      %v2004 = vadd.f32 %v1897, %v2003
      %v2006 = vrot.slane %v1238, 4
      %v2008 = vrot.slane %v1239, 4
      %v2010 = vsel %vm1254, %v2006, 0
      %v2013 = vsel %vm1254, %v2008, 0
      %2015 = vmatprep.subr.bf16.mxu0 0
      %2016 = vmatpush1.bf16.xpose.msra.mxu0 %v2013
      %2017 = vmatprep.subr.bf16.mxu0 0
      %2018 = vmatpush1.bf16.xpose.msra.mxu0 0
      %2019 = vmatprep.subr.bf16.mxu0 0
      %2020 = vmatpush1.bf16.xpose.msra.mxu0 0
      %2021 = vmatprep.subr.bf16.mxu0 0
      %2022 = vmatpush1.bf16.xpose.msra.mxu0 0
      %2023 = vmatprep.subr.bf16.mxu0 0
      %2024 = vmatpush1.bf16.xpose.msra.mxu0 0
      %2025 = vmatprep.subr.bf16.mxu0 0
      %2026 = vmatpush1.bf16.xpose.msra.mxu0 0
      %2027 = vmatprep.subr.bf16.mxu0 0
      %2028 = vmatpush1.bf16.xpose.msra.mxu0 0
      %2029 = vmatprep.subr.bf16.mxu0 0
      %2030 = vmatpush1.bf16.xpose.msra.mxu0 0
      %2031 = vmatprep.subr.bf16.mxu0 0
      %2032 = vmatpush1.bf16.xpose.msra.mxu0 0
      %2033 = vmatprep.subr.bf16.mxu0 0
      %2034 = vmatpush1.bf16.xpose.msra.mxu0 0
      %2035 = vmatprep.subr.bf16.mxu0 0
      %2036 = vmatpush1.bf16.xpose.msra.mxu0 0
      %2037 = vmatprep.subr.bf16.mxu0 0
      %2038 = vmatpush1.bf16.xpose.msra.mxu0 0
      %2039 = vmatprep.subr.bf16.mxu0 0
      %2040 = vmatpush1.bf16.xpose.msra.mxu0 0
      %2041 = vmatprep.subr.bf16.mxu0 0
      %2042 = vmatpush1.bf16.xpose.msra.mxu0 0
      %2043 = vmatprep.subr.bf16.mxu0 0
      %2044 = vmatpush1.bf16.xpose.msra.mxu0 0
      %2045 = vmatprep.subr.bf16.mxu0 0
      %2046 = vmatpush1.bf16.xpose.msra.mxu0 0
      %2047 = vmatprep.mubr.bf16.mxu0 0
      %2048 = vmatmul.mubr.bf16.gmra.mrb[0].mxu0 %v2010
      %v2049 = vpop.f32.mrb[0].mxu0
      %v2050 = vadd.f32 0.0, %v2049
      %v2051 = vpop.f32.mrb[0].mxu0
      %v2052 = vpop.f32.mrb[0].mxu0
      %v2053 = vpop.f32.mrb[0].mxu0
      %2054 = vdwg.mxu0
      %v2055 = vsel %vm1254, %v2050, -inf
      %2056 = vmax.xlane.f32.xlu0 %v2055
      %v2057 = vpop.xlane.xlu0 %2056
      %v2058 = vsub.f32 %v2050, %v2057
      %v2059 = vmul.f32 %v2058, 1.442695
      %v2060 = vpow.pop %v2059
      %v2061 = vsel %vm1254, %v2060, 0.0
      %2062 = vadd.xlane.f32.xlu0 %v2061
      %v2063 = vpop.xlane.xlu0 %2062
      %v2064 = vrcp.pop %v2063
      %v2065 = vpack.c.bf16 %v2060, %v2060
      %v2067 = vsel %vm1254, %v2065, 0
      %2069 = vmatprep.subr.bf16.mxu0 0
      %2070 = vmatpush1.bf16.msra.mxu0 %v1746
      %2071 = vmatprep.subr.bf16.mxu0 0
      %2072 = vmatpush1.bf16.msra.mxu0 0
      %2073 = vmatprep.subr.bf16.mxu0 0
      %2074 = vmatpush1.bf16.msra.mxu0 0
      %2075 = vmatprep.subr.bf16.mxu0 0
      %2076 = vmatpush1.bf16.msra.mxu0 0
      %2077 = vmatprep.subr.bf16.mxu0 0
      %2078 = vmatpush1.bf16.msra.mxu0 0
      %2079 = vmatprep.subr.bf16.mxu0 0
      %2080 = vmatpush1.bf16.msra.mxu0 0
      %2081 = vmatprep.subr.bf16.mxu0 0
      %2082 = vmatpush1.bf16.msra.mxu0 0
      %2083 = vmatprep.subr.bf16.mxu0 0
      %2084 = vmatpush1.bf16.msra.mxu0 0
      %2085 = vmatprep.subr.bf16.mxu0 0
      %2086 = vmatpush1.bf16.msra.mxu0 0
      %2087 = vmatprep.subr.bf16.mxu0 0
      %2088 = vmatpush1.bf16.msra.mxu0 0
      %2089 = vmatprep.subr.bf16.mxu0 0
      %2090 = vmatpush1.bf16.msra.mxu0 0
      %2091 = vmatprep.subr.bf16.mxu0 0
      %2092 = vmatpush1.bf16.msra.mxu0 0
      %2093 = vmatprep.subr.bf16.mxu0 0
      %2094 = vmatpush1.bf16.msra.mxu0 0
      %2095 = vmatprep.subr.bf16.mxu0 0
      %2096 = vmatpush1.bf16.msra.mxu0 0
      %2097 = vmatprep.subr.bf16.mxu0 0
      %2098 = vmatpush1.bf16.msra.mxu0 0
      %2099 = vmatprep.subr.bf16.mxu0 0
      %2100 = vmatpush1.bf16.msra.mxu0 0
      %2101 = vmatprep.mubr.bf16.mxu0 0
      %2102 = vmatmul.mubr.bf16.gmra.mrb[0].mxu0 %v2067
      %v2103 = vpop.f32.mrb[0].mxu0
      %v2104 = vadd.f32 0.0, %v2103
      %v2105 = vpop.f32.mrb[0].mxu0
      %v2106 = vpop.f32.mrb[0].mxu0
      %v2107 = vpop.f32.mrb[0].mxu0
      %2108 = vdwg.mxu0
      %v2109 = vmul.f32 %v2104, %v2064
      %v2110 = vsel %vm1676, %v2109, 0.0
      %v2111 = vadd.f32 %v2004, %v2110
      %v2112 = vpack.c.bf16 %v2111, %v1678
      %v2113 = vld [vmem:[%s9] sm:$0xf]
      %v2114 = vld [vmem:[%s9 + $0x4] sm:$0xf]
      %v2115 = vld [vmem:[%s9 + $0x8] sm:$0xf]
      %v2116 = vld [vmem:[%s9 + $0xc] sm:$0xf]
      %v2117 = vlaneseq
      %v2118 = vshrl.u32 %v2117, 7
      %v2119 = vadd.s32 %v2118, 8
      %vm2120 = vcmp.lt.s32.totalorder %v2118, 0
      %v2121 = vsub.s32 0, %v2118
      %v2122 = vsel %vm2120, %v2121, %v2118
      %v2123 = vshrl.u32 %v2122, 3
      %v2124 = vand.u32 %v2122, 7
      %v2125 = vsub.s32 0, %v2124
      %v2126 = vsel %vm2120, %v2125, %v2124
      %vm2127 = vcmp.lt.s32.totalorder %v2119, 0
      %v2128 = vsub.s32 0, %v2119
      %v2129 = vsel %vm2127, %v2128, %v2119
      %v2130 = vshrl.u32 %v2129, 3
      %v2131 = vand.u32 %v2129, 7
      %v2132 = vsub.s32 0, %v2131
      %v2133 = vsel %vm2127, %v2132, %v2131
      %vm2134 = vcmp.ne.s32.totalorder %v2126, 0
      %vm2135 = vcmp.ne.s32.totalorder %v2133, 0
      %vm2136 = vcmp.lt.s32.totalorder %v2126, 0
      %vm2137 = vcmp.lt.s32.totalorder %v2133, 0
      %vm2138 = vmand %vm2136, %vm2134
      %vm2139 = vmand %vm2137, %vm2135
      %v2140 = vadd.s32 %v2126, 8
      %v2141 = vadd.s32 %v2133, 8
      %v2142 = vsel %vm2138, %v2140, %v2126
      %v2143 = vsel %vm2139, %v2141, %v2133
      %v2144 = vrot.slane %v695, 6
      %v2145 = vrot.slane %v698, 6
      %vm2146 = vcmp.lt.s32.totalorder %v2118, 2
      %v2147 = vsel %vm2146, %v2144, %v2145
      %v2148 = vsel %vm2146, %v2145, %v2144
      %vm2149 = vcmp.ge.s32.totalorder %v2142, 2
      %vm2150 = vcmp.ge.s32.totalorder %v2143, 2
      %v2151 = vsel %vm2149, %v2148, 0.0
      %v2152 = vsel %vm2150, %v2147, 0.0
      %v2153 = vrot.slane %v695, 7
      %v2154 = vrot.slane %v698, 7
      %vm2155 = vcmp.lt.s32.totalorder %v2118, 1
      %v2156 = vsel %vm2155, %v2153, %v2154
      %v2157 = vsel %vm2155, %v2154, %v2153
      %vm2158 = vcmp.ge.s32.totalorder %v2142, 1
      %vm2159 = vcmp.ge.s32.totalorder %v2143, 1
      %v2160 = vsel %vm2158, %v2157, 0.0
      %v2161 = vsel %vm2159, %v2156, 0.0
      %v2162 = vrot.slane %v695, 1
      %v2163 = vrot.slane %v698, 1
      %vm2164 = vcmp.lt.s32.totalorder %v2118, 7
      %v2165 = vsel %vm2164, %v2162, %v2163
      %v2166 = vsel %vm2164, %v2163, %v2162
      %vm2167 = vcmp.lt.s32.totalorder %v2142, 7
      %vm2168 = vcmp.lt.s32.totalorder %v2143, 7
      %v2169 = vsel %vm2167, %v2165, 0.0
      %v2170 = vsel %vm2168, %v2166, 0.0
      %v2171 = vrot.slane %v695, 2
      %v2172 = vrot.slane %v698, 2
      %vm2173 = vcmp.lt.s32.totalorder %v2118, 6
      %v2174 = vsel %vm2173, %v2171, %v2172
      %v2175 = vsel %vm2173, %v2172, %v2171
      %vm2176 = vcmp.lt.s32.totalorder %v2142, 6
      %vm2177 = vcmp.lt.s32.totalorder %v2143, 6
      %v2178 = vsel %vm2176, %v2174, 0.0
      %v2179 = vsel %vm2177, %v2175, 0.0
      %v2180 = vld [vmem:[%s11] sm:$0x1]
      %v2181 = vlaneseq
      %v2182 = vshrl.u32 %v2181, 7
      %v2183 = vsub.s32 0, %v2182
      %v2184 = vrot.slane %v2180, %v2183
      %v2185 = vmul.f32 %v2160, %v2184
      %v2186 = vmul.f32 %v2161, %v2184
      %v2187 = vld [vmem:[%s11 + $0x1] sm:$0x1]
      %v2188 = vlaneseq
      %v2189 = vshrl.u32 %v2188, 7
      %v2190 = vsub.s32 0, %v2189
      %v2191 = vrot.slane %v2187, %v2190
      %v2192 = vmul.f32 %v695, %v2191
      %v2193 = vmul.f32 %v698, %v2191
      %v2194 = vadd.f32 %v2185, %v2192
      %v2195 = vadd.f32 %v2186, %v2193
      %v2196 = vld [vmem:[%s11 + $0x2] sm:$0x1]
      %v2197 = vlaneseq
      %v2198 = vshrl.u32 %v2197, 7
      %v2199 = vsub.s32 0, %v2198
      %v2200 = vrot.slane %v2196, %v2199
      %v2201 = vmul.f32 %v2169, %v2200
      %v2202 = vmul.f32 %v2170, %v2200
      %v2203 = vadd.f32 %v2194, %v2201
      %v2204 = vadd.f32 %v2195, %v2202
      %v2205 = vld [vmem:[%s12] sm:$0x1]
      %v2207 = vlaneseq
      %v2208 = vshrl.u32 %v2207, 7
      %v2209 = vsub.s32 0, %v2208
      %v2210 = vrot.slane %v2205, %v2209
      %v2212 = vadd.f32 %v2203, %v2210
      %v2213 = vadd.f32 %v2204, %v2210
      %v2214 = vld [vmem:[%s14] sm:$0x1]
      %v2215 = vlaneseq
      %v2216 = vshrl.u32 %v2215, 7
      %v2217 = vsub.s32 0, %v2216
      %v2218 = vrot.slane %v2214, %v2217
      %v2219 = vmul.f32 %v2151, %v2218
      %v2220 = vmul.f32 %v2152, %v2218
      %v2221 = vld [vmem:[%s14 + $0x1] sm:$0x1]
      %v2222 = vlaneseq
      %v2223 = vshrl.u32 %v2222, 7
      %v2224 = vsub.s32 0, %v2223
      %v2225 = vrot.slane %v2221, %v2224
      %v2226 = vmul.f32 %v2160, %v2225
      %v2227 = vmul.f32 %v2161, %v2225
      %v2228 = vadd.f32 %v2219, %v2226
      %v2229 = vadd.f32 %v2220, %v2227
      %v2230 = vld [vmem:[%s14 + $0x2] sm:$0x1]
      %v2231 = vlaneseq
      %v2232 = vshrl.u32 %v2231, 7
      %v2233 = vsub.s32 0, %v2232
      %v2234 = vrot.slane %v2230, %v2233
      %v2235 = vmul.f32 %v695, %v2234
      %v2236 = vmul.f32 %v698, %v2234
      %v2237 = vadd.f32 %v2228, %v2235
      %v2238 = vadd.f32 %v2229, %v2236
      %v2239 = vld [vmem:[%s14 + $0x3] sm:$0x1]
      %v2240 = vlaneseq
      %v2241 = vshrl.u32 %v2240, 7
      %v2242 = vsub.s32 0, %v2241
      %v2243 = vrot.slane %v2239, %v2242
      %v2244 = vmul.f32 %v2169, %v2243
      %v2245 = vmul.f32 %v2170, %v2243
      %v2246 = vadd.f32 %v2237, %v2244
      %v2247 = vadd.f32 %v2238, %v2245
      %v2248 = vld [vmem:[%s14 + $0x4] sm:$0x1]
      %v2249 = vlaneseq
      %v2250 = vshrl.u32 %v2249, 7
      %v2251 = vsub.s32 0, %v2250
      %v2252 = vrot.slane %v2248, %v2251
      %v2253 = vmul.f32 %v2178, %v2252
      %v2254 = vmul.f32 %v2179, %v2252
      %v2255 = vadd.f32 %v2246, %v2253
      %v2256 = vadd.f32 %v2247, %v2254
      %v2257 = vld [vmem:[%s15] sm:$0x1]
      %v2259 = vlaneseq
      %v2260 = vshrl.u32 %v2259, 7
      %v2261 = vsub.s32 0, %v2260
      %v2262 = vrot.slane %v2257, %v2261
      %v2264 = vadd.f32 %v2255, %v2262
      %v2265 = vadd.f32 %v2256, %v2262
      %v2266 = vld [vmem:[%s10] sm:$0xf]
      %v2267 = vld [vmem:[%s10 + $0x4] sm:$0xf]
      %v2268 = vld [vmem:[%s10 + $0x8] sm:$0xf]
      %v2269 = vld [vmem:[%s10 + $0xc] sm:$0xf]
      %v2274 = vunpack.c.l.b16 %v2266
      %v2275 = vunpack.c.l.b16 %v2267
      %v2276 = vunpack.c.l.b16 %v2268
      %v2277 = vunpack.c.l.b16 %v2269
      %v2278 = vpack.c.b16 %v2275, %v2274
      %v2279 = vpack.c.b16 %v2277, %v2276
      %v2282 = vsel %vm656, %v701, 0
      %2284 = vmatprep.subr.bf16.mxu0 0
      %2285 = vmatpush1.bf16.msra.mxu0 %v2278
      %2286 = vmatprep.subr.bf16.mxu0 0
      %2287 = vmatpush1.bf16.msra.mxu0 %v2279
      %2288 = vmatprep.subr.bf16.mxu0 0
      %2289 = vmatpush1.bf16.msra.mxu0 0
      %2290 = vmatprep.subr.bf16.mxu0 0
      %2291 = vmatpush1.bf16.msra.mxu0 0
      %2292 = vmatprep.subr.bf16.mxu0 0
      %2293 = vmatpush1.bf16.msra.mxu0 0
      %2294 = vmatprep.subr.bf16.mxu0 0
      %2295 = vmatpush1.bf16.msra.mxu0 0
      %2296 = vmatprep.subr.bf16.mxu0 0
      %2297 = vmatpush1.bf16.msra.mxu0 0
      %2298 = vmatprep.subr.bf16.mxu0 0
      %2299 = vmatpush1.bf16.msra.mxu0 0
      %2300 = vmatprep.subr.bf16.mxu0 0
      %2301 = vmatpush1.bf16.msra.mxu0 0
      %2302 = vmatprep.subr.bf16.mxu0 0
      %2303 = vmatpush1.bf16.msra.mxu0 0
      %2304 = vmatprep.subr.bf16.mxu0 0
      %2305 = vmatpush1.bf16.msra.mxu0 0
      %2306 = vmatprep.subr.bf16.mxu0 0
      %2307 = vmatpush1.bf16.msra.mxu0 0
      %2308 = vmatprep.subr.bf16.mxu0 0
      %2309 = vmatpush1.bf16.msra.mxu0 0
      %2310 = vmatprep.subr.bf16.mxu0 0
      %2311 = vmatpush1.bf16.msra.mxu0 0
      %2312 = vmatprep.subr.bf16.mxu0 0
      %2313 = vmatpush1.bf16.msra.mxu0 0
      %2314 = vmatprep.subr.bf16.mxu0 0
      %2315 = vmatpush1.bf16.msra.mxu0 0
      %2316 = vmatprep.mubr.bf16.mxu0 0
      %2317 = vmatmul.mubr.bf16.gmra.mrb[0].mxu0 %v2282
      %v2318 = vpop.f32.mrb[0].mxu0
      %v2319 = vadd.f32 0.0, %v2318
      %v2320 = vpop.f32.mrb[0].mxu0
      %v2321 = vpop.f32.mrb[0].mxu0
      %v2322 = vadd.f32 0.0, %v2321
      %v2323 = vpop.f32.mrb[0].mxu0
      %2324 = vdwg.mxu0
      %v2329 = vunpack.c.l.b16 %v2113
      %v2330 = vunpack.c.l.b16 %v2114
      %v2331 = vunpack.c.l.b16 %v2115
      %v2332 = vunpack.c.l.b16 %v2116
      %v2333 = vpack.c.b16 %v2330, %v2329
      %v2334 = vpack.c.b16 %v2332, %v2331
      %v2338 = vsel %vm656, %v2112, 0
      %2340 = vmatprep.subr.bf16.mxu0 0
      %2341 = vmatpush1.bf16.msra.mxu0 %v2333
      %2342 = vmatprep.subr.bf16.mxu0 0
      %2343 = vmatpush1.bf16.msra.mxu0 %v2334
      %2344 = vmatprep.subr.bf16.mxu0 0
      %2345 = vmatpush1.bf16.msra.mxu0 0
      %2346 = vmatprep.subr.bf16.mxu0 0
      %2347 = vmatpush1.bf16.msra.mxu0 0
      %2348 = vmatprep.subr.bf16.mxu0 0
      %2349 = vmatpush1.bf16.msra.mxu0 0
      %2350 = vmatprep.subr.bf16.mxu0 0
      %2351 = vmatpush1.bf16.msra.mxu0 0
      %2352 = vmatprep.subr.bf16.mxu0 0
      %2353 = vmatpush1.bf16.msra.mxu0 0
      %2354 = vmatprep.subr.bf16.mxu0 0
      %2355 = vmatpush1.bf16.msra.mxu0 0
      %2356 = vmatprep.subr.bf16.mxu0 0
      %2357 = vmatpush1.bf16.msra.mxu0 0
      %2358 = vmatprep.subr.bf16.mxu0 0
      %2359 = vmatpush1.bf16.msra.mxu0 0
      %2360 = vmatprep.subr.bf16.mxu0 0
      %2361 = vmatpush1.bf16.msra.mxu0 0
      %2362 = vmatprep.subr.bf16.mxu0 0
      %2363 = vmatpush1.bf16.msra.mxu0 0
      %2364 = vmatprep.subr.bf16.mxu0 0
      %2365 = vmatpush1.bf16.msra.mxu0 0
      %2366 = vmatprep.subr.bf16.mxu0 0
      %2367 = vmatpush1.bf16.msra.mxu0 0
      %2368 = vmatprep.subr.bf16.mxu0 0
      %2369 = vmatpush1.bf16.msra.mxu0 0
      %2370 = vmatprep.subr.bf16.mxu0 0
      %2371 = vmatpush1.bf16.msra.mxu0 0
      %2372 = vmatprep.mubr.bf16.mxu0 0
      %2373 = vmatmul.mubr.bf16.gmra.mrb[0].mxu0 %v2338
      %v2374 = vpop.f32.mrb[0].mxu0
      %v2375 = vadd.f32 %v2319, %v2374
      %v2376 = vpop.f32.mrb[0].mxu0
      %v2377 = vpop.f32.mrb[0].mxu0
      %v2378 = vadd.f32 %v2322, %v2377
      %v2379 = vpop.f32.mrb[0].mxu0
      %2380 = vdwg.mxu0
      %v2381 = vpack.c.bf16 %v2213, %v2212
      %v2382 = vld [vmem:[%s13] sm:$0xf]
      %v2383 = vld [vmem:[%s13 + $0x4] sm:$0xf]
      %v2384 = vld [vmem:[%s13 + $0x8] sm:$0xf]
      %v2385 = vld [vmem:[%s13 + $0xc] sm:$0xf]
      %v2390 = vunpack.c.l.b16 %v2382
      %v2391 = vunpack.c.l.b16 %v2383
      %v2392 = vunpack.c.l.b16 %v2384
      %v2393 = vunpack.c.l.b16 %v2385
      %v2394 = vpack.c.b16 %v2391, %v2390
      %v2395 = vpack.c.b16 %v2393, %v2392
      %v2399 = vsel %vm656, %v2381, 0
      %2401 = vmatprep.subr.bf16.mxu0 0
      %2402 = vmatpush1.bf16.msra.mxu0 %v2394
      %2403 = vmatprep.subr.bf16.mxu0 0
      %2404 = vmatpush1.bf16.msra.mxu0 %v2395
      %2405 = vmatprep.subr.bf16.mxu0 0
      %2406 = vmatpush1.bf16.msra.mxu0 0
      %2407 = vmatprep.subr.bf16.mxu0 0
      %2408 = vmatpush1.bf16.msra.mxu0 0
      %2409 = vmatprep.subr.bf16.mxu0 0
      %2410 = vmatpush1.bf16.msra.mxu0 0
      %2411 = vmatprep.subr.bf16.mxu0 0
      %2412 = vmatpush1.bf16.msra.mxu0 0
      %2413 = vmatprep.subr.bf16.mxu0 0
      %2414 = vmatpush1.bf16.msra.mxu0 0
      %2415 = vmatprep.subr.bf16.mxu0 0
      %2416 = vmatpush1.bf16.msra.mxu0 0
      %2417 = vmatprep.subr.bf16.mxu0 0
      %2418 = vmatpush1.bf16.msra.mxu0 0
      %2419 = vmatprep.subr.bf16.mxu0 0
      %2420 = vmatpush1.bf16.msra.mxu0 0
      %2421 = vmatprep.subr.bf16.mxu0 0
      %2422 = vmatpush1.bf16.msra.mxu0 0
      %2423 = vmatprep.subr.bf16.mxu0 0
      %2424 = vmatpush1.bf16.msra.mxu0 0
      %2425 = vmatprep.subr.bf16.mxu0 0
      %2426 = vmatpush1.bf16.msra.mxu0 0
      %2427 = vmatprep.subr.bf16.mxu0 0
      %2428 = vmatpush1.bf16.msra.mxu0 0
      %2429 = vmatprep.subr.bf16.mxu0 0
      %2430 = vmatpush1.bf16.msra.mxu0 0
      %2431 = vmatprep.subr.bf16.mxu0 0
      %2432 = vmatpush1.bf16.msra.mxu0 0
      %2433 = vmatprep.mubr.bf16.mxu0 0
      %2434 = vmatmul.mubr.bf16.gmra.mrb[0].mxu0 %v2399
      %v2435 = vpop.f32.mrb[0].mxu0
      %v2436 = vadd.f32 0.0, %v2435
      %v2437 = vpop.f32.mrb[0].mxu0
      %v2438 = vpop.f32.mrb[0].mxu0
      %v2439 = vadd.f32 0.0, %v2438
      %v2440 = vpop.f32.mrb[0].mxu0
      %2441 = vdwg.mxu0
      %v2442 = vadd.f32 %v2375, %v2436
      %v2443 = vadd.f32 %v2378, %v2439
      %v2444 = vpack.c.bf16 %v2265, %v2264
      %v2445 = vld [vmem:[%s16] sm:$0xf]
      %v2446 = vld [vmem:[%s16 + $0x4] sm:$0xf]
      %v2447 = vld [vmem:[%s16 + $0x8] sm:$0xf]
      %v2448 = vld [vmem:[%s16 + $0xc] sm:$0xf]
      %v2453 = vunpack.c.l.b16 %v2445
      %v2454 = vunpack.c.l.b16 %v2446
      %v2455 = vunpack.c.l.b16 %v2447
      %v2456 = vunpack.c.l.b16 %v2448
      %v2457 = vpack.c.b16 %v2454, %v2453
      %v2458 = vpack.c.b16 %v2456, %v2455
      %v2462 = vsel %vm656, %v2444, 0
      %2464 = vmatprep.subr.bf16.mxu0 0
      %2465 = vmatpush1.bf16.msra.mxu0 %v2457
      %2466 = vmatprep.subr.bf16.mxu0 0
      %2467 = vmatpush1.bf16.msra.mxu0 %v2458
      %2468 = vmatprep.subr.bf16.mxu0 0
      %2469 = vmatpush1.bf16.msra.mxu0 0
      %2470 = vmatprep.subr.bf16.mxu0 0
      %2471 = vmatpush1.bf16.msra.mxu0 0
      %2472 = vmatprep.subr.bf16.mxu0 0
      %2473 = vmatpush1.bf16.msra.mxu0 0
      %2474 = vmatprep.subr.bf16.mxu0 0
      %2475 = vmatpush1.bf16.msra.mxu0 0
      %2476 = vmatprep.subr.bf16.mxu0 0
      %2477 = vmatpush1.bf16.msra.mxu0 0
      %2478 = vmatprep.subr.bf16.mxu0 0
      %2479 = vmatpush1.bf16.msra.mxu0 0
      %2480 = vmatprep.subr.bf16.mxu0 0
      %2481 = vmatpush1.bf16.msra.mxu0 0
      %2482 = vmatprep.subr.bf16.mxu0 0
      %2483 = vmatpush1.bf16.msra.mxu0 0
      %2484 = vmatprep.subr.bf16.mxu0 0
      %2485 = vmatpush1.bf16.msra.mxu0 0
      %2486 = vmatprep.subr.bf16.mxu0 0
      %2487 = vmatpush1.bf16.msra.mxu0 0
      %2488 = vmatprep.subr.bf16.mxu0 0
      %2489 = vmatpush1.bf16.msra.mxu0 0
      %2490 = vmatprep.subr.bf16.mxu0 0
      %2491 = vmatpush1.bf16.msra.mxu0 0
      %2492 = vmatprep.subr.bf16.mxu0 0
      %2493 = vmatpush1.bf16.msra.mxu0 0
      %2494 = vmatprep.subr.bf16.mxu0 0
      %2495 = vmatpush1.bf16.msra.mxu0 0
      %2496 = vmatprep.mubr.bf16.mxu0 0
      %2497 = vmatmul.mubr.bf16.gmra.mrb[0].mxu0 %v2462
      %v2498 = vpop.f32.mrb[0].mxu0
      %v2499 = vadd.f32 0.0, %v2498
      %v2500 = vpop.f32.mrb[0].mxu0
      %v2501 = vpop.f32.mrb[0].mxu0
      %v2502 = vadd.f32 0.0, %v2501
      %v2503 = vpop.f32.mrb[0].mxu0
      %2504 = vdwg.mxu0
      %v2505 = vadd.f32 %v2442, %v2499
      %v2506 = vadd.f32 %v2443, %v2502
      %v2507 = vld [vmem:[%s17] sm:$0x1]
      %v2509 = vlaneseq
      %v2510 = vshrl.u32 %v2509, 7
      %v2511 = vsub.s32 0, %v2510
      %v2512 = vrot.slane %v2507, %v2511
      %v2514 = vadd.f32 %v2505, %v2512
      %v2515 = vadd.f32 %v2506, %v2512
      %2516 = vst.msk [vmem:[%s621] sm:$0xff] %vm656, %v2514
      %2517 = vst.msk [vmem:[%s621 + $0x8] sm:$0xff] %vm656, %v2515
      %s2518 = smul.u32 2, %s29
      %p2519 = scmp.lt.s32.totalorder %s2518, 7
      %s2520 = scalar_select %p2519, %s2518, 7
      %s2521 = smul.addr %s2520, 8
      %s2522 = scalar_lea.vmem %s18, %s2521
      // Predicated region
      $region93: #{tpu_custom_call.1} parent=91 // pred_check
        %p2523 = pneg %p440
      $region94: #{tpu_custom_call.1} parent=91 // pred_check_branch
        %2525 = sbr.rel (%p2523) target = $region96
      $region95: #{tpu_custom_call.1} parent=91 // pred_region
        %s2526 = smul.u32 2, %s29
      $region96: #{tpu_custom_call.1} parent=91 // pred_fallthru
        _
    $region92: #{tpu_custom_call.1} parent=5 // pred_fallthru
      _
    %p2527 = scmp.le.s32.totalorder 2, %s24
    // Predicated region
    $region97: #{tpu_custom_call.1} parent=5 // pred_check
      %p2528 = pneg %p2527
    $region98: #{tpu_custom_call.1} parent=5 // pred_check_branch
      %2530 = sbr.rel (%p2528) target = $region100
    $region99: #{tpu_custom_call.1} parent=5 // pred_region
      %s2531 = ssub.s32 %s24, 2
      // Predicated region
      $region101: #{tpu_custom_call.1} parent=99 // pred_check
        %p2532 = pneg %p446
      $region102: #{tpu_custom_call.1} parent=99 // pred_check_branch
        %2534 = sbr.rel (%p2532) target = $region104
      $region103: #{tpu_custom_call.1} parent=99 // pred_region
        %s2535 = smul.u32 2, %s30
        %p2536 = scmp.lt.s32.totalorder %s2535, 7
        %s2537 = scalar_select %p2536, %s2535, 7
        %s2538 = smul.addr %s2537, 8
        %s2539 = scalar_lea.vmem %s18, %s2538
      $region104: #{tpu_custom_call.1} parent=99 // pred_fallthru
        _
    $region100: #{tpu_custom_call.1} parent=5 // pred_fallthru
      _
  $region6: #{tpu_custom_call.1} parent=0 // loop_footer
    %s28 = sadd.s32 1, %s24
  $region7: #{tpu_custom_call.1} parent=0 // loop_footer_branch
    %23 = sbr.rel target = $region3
  $region8: #{tpu_custom_call.1} parent=0 // loop_exit
    _

</llo_original>
